<compile_context>
chip_gen: v6e
topology: v6e:2x2x1
jax: 0.10.0
libtpu: 0.0.40
codegen_flags: <defaults>
</compile_context>

<pallas_src>
import math

import jax
import jax.numpy as jnp
from jax import lax
from jax.experimental import pallas as pl
from jax.experimental.pallas import tpu as pltpu

# ----------------------- small, module-consistent config ---------------------
NUM_VQ     = 64                      # vocabulary (num_vq); table has num_vq + 2 rows
EMBED_DIM  = 32
CLIP_DIM   = 32
BLOCK_SIZE = 16
NUM_LAYERS = 2
N_HEAD     = 4                       # embed_dim % n_head == 0, embed_dim % 8 == 0
FC_RATE    = 4
BATCH      = 2
T_TOKENS   = 8                       # idx length; full sequence = T_TOKENS + 1 cond token
SEQ        = T_TOKENS + 1
HEAD_DIM   = EMBED_DIM // N_HEAD
HIDDEN     = FC_RATE * EMBED_DIM
LN_EPS     = 1e-5
NEG_BIG    = -1e30                   # finite mask value (safe under row-max subtraction)

ROWS_PAD   = 16                      # per-batch row block = 2 sublane tiles (power of 2)
ROW_SHIFT  = 4                       # log2(ROWS_PAD)
VOCAB      = NUM_VQ + 2              # 66
VOCAB_PAD  = ((VOCAB + 7) // 8) * 8  # 72 (sublane-aligned table)
VEC_LANES  = 128                     # lane width of the per-layer vector slab
QKV_LANE_PAD = ((3 * EMBED_DIM + 127) // 128) * 128   # 128
OFF_W_FC1  = QKV_LANE_PAD                             # 128
OFF_W_PROJ = OFF_W_FC1 + HIDDEN                       # 256
W_SLAB_LANES = OFF_W_PROJ + EMBED_DIM                 # 288

# static-slab sublane offsets (all multiples of 8)
OFF_COND_W = VOCAB_PAD               # 72
OFF_PE     = OFF_COND_W + CLIP_DIM   # 104


# ------------------------------ in-kernel math --------------------------------
def _erf(x):
    # Abramowitz & Stegun 7.1.26 polynomial (|err| < 1.5e-7); only exp/abs/where.
    # TODO(synk): nn.GELU() uses exact erf; approximated here to ~1.5e-7.
    a1, a2, a3, a4, a5 = 0.254829592, -0.284496736, 1.421413741, -1.453152027, 1.061405429
    p = 0.3275911
    s = jnp.where(x < 0.0, -1.0, 1.0)
    ax = jnp.abs(x)
    t = 1.0 / (1.0 + p * ax)
    poly = ((((a5 * t + a4) * t + a3) * t + a2) * t + a1) * t
    return s * (1.0 - poly * jnp.exp(-ax * ax))


def _gelu(x):
    return 0.5 * x * (1.0 + _erf(x * (1.0 / math.sqrt(2.0))))


def _layernorm(x, w, b):
    mu = jnp.mean(x, axis=-1, keepdims=True)
    var = jnp.mean((x - mu) ** 2, axis=-1, keepdims=True)
    return (x - mu) / jnp.sqrt(var + LN_EPS) * w + b


# ------------------------------ fused Pallas kernel ---------------------------
def fused_forward_kernel(idx_ref,      # (B*16, 1) int32, -1 on cond/padding rows
                         clip_ref,     # (B, CLIP_DIM) f32
                         static_ref,   # (VOCAB_PAD + CLIP_DIM + B*16, D): tok table | cond_w | PE(+cond_b)
                         vec_ref,      # (L, 8, 128): ln1w,ln1b,ln2w,ln2b,b_qkv,b_proj,b_fc1,b_fc2
                         wslab_ref,    # (L, D, 288): [w_qkv pad128 | w_fc1 | w_proj]
                         wfc2_ref,     # (L, HIDDEN, D)
                         out_ref):     # (B*16, D)
    RT, D = out_ref.shape
    B = clip_ref.shape[0]
    scale = 1.0 / math.sqrt(HEAD_DIM)

    # ---- embedding assembly: pure matmuls, fully vreg-resident, no scatter ----
    # token gather as one-hot matmul (padding/cond rows have idx = -1 -> zero row)
    onehot = (lax.broadcasted_iota(jnp.int32, (RT, VOCAB_PAD), 1)
              == idx_ref[...]).astype(jnp.float32)                       # (RT, Vp)
    tok_tab = static_ref[0:VOCAB_PAD, :]                                 # (Vp, D)
    x = jnp.dot(onehot, tok_tab, preferred_element_type=jnp.float32)     # (RT, D)

    # cond_emb(clip) placed at row b*ROWS_PAD via a tiny selector matmul
    cond = jnp.dot(clip_ref[...], static_ref[OFF_COND_W:OFF_PE, :],
                   preferred_element_type=jnp.float32)                   # (B, D)
    rr = lax.broadcasted_iota(jnp.int32, (RT, B), 0)
    cc = lax.broadcasted_iota(jnp.int32, (RT, B), 1)
    sel_cond = (rr == cc * ROWS_PAD).astype(jnp.float32)                 # (RT, B)
    x = x + jnp.dot(sel_cond, cond, preferred_element_type=jnp.float32)
    # positional encoding (cond bias already folded into its row; pad rows zero)
    x = x + static_ref[OFF_PE:OFF_PE + RT, :]

    # ---- block-diagonal causal mask over the padded 16-row batch blocks ----
    r = lax.broadcasted_iota(jnp.int32, (RT, RT), 0)
    c = lax.broadcasted_iota(jnp.int32, (RT, RT), 1)
    same_batch = jnp.right_shift(r, ROW_SHIFT) == jnp.right_shift(c, ROW_SHIFT)
    causal = jnp.bitwise_and(c, ROWS_PAD - 1) <= jnp.bitwise_and(r, ROWS_PAD - 1)
    mask = jnp.logical_and(same_batch, causal)

    for li in range(NUM_LAYERS):                      # static unroll (L = 2)
        vs = vec_ref[li]                              # (8, 128)
        ln1w, ln1b = vs[0:1, 0:D], vs[1:2, 0:D]
        ln2w, ln2b = vs[2:3, 0:D], vs[3:4, 0:D]
        bqkv  = vs[4:5, 0:3 * D]
        bproj = vs[5:6, 0:D]
        bfc1  = vs[6:7, 0:HIDDEN]
        bfc2  = vs[7:8, 0:D]
        ws = wslab_ref[li]                            # (D, 288)
        wqkv  = ws[:, 0:3 * D]
        wfc1  = ws[:, OFF_W_FC1:OFF_W_FC1 + HIDDEN]
        wproj = ws[:, OFF_W_PROJ:OFF_W_PROJ + D]
        wfc2  = wfc2_ref[li]                          # (HIDDEN, D)

        # --- x = x + proj(MHA(ln1(x)))  (dropouts = identity) ---
        h = _layernorm(x, ln1w, ln1b)
        qkv = jnp.dot(h, wqkv, preferred_element_type=jnp.float32) + bqkv
        q = qkv[:, 0:D] * scale                       # pre-scale q once
        k = qkv[:, D:2 * D]
        v = qkv[:, 2 * D:3 * D]
        att_out = jnp.zeros((RT, D), jnp.float32)
        for hh in range(N_HEAD):                      # 4 heads, both batches at once
            c0 = hh * HEAD_DIM
            qh = q[:, c0:c0 + HEAD_DIM]
            kh = k[:, c0:c0 + HEAD_DIM]
            vh = v[:, c0:c0 + HEAD_DIM]
            # scores without k transpose: contract last dims of q and k
            att = lax.dot_general(qh, kh, (((1,), (1,)), ((), ())),
                                  preferred_element_type=jnp.float32)    # (RT, RT)
            att = jnp.where(mask, att, NEG_BIG)
            att = att - jnp.max(att, axis=-1, keepdims=True)
            e = jnp.exp(att)
            p = e / jnp.sum(e, axis=-1, keepdims=True)                   # softmax
            yh = jnp.dot(p, vh, preferred_element_type=jnp.float32)      # (RT, HD)
            # fold head output into the output projection (accumulate back-to-back
            # into one value -> MRB in-place accumulate on v7x, no scratch stores)
            att_out = att_out + jnp.dot(yh, wproj[c0:c0 + HEAD_DIM, :],
                                        preferred_element_type=jnp.float32)
        x = x + att_out + bproj

        # --- x = x + fc2(gelu(fc1(ln2(x)))) ---
        h2 = _layernorm(x, ln2w, ln2b)
        m = _gelu(jnp.dot(h2, wfc1, preferred_element_type=jnp.float32) + bfc1)
        x = x + jnp.dot(m, wfc2, preferred_element_type=jnp.float32) + bfc2

    out_ref[...] = x                                  # one contiguous aligned store


# ------------------------------ kernel wrapper --------------------------------
def _vmem():
    return pl.BlockSpec(memory_space=pltpu.MemorySpace.VMEM)


def cross_cond_trans_base_forward(idx, clip_feature, packed):
    """idx: (B, T) int32 tokens in [0, num_vq+2); clip_feature: (B, clip_dim) f32."""
    # TODO(synk): empty-idx inference branch (token_embeddings = cond only) not implemented.
    B, T = idx.shape
    assert T <= BLOCK_SIZE, "Cannot forward, model block size is exhausted."
    S = T + 1
    assert S <= ROWS_PAD and (ROWS_PAD & (ROWS_PAD - 1)) == 0
    D = EMBED_DIM
    RT = B * ROWS_PAD

    # padded token ids: row b*ROWS_PAD + 1 + t holds idx[b, t]; cond/pad rows hold -1
    row_ids = (jnp.arange(B)[:, None] * ROWS_PAD + 1 + jnp.arange(T)[None, :]).reshape(-1)
    idx_pad = jnp.full((RT,), -1, jnp.int32).at[row_ids].set(
        idx.reshape(-1).astype(jnp.int32)).reshape(RT, 1)

    # positional encoding per padded batch block; cond_emb bias folded into row 0
    pe = sincos_pe(BLOCK_SIZE, D)                                 # (block_size, D)
    pe_blk = jnp.zeros((ROWS_PAD, D), jnp.float32)
    pe_blk = pe_blk.at[0].set(pe[0] + packed["cond_b"])
    pe_blk = pe_blk.at[1:S].set(pe[1:S])
    pe_full = jnp.tile(pe_blk, (B, 1))                            # (RT, D)

    tok_pad = jnp.zeros((VOCAB_PAD, D), jnp.float32).at[:VOCAB].set(packed["tok_emb"])
    static_slab = jnp.concatenate([tok_pad, packed["cond_w"], pe_full], axis=0)

    # Gridless single call: resident footprint ~0.3 MiB << scoped VMEM on
    # v5e/v6e/v7x.  TODO(synk): only if batch grows to B>~8, add grid=(B,) with
    # dimension_semantics=("parallel",) to split batches across v7x's 2 TCs.
    out = pl.pallas_call(
        fused_forward_kernel,
        out_shape=jax.ShapeDtypeStruct((RT, D), jnp.float32),
        in_specs=[_vmem()] * 6,
        out_specs=_vmem(),
    )(idx_pad, clip_feature, static_slab,
      packed["vec_slab"], packed["w_slab"], packed["w_fc2"])

    return out.reshape(B, ROWS_PAD, D)[:, :S, :]


# ------------------------------ params / packing ------------------------------
def sincos_pe(length, dim):
    # pos_encoding.PE1d_sincos: pe[:,0::2]=sin, pe[:,1::2]=cos (dropout p=0.0)
    pos = jnp.arange(length, dtype=jnp.float32)[:, None]
    div = jnp.exp(jnp.arange(0, dim, 2, dtype=jnp.float32) * (-(math.log(10000.0) / dim)))
    ang = pos * div
    return jnp.stack([jnp.sin(ang), jnp.cos(ang)], axis=-1).reshape(length, dim)


def init_params(key):
    keys = iter(jax.random.split(key, 64))

    def nrm(shape):
        # matches _init_weights: normal(mean=0, std=0.02); biases zero; LN w=1,b=0
        return 0.02 * jax.random.normal(next(keys), shape, dtype=jnp.float32)

    D, H, L = EMBED_DIM, HIDDEN, NUM_LAYERS
    p = {
        "tok_emb": nrm((VOCAB, D)),
        "cond_w": nrm((CLIP_DIM, D)),
        "cond_b": jnp.zeros((D,), jnp.float32),
        "ln1_w": jnp.ones((L, D), jnp.float32), "ln1_b": jnp.zeros((L, D), jnp.float32),
        "ln2_w": jnp.ones((L, D), jnp.float32), "ln2_b": jnp.zeros((L, D), jnp.float32),
        "b_qkv": jnp.zeros((L, 3 * D), jnp.float32),
        "b_proj": jnp.zeros((L, D), jnp.float32),
        "b_fc1": jnp.zeros((L, H), jnp.float32),
        "b_fc2": jnp.zeros((L, D), jnp.float32),
    }
    wqkv, wproj, wfc1, wfc2 = [], [], [], []
    for _ in range(L):
        # q/k/v Linears fused at init into one (D, 3D) weight -> single MXU push
        wqkv.append(jnp.concatenate([nrm((D, D)), nrm((D, D)), nrm((D, D))], axis=1))
        wproj.append(nrm((D, D)))
        wfc1.append(nrm((D, H)))
        wfc2.append(nrm((H, D)))
    p["w_qkv"] = jnp.stack(wqkv); p["w_proj"] = jnp.stack(wproj)
    p["w_fc1"] = jnp.stack(wfc1); p["w_fc2"] = jnp.stack(wfc2)
    return p


def pack_params(params):
    """Pack the many tiny per-layer params into a few DMA-friendly slabs."""
    D, L = EMBED_DIM, NUM_LAYERS

    def lane_pad(v, n):
        v = v.reshape(-1)
        return jnp.zeros((n,), jnp.float32).at[: v.shape[0]].set(v)

    vec_rows, wslab_rows = [], []
    for li in range(L):
        vec_rows.append(jnp.stack([
            lane_pad(params["ln1_w"][li], VEC_LANES),
            lane_pad(params["ln1_b"][li], VEC_LANES),
            lane_pad(params["ln2_w"][li], VEC_LANES),
            lane_pad(params["ln2_b"][li], VEC_LANES),
            lane_pad(params["b_qkv"][li], VEC_LANES),
            lane_pad(params["b_proj"][li], VEC_LANES),
            lane_pad(params["b_fc1"][li], VEC_LANES),
            lane_pad(params["b_fc2"][li], VEC_LANES),
        ], axis=0))                                                    # (8, 128)
        wqkv_pad = jnp.zeros((D, QKV_LANE_PAD), jnp.float32).at[:, :3 * D].set(
            params["w_qkv"][li])
        wslab_rows.append(jnp.concatenate(
            [wqkv_pad, params["w_fc1"][li], params["w_proj"][li]], axis=1))  # (D, 288)
    return {
        "tok_emb": params["tok_emb"],
        "cond_w": params["cond_w"],
        "cond_b": params["cond_b"],
        "vec_slab": jnp.stack(vec_rows, axis=0),    # (L, 8, 128)
        "w_slab": jnp.stack(wslab_rows, axis=0),    # (L, D, 288)
        "w_fc2": params["w_fc2"],                   # (L, HIDDEN, D)
    }


if __name__ == "__main__":
    key = jax.random.PRNGKey(0)
    k_param, k_idx, k_clip = jax.random.split(key, 3)
    params = init_params(k_param)
    packed = pack_params(params)
    idx = jax.random.randint(k_idx, (BATCH, T_TOKENS), 0, VOCAB, dtype=jnp.int32)
    clip_feature = jax.random.normal(k_clip, (BATCH, CLIP_DIM), dtype=jnp.float32)

    fwd = jax.jit(cross_cond_trans_base_forward)
    out = jax.block_until_ready(fwd(idx, clip_feature, packed))
    assert out.shape == (BATCH, SEQ, EMBED_DIM)
    assert bool(jnp.all(jnp.isfinite(out)))
    print("KERNEL_OK")
</pallas_src>

<mosaic_0001>
module attributes {stable_mosaic.version = 11 : i64} {
  func.func @fused_forward_kernel(%arg0: memref<32x1xi32, #tpu.memory_space<vmem>>, %arg1: memref<2x32xf32, #tpu.memory_space<vmem>>, %arg2: memref<136x32xf32, #tpu.memory_space<vmem>>, %arg3: memref<2x8x128xf32, #tpu.memory_space<vmem>>, %arg4: memref<2x32x288xf32, #tpu.memory_space<vmem>>, %arg5: memref<2x128x32xf32, #tpu.memory_space<vmem>>, %arg6: memref<32x32xf32, #tpu.memory_space<vmem>>) attributes {dimension_semantics = [], scalar_prefetch = 0 : i64, scratch_operands = 0 : i64, tpu.core_type = #tpu.core_type<tc>} {
    %0 = tpu.iota {dimensions = array<i32: 1>} : vector<32x72xi32>
    %c0 = arith.constant 0 : index
    %c0_0 = arith.constant 0 : index
    %1 = vector.load %arg0[%c0, %c0_0] : memref<32x1xi32, #tpu.memory_space<vmem>>, vector<32x1xi32>
    %2 = vector.broadcast %1 : vector<32x1xi32> to vector<32x72xi32>
    %3 = arith.cmpi eq, %0, %2 : vector<32x72xi32>
    %4 = arith.extui %3 : vector<32x72xi1> to vector<32x72xi32>
    %5 = arith.sitofp %4 : vector<32x72xi32> to vector<32x72xf32>
    %c0_1 = arith.constant 0 : index
    %c0_2 = arith.constant 0 : index
    %6 = vector.load %arg2[%c0_1, %c0_2] : memref<136x32xf32, #tpu.memory_space<vmem>>, vector<72x32xf32>
    %cst = arith.constant dense<0.000000e+00> : vector<32x32xf32>
    %7 = tpu.matmul %5, %6, %cst {dimension_numbers = #tpu.dot_dimension_numbers<[1], [0], [0], [1], [0, 0, 1, 1], [], []>} : vector<32x72xf32>, vector<72x32xf32>, vector<32x32xf32> -> vector<32x32xf32>
    %c0_3 = arith.constant 0 : index
    %c0_4 = arith.constant 0 : index
    %8 = vector.load %arg1[%c0_3, %c0_4] : memref<2x32xf32, #tpu.memory_space<vmem>>, vector<2x32xf32>
    %c72 = arith.constant 72 : index
    %c0_5 = arith.constant 0 : index
    %9 = vector.load %arg2[%c72, %c0_5] : memref<136x32xf32, #tpu.memory_space<vmem>>, vector<32x32xf32>
    %cst_6 = arith.constant dense<0.000000e+00> : vector<2x32xf32>
    %10 = tpu.matmul %8, %9, %cst_6 {dimension_numbers = #tpu.dot_dimension_numbers<[1], [0], [0], [1], [0, 0, 1, 1], [], []>} : vector<2x32xf32>, vector<32x32xf32>, vector<2x32xf32> -> vector<2x32xf32>
    %11 = tpu.iota {dimensions = array<i32: 0>} : vector<32x2xi32>
    %12 = tpu.iota {dimensions = array<i32: 1>} : vector<32x2xi32>
    %c16_i32 = arith.constant 16 : i32
    %13 = vector.broadcast %c16_i32 : i32 to vector<32x2xi32>
    %14 = arith.muli %12, %13 : vector<32x2xi32>
    %15 = arith.cmpi eq, %11, %14 : vector<32x2xi32>
    %16 = arith.extui %15 : vector<32x2xi1> to vector<32x2xi32>
    %17 = arith.sitofp %16 : vector<32x2xi32> to vector<32x2xf32>
    %cst_7 = arith.constant dense<0.000000e+00> : vector<32x32xf32>
    %18 = tpu.matmul %17, %10, %cst_7 {dimension_numbers = #tpu.dot_dimension_numbers<[1], [0], [0], [1], [0, 0, 1, 1], [], []>} : vector<32x2xf32>, vector<2x32xf32>, vector<32x32xf32> -> vector<32x32xf32>
    %19 = arith.addf %7, %18 : vector<32x32xf32>
    %c104 = arith.constant 104 : index
    %c0_8 = arith.constant 0 : index
    %20 = vector.load %arg2[%c104, %c0_8] : memref<136x32xf32, #tpu.memory_space<vmem>>, vector<32x32xf32>
    %21 = arith.addf %19, %20 : vector<32x32xf32>
    %22 = tpu.iota {dimensions = array<i32: 0>} : vector<32x32xi32>
    %23 = tpu.iota {dimensions = array<i32: 1>} : vector<32x32xi32>
    %c4_i32 = arith.constant 4 : i32
    %24 = vector.broadcast %c4_i32 : i32 to vector<32x32xi32>
    %25 = arith.shrsi %22, %24 : vector<32x32xi32>
    %c4_i32_9 = arith.constant 4 : i32
    %26 = vector.broadcast %c4_i32_9 : i32 to vector<32x32xi32>
    %27 = arith.shrsi %23, %26 : vector<32x32xi32>
    %28 = arith.cmpi eq, %25, %27 : vector<32x32xi32>
    %c15_i32 = arith.constant 15 : i32
    %29 = vector.broadcast %c15_i32 : i32 to vector<32x32xi32>
    %30 = arith.andi %23, %29 : vector<32x32xi32>
    %c15_i32_10 = arith.constant 15 : i32
    %31 = vector.broadcast %c15_i32_10 : i32 to vector<32x32xi32>
    %32 = arith.andi %22, %31 : vector<32x32xi32>
    %33 = arith.cmpi sle, %30, %32 : vector<32x32xi32>
    %34 = arith.andi %28, %33 : vector<32x32xi1>
    %c0_11 = arith.constant 0 : index
    %c0_12 = arith.constant 0 : index
    %c0_13 = arith.constant 0 : index
    %35 = vector.load %arg3[%c0_11, %c0_12, %c0_13] : memref<2x8x128xf32, #tpu.memory_space<vmem>>, vector<1x8x128xf32>
    %36 = vector.shape_cast %35 : vector<1x8x128xf32> to vector<8x128xf32>
    %37 = vector.extract_strided_slice %36 {offsets = [0, 0], sizes = [1, 32], strides = [1, 1]} : vector<8x128xf32> to vector<1x32xf32>
    %38 = vector.extract_strided_slice %36 {offsets = [1, 0], sizes = [1, 32], strides = [1, 1]} : vector<8x128xf32> to vector<1x32xf32>
    %39 = vector.extract_strided_slice %36 {offsets = [2, 0], sizes = [1, 32], strides = [1, 1]} : vector<8x128xf32> to vector<1x32xf32>
    %40 = vector.extract_strided_slice %36 {offsets = [3, 0], sizes = [1, 32], strides = [1, 1]} : vector<8x128xf32> to vector<1x32xf32>
    %41 = vector.extract_strided_slice %36 {offsets = [4, 0], sizes = [1, 96], strides = [1, 1]} : vector<8x128xf32> to vector<1x96xf32>
    %42 = vector.extract_strided_slice %36 {offsets = [5, 0], sizes = [1, 32], strides = [1, 1]} : vector<8x128xf32> to vector<1x32xf32>
    %43 = vector.extract_strided_slice %36 {offsets = [6, 0], sizes = [1, 128], strides = [1, 1]} : vector<8x128xf32> to vector<1x128xf32>
    %44 = vector.extract_strided_slice %36 {offsets = [7, 0], sizes = [1, 32], strides = [1, 1]} : vector<8x128xf32> to vector<1x32xf32>
    %c0_14 = arith.constant 0 : index
    %c0_15 = arith.constant 0 : index
    %c0_16 = arith.constant 0 : index
    %45 = vector.load %arg4[%c0_14, %c0_15, %c0_16] : memref<2x32x288xf32, #tpu.memory_space<vmem>>, vector<1x32x288xf32>
    %46 = vector.shape_cast %45 : vector<1x32x288xf32> to vector<32x288xf32>
    %47 = vector.extract_strided_slice %46 {offsets = [0, 0], sizes = [32, 96], strides = [1, 1]} : vector<32x288xf32> to vector<32x96xf32>
    %48 = vector.extract_strided_slice %46 {offsets = [0, 128], sizes = [32, 128], strides = [1, 1]} : vector<32x288xf32> to vector<32x128xf32>
    %49 = vector.extract_strided_slice %46 {offsets = [0, 256], sizes = [32, 32], strides = [1, 1]} : vector<32x288xf32> to vector<32x32xf32>
    %c0_17 = arith.constant 0 : index
    %c0_18 = arith.constant 0 : index
    %c0_19 = arith.constant 0 : index
    %50 = vector.load %arg5[%c0_17, %c0_18, %c0_19] : memref<2x128x32xf32, #tpu.memory_space<vmem>>, vector<1x128x32xf32>
    %51 = vector.shape_cast %50 : vector<1x128x32xf32> to vector<128x32xf32>
    %cst_20 = arith.constant dense<0.000000e+00> : vector<32xf32>
    %52 = vector.multi_reduction <add>, %21, %cst_20 [1] : vector<32x32xf32> to vector<32xf32>
    %53 = vector.shape_cast %52 : vector<32xf32> to vector<32x1xf32>
    %cst_21 = arith.constant 3.200000e+01 : f32
    %54 = vector.broadcast %cst_21 : f32 to vector<32x1xf32>
    %55 = arith.divf %53, %54 : vector<32x1xf32>
    %56 = vector.broadcast %55 : vector<32x1xf32> to vector<32x32xf32>
    %57 = arith.subf %21, %56 : vector<32x32xf32>
    %58 = arith.mulf %57, %57 : vector<32x32xf32>
    %cst_22 = arith.constant dense<0.000000e+00> : vector<32xf32>
    %59 = vector.multi_reduction <add>, %58, %cst_22 [1] : vector<32x32xf32> to vector<32xf32>
    %60 = vector.shape_cast %59 : vector<32xf32> to vector<32x1xf32>
    %cst_23 = arith.constant 3.200000e+01 : f32
    %61 = vector.broadcast %cst_23 : f32 to vector<32x1xf32>
    %62 = arith.divf %60, %61 : vector<32x1xf32>
    %63 = vector.broadcast %55 : vector<32x1xf32> to vector<32x32xf32>
    %64 = arith.subf %21, %63 : vector<32x32xf32>
    %cst_24 = arith.constant 9.99999974E-6 : f32
    %65 = vector.broadcast %cst_24 : f32 to vector<32x1xf32>
    %66 = arith.addf %62, %65 : vector<32x1xf32>
    %67 = math.sqrt %66 : vector<32x1xf32>
    %68 = vector.broadcast %67 : vector<32x1xf32> to vector<32x32xf32>
    %69 = arith.divf %64, %68 : vector<32x32xf32>
    %70 = vector.broadcast %37 : vector<1x32xf32> to vector<32x32xf32>
    %71 = arith.mulf %69, %70 : vector<32x32xf32>
    %72 = vector.broadcast %38 : vector<1x32xf32> to vector<32x32xf32>
    %73 = arith.addf %71, %72 : vector<32x32xf32>
    %cst_25 = arith.constant dense<0.000000e+00> : vector<32x96xf32>
    %74 = tpu.matmul %73, %47, %cst_25 {dimension_numbers = #tpu.dot_dimension_numbers<[1], [0], [0], [1], [0, 0, 1, 1], [], []>} : vector<32x32xf32>, vector<32x96xf32>, vector<32x96xf32> -> vector<32x96xf32>
    %75 = vector.broadcast %41 : vector<1x96xf32> to vector<32x96xf32>
    %76 = arith.addf %74, %75 : vector<32x96xf32>
    %77 = vector.extract_strided_slice %76 {offsets = [0, 0], sizes = [32, 32], strides = [1, 1]} : vector<32x96xf32> to vector<32x32xf32>
    %cst_26 = arith.constant 0.353553385 : f32
    %78 = vector.broadcast %cst_26 : f32 to vector<32x32xf32>
    %79 = arith.mulf %77, %78 : vector<32x32xf32>
    %80 = vector.extract_strided_slice %76 {offsets = [0, 32], sizes = [32, 32], strides = [1, 1]} : vector<32x96xf32> to vector<32x32xf32>
    %81 = vector.extract_strided_slice %76 {offsets = [0, 64], sizes = [32, 32], strides = [1, 1]} : vector<32x96xf32> to vector<32x32xf32>
    %cst_27 = arith.constant 0.000000e+00 : f32
    %82 = vector.broadcast %cst_27 : f32 to vector<32x32xf32>
    %83 = vector.extract_strided_slice %79 {offsets = [0, 0], sizes = [32, 8], strides = [1, 1]} : vector<32x32xf32> to vector<32x8xf32>
    %84 = vector.extract_strided_slice %80 {offsets = [0, 0], sizes = [32, 8], strides = [1, 1]} : vector<32x32xf32> to vector<32x8xf32>
    %85 = vector.extract_strided_slice %81 {offsets = [0, 0], sizes = [32, 8], strides = [1, 1]} : vector<32x32xf32> to vector<32x8xf32>
    %cst_28 = arith.constant dense<0.000000e+00> : vector<32x32xf32>
    %86 = tpu.matmul %83, %84, %cst_28 {dimension_numbers = #tpu.dot_dimension_numbers<[1], [1], [0], [0], [0, 0, 1, 0], [], []>} : vector<32x8xf32>, vector<32x8xf32>, vector<32x32xf32> -> vector<32x32xf32>
    %cst_29 = arith.constant -1.000000e+30 : f32
    %87 = vector.broadcast %cst_29 : f32 to vector<32x32xf32>
    %88 = arith.select %34, %86, %87 : vector<32x32xi1>, vector<32x32xf32>
    %cst_30 = arith.constant dense<0xFF800000> : vector<32xf32>
    %89 = vector.multi_reduction <maximumf>, %88, %cst_30 [1] : vector<32x32xf32> to vector<32xf32>
    %90 = vector.shape_cast %89 : vector<32xf32> to vector<32x1xf32>
    %91 = vector.broadcast %90 : vector<32x1xf32> to vector<32x32xf32>
    %92 = arith.subf %88, %91 : vector<32x32xf32>
    %93 = math.exp %92 : vector<32x32xf32>
    %cst_31 = arith.constant dense<0.000000e+00> : vector<32xf32>
    %94 = vector.multi_reduction <add>, %93, %cst_31 [1] : vector<32x32xf32> to vector<32xf32>
    %95 = vector.shape_cast %94 : vector<32xf32> to vector<32x1xf32>
    %96 = vector.broadcast %95 : vector<32x1xf32> to vector<32x32xf32>
    %97 = arith.divf %93, %96 : vector<32x32xf32>
    %cst_32 = arith.constant dense<0.000000e+00> : vector<32x8xf32>
    %98 = tpu.matmul %97, %85, %cst_32 {dimension_numbers = #tpu.dot_dimension_numbers<[1], [0], [0], [1], [0, 0, 1, 1], [], []>} : vector<32x32xf32>, vector<32x8xf32>, vector<32x8xf32> -> vector<32x8xf32>
    %99 = vector.extract_strided_slice %49 {offsets = [0, 0], sizes = [8, 32], strides = [1, 1]} : vector<32x32xf32> to vector<8x32xf32>
    %cst_33 = arith.constant dense<0.000000e+00> : vector<32x32xf32>
    %100 = tpu.matmul %98, %99, %cst_33 {dimension_numbers = #tpu.dot_dimension_numbers<[1], [0], [0], [1], [0, 0, 1, 1], [], []>} : vector<32x8xf32>, vector<8x32xf32>, vector<32x32xf32> -> vector<32x32xf32>
    %101 = arith.addf %82, %100 : vector<32x32xf32>
    %102 = vector.extract_strided_slice %79 {offsets = [0, 8], sizes = [32, 8], strides = [1, 1]} : vector<32x32xf32> to vector<32x8xf32>
    %103 = vector.extract_strided_slice %80 {offsets = [0, 8], sizes = [32, 8], strides = [1, 1]} : vector<32x32xf32> to vector<32x8xf32>
    %104 = vector.extract_strided_slice %81 {offsets = [0, 8], sizes = [32, 8], strides = [1, 1]} : vector<32x32xf32> to vector<32x8xf32>
    %cst_34 = arith.constant dense<0.000000e+00> : vector<32x32xf32>
    %105 = tpu.matmul %102, %103, %cst_34 {dimension_numbers = #tpu.dot_dimension_numbers<[1], [1], [0], [0], [0, 0, 1, 0], [], []>} : vector<32x8xf32>, vector<32x8xf32>, vector<32x32xf32> -> vector<32x32xf32>
    %cst_35 = arith.constant -1.000000e+30 : f32
    %106 = vector.broadcast %cst_35 : f32 to vector<32x32xf32>
    %107 = arith.select %34, %105, %106 : vector<32x32xi1>, vector<32x32xf32>
    %cst_36 = arith.constant dense<0xFF800000> : vector<32xf32>
    %108 = vector.multi_reduction <maximumf>, %107, %cst_36 [1] : vector<32x32xf32> to vector<32xf32>
    %109 = vector.shape_cast %108 : vector<32xf32> to vector<32x1xf32>
    %110 = vector.broadcast %109 : vector<32x1xf32> to vector<32x32xf32>
    %111 = arith.subf %107, %110 : vector<32x32xf32>
    %112 = math.exp %111 : vector<32x32xf32>
    %cst_37 = arith.constant dense<0.000000e+00> : vector<32xf32>
    %113 = vector.multi_reduction <add>, %112, %cst_37 [1] : vector<32x32xf32> to vector<32xf32>
    %114 = vector.shape_cast %113 : vector<32xf32> to vector<32x1xf32>
    %115 = vector.broadcast %114 : vector<32x1xf32> to vector<32x32xf32>
    %116 = arith.divf %112, %115 : vector<32x32xf32>
    %cst_38 = arith.constant dense<0.000000e+00> : vector<32x8xf32>
    %117 = tpu.matmul %116, %104, %cst_38 {dimension_numbers = #tpu.dot_dimension_numbers<[1], [0], [0], [1], [0, 0, 1, 1], [], []>} : vector<32x32xf32>, vector<32x8xf32>, vector<32x8xf32> -> vector<32x8xf32>
    %118 = vector.extract_strided_slice %49 {offsets = [8, 0], sizes = [8, 32], strides = [1, 1]} : vector<32x32xf32> to vector<8x32xf32>
    %cst_39 = arith.constant dense<0.000000e+00> : vector<32x32xf32>
    %119 = tpu.matmul %117, %118, %cst_39 {dimension_numbers = #tpu.dot_dimension_numbers<[1], [0], [0], [1], [0, 0, 1, 1], [], []>} : vector<32x8xf32>, vector<8x32xf32>, vector<32x32xf32> -> vector<32x32xf32>
    %120 = arith.addf %101, %119 : vector<32x32xf32>
    %121 = vector.extract_strided_slice %79 {offsets = [0, 16], sizes = [32, 8], strides = [1, 1]} : vector<32x32xf32> to vector<32x8xf32>
    %122 = vector.extract_strided_slice %80 {offsets = [0, 16], sizes = [32, 8], strides = [1, 1]} : vector<32x32xf32> to vector<32x8xf32>
    %123 = vector.extract_strided_slice %81 {offsets = [0, 16], sizes = [32, 8], strides = [1, 1]} : vector<32x32xf32> to vector<32x8xf32>
    %cst_40 = arith.constant dense<0.000000e+00> : vector<32x32xf32>
    %124 = tpu.matmul %121, %122, %cst_40 {dimension_numbers = #tpu.dot_dimension_numbers<[1], [1], [0], [0], [0, 0, 1, 0], [], []>} : vector<32x8xf32>, vector<32x8xf32>, vector<32x32xf32> -> vector<32x32xf32>
    %cst_41 = arith.constant -1.000000e+30 : f32
    %125 = vector.broadcast %cst_41 : f32 to vector<32x32xf32>
    %126 = arith.select %34, %124, %125 : vector<32x32xi1>, vector<32x32xf32>
    %cst_42 = arith.constant dense<0xFF800000> : vector<32xf32>
    %127 = vector.multi_reduction <maximumf>, %126, %cst_42 [1] : vector<32x32xf32> to vector<32xf32>
    %128 = vector.shape_cast %127 : vector<32xf32> to vector<32x1xf32>
    %129 = vector.broadcast %128 : vector<32x1xf32> to vector<32x32xf32>
    %130 = arith.subf %126, %129 : vector<32x32xf32>
    %131 = math.exp %130 : vector<32x32xf32>
    %cst_43 = arith.constant dense<0.000000e+00> : vector<32xf32>
    %132 = vector.multi_reduction <add>, %131, %cst_43 [1] : vector<32x32xf32> to vector<32xf32>
    %133 = vector.shape_cast %132 : vector<32xf32> to vector<32x1xf32>
    %134 = vector.broadcast %133 : vector<32x1xf32> to vector<32x32xf32>
    %135 = arith.divf %131, %134 : vector<32x32xf32>
    %cst_44 = arith.constant dense<0.000000e+00> : vector<32x8xf32>
    %136 = tpu.matmul %135, %123, %cst_44 {dimension_numbers = #tpu.dot_dimension_numbers<[1], [0], [0], [1], [0, 0, 1, 1], [], []>} : vector<32x32xf32>, vector<32x8xf32>, vector<32x8xf32> -> vector<32x8xf32>
    %137 = vector.extract_strided_slice %49 {offsets = [16, 0], sizes = [8, 32], strides = [1, 1]} : vector<32x32xf32> to vector<8x32xf32>
    %cst_45 = arith.constant dense<0.000000e+00> : vector<32x32xf32>
    %138 = tpu.matmul %136, %137, %cst_45 {dimension_numbers = #tpu.dot_dimension_numbers<[1], [0], [0], [1], [0, 0, 1, 1], [], []>} : vector<32x8xf32>, vector<8x32xf32>, vector<32x32xf32> -> vector<32x32xf32>
    %139 = arith.addf %120, %138 : vector<32x32xf32>
    %140 = vector.extract_strided_slice %79 {offsets = [0, 24], sizes = [32, 8], strides = [1, 1]} : vector<32x32xf32> to vector<32x8xf32>
    %141 = vector.extract_strided_slice %80 {offsets = [0, 24], sizes = [32, 8], strides = [1, 1]} : vector<32x32xf32> to vector<32x8xf32>
    %142 = vector.extract_strided_slice %81 {offsets = [0, 24], sizes = [32, 8], strides = [1, 1]} : vector<32x32xf32> to vector<32x8xf32>
    %cst_46 = arith.constant dense<0.000000e+00> : vector<32x32xf32>
    %143 = tpu.matmul %140, %141, %cst_46 {dimension_numbers = #tpu.dot_dimension_numbers<[1], [1], [0], [0], [0, 0, 1, 0], [], []>} : vector<32x8xf32>, vector<32x8xf32>, vector<32x32xf32> -> vector<32x32xf32>
    %cst_47 = arith.constant -1.000000e+30 : f32
    %144 = vector.broadcast %cst_47 : f32 to vector<32x32xf32>
    %145 = arith.select %34, %143, %144 : vector<32x32xi1>, vector<32x32xf32>
    %cst_48 = arith.constant dense<0xFF800000> : vector<32xf32>
    %146 = vector.multi_reduction <maximumf>, %145, %cst_48 [1] : vector<32x32xf32> to vector<32xf32>
    %147 = vector.shape_cast %146 : vector<32xf32> to vector<32x1xf32>
    %148 = vector.broadcast %147 : vector<32x1xf32> to vector<32x32xf32>
    %149 = arith.subf %145, %148 : vector<32x32xf32>
    %150 = math.exp %149 : vector<32x32xf32>
    %cst_49 = arith.constant dense<0.000000e+00> : vector<32xf32>
    %151 = vector.multi_reduction <add>, %150, %cst_49 [1] : vector<32x32xf32> to vector<32xf32>
    %152 = vector.shape_cast %151 : vector<32xf32> to vector<32x1xf32>
    %153 = vector.broadcast %152 : vector<32x1xf32> to vector<32x32xf32>
    %154 = arith.divf %150, %153 : vector<32x32xf32>
    %cst_50 = arith.constant dense<0.000000e+00> : vector<32x8xf32>
    %155 = tpu.matmul %154, %142, %cst_50 {dimension_numbers = #tpu.dot_dimension_numbers<[1], [0], [0], [1], [0, 0, 1, 1], [], []>} : vector<32x32xf32>, vector<32x8xf32>, vector<32x8xf32> -> vector<32x8xf32>
    %156 = vector.extract_strided_slice %49 {offsets = [24, 0], sizes = [8, 32], strides = [1, 1]} : vector<32x32xf32> to vector<8x32xf32>
    %cst_51 = arith.constant dense<0.000000e+00> : vector<32x32xf32>
    %157 = tpu.matmul %155, %156, %cst_51 {dimension_numbers = #tpu.dot_dimension_numbers<[1], [0], [0], [1], [0, 0, 1, 1], [], []>} : vector<32x8xf32>, vector<8x32xf32>, vector<32x32xf32> -> vector<32x32xf32>
    %158 = arith.addf %139, %157 : vector<32x32xf32>
    %159 = arith.addf %21, %158 : vector<32x32xf32>
    %160 = vector.broadcast %42 : vector<1x32xf32> to vector<32x32xf32>
    %161 = arith.addf %159, %160 : vector<32x32xf32>
    %cst_52 = arith.constant dense<0.000000e+00> : vector<32xf32>
    %162 = vector.multi_reduction <add>, %161, %cst_52 [1] : vector<32x32xf32> to vector<32xf32>
    %163 = vector.shape_cast %162 : vector<32xf32> to vector<32x1xf32>
    %cst_53 = arith.constant 3.200000e+01 : f32
    %164 = vector.broadcast %cst_53 : f32 to vector<32x1xf32>
    %165 = arith.divf %163, %164 : vector<32x1xf32>
    %166 = vector.broadcast %165 : vector<32x1xf32> to vector<32x32xf32>
    %167 = arith.subf %161, %166 : vector<32x32xf32>
    %168 = arith.mulf %167, %167 : vector<32x32xf32>
    %cst_54 = arith.constant dense<0.000000e+00> : vector<32xf32>
    %169 = vector.multi_reduction <add>, %168, %cst_54 [1] : vector<32x32xf32> to vector<32xf32>
    %170 = vector.shape_cast %169 : vector<32xf32> to vector<32x1xf32>
    %cst_55 = arith.constant 3.200000e+01 : f32
    %171 = vector.broadcast %cst_55 : f32 to vector<32x1xf32>
    %172 = arith.divf %170, %171 : vector<32x1xf32>
    %173 = vector.broadcast %165 : vector<32x1xf32> to vector<32x32xf32>
    %174 = arith.subf %161, %173 : vector<32x32xf32>
    %cst_56 = arith.constant 9.99999974E-6 : f32
    %175 = vector.broadcast %cst_56 : f32 to vector<32x1xf32>
    %176 = arith.addf %172, %175 : vector<32x1xf32>
    %177 = math.sqrt %176 : vector<32x1xf32>
    %178 = vector.broadcast %177 : vector<32x1xf32> to vector<32x32xf32>
    %179 = arith.divf %174, %178 : vector<32x32xf32>
    %180 = vector.broadcast %39 : vector<1x32xf32> to vector<32x32xf32>
    %181 = arith.mulf %179, %180 : vector<32x32xf32>
    %182 = vector.broadcast %40 : vector<1x32xf32> to vector<32x32xf32>
    %183 = arith.addf %181, %182 : vector<32x32xf32>
    %cst_57 = arith.constant dense<0.000000e+00> : vector<32x128xf32>
    %184 = tpu.matmul %183, %48, %cst_57 {dimension_numbers = #tpu.dot_dimension_numbers<[1], [0], [0], [1], [0, 0, 1, 1], [], []>} : vector<32x32xf32>, vector<32x128xf32>, vector<32x128xf32> -> vector<32x128xf32>
    %185 = vector.broadcast %43 : vector<1x128xf32> to vector<32x128xf32>
    %186 = arith.addf %184, %185 : vector<32x128xf32>
    %cst_58 = arith.constant 5.000000e-01 : f32
    %187 = vector.broadcast %cst_58 : f32 to vector<32x128xf32>
    %188 = arith.mulf %187, %186 : vector<32x128xf32>
    %cst_59 = arith.constant 0.707106769 : f32
    %189 = vector.broadcast %cst_59 : f32 to vector<32x128xf32>
    %190 = arith.mulf %186, %189 : vector<32x128xf32>
    %cst_60 = arith.constant 0.000000e+00 : f32
    %191 = vector.broadcast %cst_60 : f32 to vector<32x128xf32>
    %192 = arith.cmpf olt, %190, %191 : vector<32x128xf32>
    %cst_61 = arith.constant -1.000000e+00 : f32
    %cst_62 = arith.constant 1.000000e+00 : f32
    %193 = vector.broadcast %cst_61 : f32 to vector<32x128xf32>
    %194 = vector.broadcast %cst_62 : f32 to vector<32x128xf32>
    %195 = arith.select %192, %193, %194 : vector<32x128xi1>, vector<32x128xf32>
    %196 = math.absf %190 : vector<32x128xf32>
    %cst_63 = arith.constant 0.327591091 : f32
    %197 = vector.broadcast %cst_63 : f32 to vector<32x128xf32>
    %198 = arith.mulf %197, %196 : vector<32x128xf32>
    %cst_64 = arith.constant 1.000000e+00 : f32
    %199 = vector.broadcast %cst_64 : f32 to vector<32x128xf32>
    %200 = arith.addf %199, %198 : vector<32x128xf32>
    %cst_65 = arith.constant 1.000000e+00 : f32
    %201 = vector.broadcast %cst_65 : f32 to vector<32x128xf32>
    %202 = arith.divf %201, %200 : vector<32x128xf32>
    %cst_66 = arith.constant 1.06140542 : f32
    %203 = vector.broadcast %cst_66 : f32 to vector<32x128xf32>
    %204 = arith.mulf %203, %202 : vector<32x128xf32>
    %cst_67 = arith.constant -1.45315206 : f32
    %205 = vector.broadcast %cst_67 : f32 to vector<32x128xf32>
    %206 = arith.addf %204, %205 : vector<32x128xf32>
    %207 = arith.mulf %206, %202 : vector<32x128xf32>
    %cst_68 = arith.constant 1.42141378 : f32
    %208 = vector.broadcast %cst_68 : f32 to vector<32x128xf32>
    %209 = arith.addf %207, %208 : vector<32x128xf32>
    %210 = arith.mulf %209, %202 : vector<32x128xf32>
    %cst_69 = arith.constant -0.284496725 : f32
    %211 = vector.broadcast %cst_69 : f32 to vector<32x128xf32>
    %212 = arith.addf %210, %211 : vector<32x128xf32>
    %213 = arith.mulf %212, %202 : vector<32x128xf32>
    %cst_70 = arith.constant 0.254829586 : f32
    %214 = vector.broadcast %cst_70 : f32 to vector<32x128xf32>
    %215 = arith.addf %213, %214 : vector<32x128xf32>
    %216 = arith.mulf %215, %202 : vector<32x128xf32>
    %cst_71 = arith.constant 0.000000e+00 : f32
    %217 = vector.broadcast %cst_71 : f32 to vector<32x128xf32>
    %218 = arith.subf %217, %196 : vector<32x128xf32>
    %219 = arith.mulf %218, %196 : vector<32x128xf32>
    %220 = math.exp %219 : vector<32x128xf32>
    %221 = arith.mulf %216, %220 : vector<32x128xf32>
    %cst_72 = arith.constant 1.000000e+00 : f32
    %222 = vector.broadcast %cst_72 : f32 to vector<32x128xf32>
    %223 = arith.subf %222, %221 : vector<32x128xf32>
    %224 = arith.mulf %195, %223 : vector<32x128xf32>
    %cst_73 = arith.constant 1.000000e+00 : f32
    %225 = vector.broadcast %cst_73 : f32 to vector<32x128xf32>
    %226 = arith.addf %225, %224 : vector<32x128xf32>
    %227 = arith.mulf %188, %226 : vector<32x128xf32>
    %cst_74 = arith.constant dense<0.000000e+00> : vector<32x32xf32>
    %228 = tpu.matmul %227, %51, %cst_74 {dimension_numbers = #tpu.dot_dimension_numbers<[1], [0], [0], [1], [0, 0, 1, 1], [], []>} : vector<32x128xf32>, vector<128x32xf32>, vector<32x32xf32> -> vector<32x32xf32>
    %229 = arith.addf %161, %228 : vector<32x32xf32>
    %230 = vector.broadcast %44 : vector<1x32xf32> to vector<32x32xf32>
    %231 = arith.addf %229, %230 : vector<32x32xf32>
    %c1 = arith.constant 1 : index
    %c0_75 = arith.constant 0 : index
    %c0_76 = arith.constant 0 : index
    %232 = vector.load %arg3[%c1, %c0_75, %c0_76] : memref<2x8x128xf32, #tpu.memory_space<vmem>>, vector<1x8x128xf32>
    %233 = vector.shape_cast %232 : vector<1x8x128xf32> to vector<8x128xf32>
    %234 = vector.extract_strided_slice %233 {offsets = [0, 0], sizes = [1, 32], strides = [1, 1]} : vector<8x128xf32> to vector<1x32xf32>
    %235 = vector.extract_strided_slice %233 {offsets = [1, 0], sizes = [1, 32], strides = [1, 1]} : vector<8x128xf32> to vector<1x32xf32>
    %236 = vector.extract_strided_slice %233 {offsets = [2, 0], sizes = [1, 32], strides = [1, 1]} : vector<8x128xf32> to vector<1x32xf32>
    %237 = vector.extract_strided_slice %233 {offsets = [3, 0], sizes = [1, 32], strides = [1, 1]} : vector<8x128xf32> to vector<1x32xf32>
    %238 = vector.extract_strided_slice %233 {offsets = [4, 0], sizes = [1, 96], strides = [1, 1]} : vector<8x128xf32> to vector<1x96xf32>
    %239 = vector.extract_strided_slice %233 {offsets = [5, 0], sizes = [1, 32], strides = [1, 1]} : vector<8x128xf32> to vector<1x32xf32>
    %240 = vector.extract_strided_slice %233 {offsets = [6, 0], sizes = [1, 128], strides = [1, 1]} : vector<8x128xf32> to vector<1x128xf32>
    %241 = vector.extract_strided_slice %233 {offsets = [7, 0], sizes = [1, 32], strides = [1, 1]} : vector<8x128xf32> to vector<1x32xf32>
    %c1_77 = arith.constant 1 : index
    %c0_78 = arith.constant 0 : index
    %c0_79 = arith.constant 0 : index
    %242 = vector.load %arg4[%c1_77, %c0_78, %c0_79] : memref<2x32x288xf32, #tpu.memory_space<vmem>>, vector<1x32x288xf32>
    %243 = vector.shape_cast %242 : vector<1x32x288xf32> to vector<32x288xf32>
    %244 = vector.extract_strided_slice %243 {offsets = [0, 0], sizes = [32, 96], strides = [1, 1]} : vector<32x288xf32> to vector<32x96xf32>
    %245 = vector.extract_strided_slice %243 {offsets = [0, 128], sizes = [32, 128], strides = [1, 1]} : vector<32x288xf32> to vector<32x128xf32>
    %246 = vector.extract_strided_slice %243 {offsets = [0, 256], sizes = [32, 32], strides = [1, 1]} : vector<32x288xf32> to vector<32x32xf32>
    %c1_80 = arith.constant 1 : index
    %c0_81 = arith.constant 0 : index
    %c0_82 = arith.constant 0 : index
    %247 = vector.load %arg5[%c1_80, %c0_81, %c0_82] : memref<2x128x32xf32, #tpu.memory_space<vmem>>, vector<1x128x32xf32>
    %248 = vector.shape_cast %247 : vector<1x128x32xf32> to vector<128x32xf32>
    %cst_83 = arith.constant dense<0.000000e+00> : vector<32xf32>
    %249 = vector.multi_reduction <add>, %231, %cst_83 [1] : vector<32x32xf32> to vector<32xf32>
    %250 = vector.shape_cast %249 : vector<32xf32> to vector<32x1xf32>
    %cst_84 = arith.constant 3.200000e+01 : f32
    %251 = vector.broadcast %cst_84 : f32 to vector<32x1xf32>
    %252 = arith.divf %250, %251 : vector<32x1xf32>
    %253 = vector.broadcast %252 : vector<32x1xf32> to vector<32x32xf32>
    %254 = arith.subf %231, %253 : vector<32x32xf32>
    %255 = arith.mulf %254, %254 : vector<32x32xf32>
    %cst_85 = arith.constant dense<0.000000e+00> : vector<32xf32>
    %256 = vector.multi_reduction <add>, %255, %cst_85 [1] : vector<32x32xf32> to vector<32xf32>
    %257 = vector.shape_cast %256 : vector<32xf32> to vector<32x1xf32>
    %cst_86 = arith.constant 3.200000e+01 : f32
    %258 = vector.broadcast %cst_86 : f32 to vector<32x1xf32>
    %259 = arith.divf %257, %258 : vector<32x1xf32>
    %260 = vector.broadcast %252 : vector<32x1xf32> to vector<32x32xf32>
    %261 = arith.subf %231, %260 : vector<32x32xf32>
    %cst_87 = arith.constant 9.99999974E-6 : f32
    %262 = vector.broadcast %cst_87 : f32 to vector<32x1xf32>
    %263 = arith.addf %259, %262 : vector<32x1xf32>
    %264 = math.sqrt %263 : vector<32x1xf32>
    %265 = vector.broadcast %264 : vector<32x1xf32> to vector<32x32xf32>
    %266 = arith.divf %261, %265 : vector<32x32xf32>
    %267 = vector.broadcast %234 : vector<1x32xf32> to vector<32x32xf32>
    %268 = arith.mulf %266, %267 : vector<32x32xf32>
    %269 = vector.broadcast %235 : vector<1x32xf32> to vector<32x32xf32>
    %270 = arith.addf %268, %269 : vector<32x32xf32>
    %cst_88 = arith.constant dense<0.000000e+00> : vector<32x96xf32>
    %271 = tpu.matmul %270, %244, %cst_88 {dimension_numbers = #tpu.dot_dimension_numbers<[1], [0], [0], [1], [0, 0, 1, 1], [], []>} : vector<32x32xf32>, vector<32x96xf32>, vector<32x96xf32> -> vector<32x96xf32>
    %272 = vector.broadcast %238 : vector<1x96xf32> to vector<32x96xf32>
    %273 = arith.addf %271, %272 : vector<32x96xf32>
    %274 = vector.extract_strided_slice %273 {offsets = [0, 0], sizes = [32, 32], strides = [1, 1]} : vector<32x96xf32> to vector<32x32xf32>
    %cst_89 = arith.constant 0.353553385 : f32
    %275 = vector.broadcast %cst_89 : f32 to vector<32x32xf32>
    %276 = arith.mulf %274, %275 : vector<32x32xf32>
    %277 = vector.extract_strided_slice %273 {offsets = [0, 32], sizes = [32, 32], strides = [1, 1]} : vector<32x96xf32> to vector<32x32xf32>
    %278 = vector.extract_strided_slice %273 {offsets = [0, 64], sizes = [32, 32], strides = [1, 1]} : vector<32x96xf32> to vector<32x32xf32>
    %cst_90 = arith.constant 0.000000e+00 : f32
    %279 = vector.broadcast %cst_90 : f32 to vector<32x32xf32>
    %280 = vector.extract_strided_slice %276 {offsets = [0, 0], sizes = [32, 8], strides = [1, 1]} : vector<32x32xf32> to vector<32x8xf32>
    %281 = vector.extract_strided_slice %277 {offsets = [0, 0], sizes = [32, 8], strides = [1, 1]} : vector<32x32xf32> to vector<32x8xf32>
    %282 = vector.extract_strided_slice %278 {offsets = [0, 0], sizes = [32, 8], strides = [1, 1]} : vector<32x32xf32> to vector<32x8xf32>
    %cst_91 = arith.constant dense<0.000000e+00> : vector<32x32xf32>
    %283 = tpu.matmul %280, %281, %cst_91 {dimension_numbers = #tpu.dot_dimension_numbers<[1], [1], [0], [0], [0, 0, 1, 0], [], []>} : vector<32x8xf32>, vector<32x8xf32>, vector<32x32xf32> -> vector<32x32xf32>
    %cst_92 = arith.constant -1.000000e+30 : f32
    %284 = vector.broadcast %cst_92 : f32 to vector<32x32xf32>
    %285 = arith.select %34, %283, %284 : vector<32x32xi1>, vector<32x32xf32>
    %cst_93 = arith.constant dense<0xFF800000> : vector<32xf32>
    %286 = vector.multi_reduction <maximumf>, %285, %cst_93 [1] : vector<32x32xf32> to vector<32xf32>
    %287 = vector.shape_cast %286 : vector<32xf32> to vector<32x1xf32>
    %288 = vector.broadcast %287 : vector<32x1xf32> to vector<32x32xf32>
    %289 = arith.subf %285, %288 : vector<32x32xf32>
    %290 = math.exp %289 : vector<32x32xf32>
    %cst_94 = arith.constant dense<0.000000e+00> : vector<32xf32>
    %291 = vector.multi_reduction <add>, %290, %cst_94 [1] : vector<32x32xf32> to vector<32xf32>
    %292 = vector.shape_cast %291 : vector<32xf32> to vector<32x1xf32>
    %293 = vector.broadcast %292 : vector<32x1xf32> to vector<32x32xf32>
    %294 = arith.divf %290, %293 : vector<32x32xf32>
    %cst_95 = arith.constant dense<0.000000e+00> : vector<32x8xf32>
    %295 = tpu.matmul %294, %282, %cst_95 {dimension_numbers = #tpu.dot_dimension_numbers<[1], [0], [0], [1], [0, 0, 1, 1], [], []>} : vector<32x32xf32>, vector<32x8xf32>, vector<32x8xf32> -> vector<32x8xf32>
    %296 = vector.extract_strided_slice %246 {offsets = [0, 0], sizes = [8, 32], strides = [1, 1]} : vector<32x32xf32> to vector<8x32xf32>
    %cst_96 = arith.constant dense<0.000000e+00> : vector<32x32xf32>
    %297 = tpu.matmul %295, %296, %cst_96 {dimension_numbers = #tpu.dot_dimension_numbers<[1], [0], [0], [1], [0, 0, 1, 1], [], []>} : vector<32x8xf32>, vector<8x32xf32>, vector<32x32xf32> -> vector<32x32xf32>
    %298 = arith.addf %279, %297 : vector<32x32xf32>
    %299 = vector.extract_strided_slice %276 {offsets = [0, 8], sizes = [32, 8], strides = [1, 1]} : vector<32x32xf32> to vector<32x8xf32>
    %300 = vector.extract_strided_slice %277 {offsets = [0, 8], sizes = [32, 8], strides = [1, 1]} : vector<32x32xf32> to vector<32x8xf32>
    %301 = vector.extract_strided_slice %278 {offsets = [0, 8], sizes = [32, 8], strides = [1, 1]} : vector<32x32xf32> to vector<32x8xf32>
    %cst_97 = arith.constant dense<0.000000e+00> : vector<32x32xf32>
    %302 = tpu.matmul %299, %300, %cst_97 {dimension_numbers = #tpu.dot_dimension_numbers<[1], [1], [0], [0], [0, 0, 1, 0], [], []>} : vector<32x8xf32>, vector<32x8xf32>, vector<32x32xf32> -> vector<32x32xf32>
    %cst_98 = arith.constant -1.000000e+30 : f32
    %303 = vector.broadcast %cst_98 : f32 to vector<32x32xf32>
    %304 = arith.select %34, %302, %303 : vector<32x32xi1>, vector<32x32xf32>
    %cst_99 = arith.constant dense<0xFF800000> : vector<32xf32>
    %305 = vector.multi_reduction <maximumf>, %304, %cst_99 [1] : vector<32x32xf32> to vector<32xf32>
    %306 = vector.shape_cast %305 : vector<32xf32> to vector<32x1xf32>
    %307 = vector.broadcast %306 : vector<32x1xf32> to vector<32x32xf32>
    %308 = arith.subf %304, %307 : vector<32x32xf32>
    %309 = math.exp %308 : vector<32x32xf32>
    %cst_100 = arith.constant dense<0.000000e+00> : vector<32xf32>
    %310 = vector.multi_reduction <add>, %309, %cst_100 [1] : vector<32x32xf32> to vector<32xf32>
    %311 = vector.shape_cast %310 : vector<32xf32> to vector<32x1xf32>
    %312 = vector.broadcast %311 : vector<32x1xf32> to vector<32x32xf32>
    %313 = arith.divf %309, %312 : vector<32x32xf32>
    %cst_101 = arith.constant dense<0.000000e+00> : vector<32x8xf32>
    %314 = tpu.matmul %313, %301, %cst_101 {dimension_numbers = #tpu.dot_dimension_numbers<[1], [0], [0], [1], [0, 0, 1, 1], [], []>} : vector<32x32xf32>, vector<32x8xf32>, vector<32x8xf32> -> vector<32x8xf32>
    %315 = vector.extract_strided_slice %246 {offsets = [8, 0], sizes = [8, 32], strides = [1, 1]} : vector<32x32xf32> to vector<8x32xf32>
    %cst_102 = arith.constant dense<0.000000e+00> : vector<32x32xf32>
    %316 = tpu.matmul %314, %315, %cst_102 {dimension_numbers = #tpu.dot_dimension_numbers<[1], [0], [0], [1], [0, 0, 1, 1], [], []>} : vector<32x8xf32>, vector<8x32xf32>, vector<32x32xf32> -> vector<32x32xf32>
    %317 = arith.addf %298, %316 : vector<32x32xf32>
    %318 = vector.extract_strided_slice %276 {offsets = [0, 16], sizes = [32, 8], strides = [1, 1]} : vector<32x32xf32> to vector<32x8xf32>
    %319 = vector.extract_strided_slice %277 {offsets = [0, 16], sizes = [32, 8], strides = [1, 1]} : vector<32x32xf32> to vector<32x8xf32>
    %320 = vector.extract_strided_slice %278 {offsets = [0, 16], sizes = [32, 8], strides = [1, 1]} : vector<32x32xf32> to vector<32x8xf32>
    %cst_103 = arith.constant dense<0.000000e+00> : vector<32x32xf32>
    %321 = tpu.matmul %318, %319, %cst_103 {dimension_numbers = #tpu.dot_dimension_numbers<[1], [1], [0], [0], [0, 0, 1, 0], [], []>} : vector<32x8xf32>, vector<32x8xf32>, vector<32x32xf32> -> vector<32x32xf32>
    %cst_104 = arith.constant -1.000000e+30 : f32
    %322 = vector.broadcast %cst_104 : f32 to vector<32x32xf32>
    %323 = arith.select %34, %321, %322 : vector<32x32xi1>, vector<32x32xf32>
    %cst_105 = arith.constant dense<0xFF800000> : vector<32xf32>
    %324 = vector.multi_reduction <maximumf>, %323, %cst_105 [1] : vector<32x32xf32> to vector<32xf32>
    %325 = vector.shape_cast %324 : vector<32xf32> to vector<32x1xf32>
    %326 = vector.broadcast %325 : vector<32x1xf32> to vector<32x32xf32>
    %327 = arith.subf %323, %326 : vector<32x32xf32>
    %328 = math.exp %327 : vector<32x32xf32>
    %cst_106 = arith.constant dense<0.000000e+00> : vector<32xf32>
    %329 = vector.multi_reduction <add>, %328, %cst_106 [1] : vector<32x32xf32> to vector<32xf32>
    %330 = vector.shape_cast %329 : vector<32xf32> to vector<32x1xf32>
    %331 = vector.broadcast %330 : vector<32x1xf32> to vector<32x32xf32>
    %332 = arith.divf %328, %331 : vector<32x32xf32>
    %cst_107 = arith.constant dense<0.000000e+00> : vector<32x8xf32>
    %333 = tpu.matmul %332, %320, %cst_107 {dimension_numbers = #tpu.dot_dimension_numbers<[1], [0], [0], [1], [0, 0, 1, 1], [], []>} : vector<32x32xf32>, vector<32x8xf32>, vector<32x8xf32> -> vector<32x8xf32>
    %334 = vector.extract_strided_slice %246 {offsets = [16, 0], sizes = [8, 32], strides = [1, 1]} : vector<32x32xf32> to vector<8x32xf32>
    %cst_108 = arith.constant dense<0.000000e+00> : vector<32x32xf32>
    %335 = tpu.matmul %333, %334, %cst_108 {dimension_numbers = #tpu.dot_dimension_numbers<[1], [0], [0], [1], [0, 0, 1, 1], [], []>} : vector<32x8xf32>, vector<8x32xf32>, vector<32x32xf32> -> vector<32x32xf32>
    %336 = arith.addf %317, %335 : vector<32x32xf32>
    %337 = vector.extract_strided_slice %276 {offsets = [0, 24], sizes = [32, 8], strides = [1, 1]} : vector<32x32xf32> to vector<32x8xf32>
    %338 = vector.extract_strided_slice %277 {offsets = [0, 24], sizes = [32, 8], strides = [1, 1]} : vector<32x32xf32> to vector<32x8xf32>
    %339 = vector.extract_strided_slice %278 {offsets = [0, 24], sizes = [32, 8], strides = [1, 1]} : vector<32x32xf32> to vector<32x8xf32>
    %cst_109 = arith.constant dense<0.000000e+00> : vector<32x32xf32>
    %340 = tpu.matmul %337, %338, %cst_109 {dimension_numbers = #tpu.dot_dimension_numbers<[1], [1], [0], [0], [0, 0, 1, 0], [], []>} : vector<32x8xf32>, vector<32x8xf32>, vector<32x32xf32> -> vector<32x32xf32>
    %cst_110 = arith.constant -1.000000e+30 : f32
    %341 = vector.broadcast %cst_110 : f32 to vector<32x32xf32>
    %342 = arith.select %34, %340, %341 : vector<32x32xi1>, vector<32x32xf32>
    %cst_111 = arith.constant dense<0xFF800000> : vector<32xf32>
    %343 = vector.multi_reduction <maximumf>, %342, %cst_111 [1] : vector<32x32xf32> to vector<32xf32>
    %344 = vector.shape_cast %343 : vector<32xf32> to vector<32x1xf32>
    %345 = vector.broadcast %344 : vector<32x1xf32> to vector<32x32xf32>
    %346 = arith.subf %342, %345 : vector<32x32xf32>
    %347 = math.exp %346 : vector<32x32xf32>
    %cst_112 = arith.constant dense<0.000000e+00> : vector<32xf32>
    %348 = vector.multi_reduction <add>, %347, %cst_112 [1] : vector<32x32xf32> to vector<32xf32>
    %349 = vector.shape_cast %348 : vector<32xf32> to vector<32x1xf32>
    %350 = vector.broadcast %349 : vector<32x1xf32> to vector<32x32xf32>
    %351 = arith.divf %347, %350 : vector<32x32xf32>
    %cst_113 = arith.constant dense<0.000000e+00> : vector<32x8xf32>
    %352 = tpu.matmul %351, %339, %cst_113 {dimension_numbers = #tpu.dot_dimension_numbers<[1], [0], [0], [1], [0, 0, 1, 1], [], []>} : vector<32x32xf32>, vector<32x8xf32>, vector<32x8xf32> -> vector<32x8xf32>
    %353 = vector.extract_strided_slice %246 {offsets = [24, 0], sizes = [8, 32], strides = [1, 1]} : vector<32x32xf32> to vector<8x32xf32>
    %cst_114 = arith.constant dense<0.000000e+00> : vector<32x32xf32>
    %354 = tpu.matmul %352, %353, %cst_114 {dimension_numbers = #tpu.dot_dimension_numbers<[1], [0], [0], [1], [0, 0, 1, 1], [], []>} : vector<32x8xf32>, vector<8x32xf32>, vector<32x32xf32> -> vector<32x32xf32>
    %355 = arith.addf %336, %354 : vector<32x32xf32>
    %356 = arith.addf %231, %355 : vector<32x32xf32>
    %357 = vector.broadcast %239 : vector<1x32xf32> to vector<32x32xf32>
    %358 = arith.addf %356, %357 : vector<32x32xf32>
    %cst_115 = arith.constant dense<0.000000e+00> : vector<32xf32>
    %359 = vector.multi_reduction <add>, %358, %cst_115 [1] : vector<32x32xf32> to vector<32xf32>
    %360 = vector.shape_cast %359 : vector<32xf32> to vector<32x1xf32>
    %cst_116 = arith.constant 3.200000e+01 : f32
    %361 = vector.broadcast %cst_116 : f32 to vector<32x1xf32>
    %362 = arith.divf %360, %361 : vector<32x1xf32>
    %363 = vector.broadcast %362 : vector<32x1xf32> to vector<32x32xf32>
    %364 = arith.subf %358, %363 : vector<32x32xf32>
    %365 = arith.mulf %364, %364 : vector<32x32xf32>
    %cst_117 = arith.constant dense<0.000000e+00> : vector<32xf32>
    %366 = vector.multi_reduction <add>, %365, %cst_117 [1] : vector<32x32xf32> to vector<32xf32>
    %367 = vector.shape_cast %366 : vector<32xf32> to vector<32x1xf32>
    %cst_118 = arith.constant 3.200000e+01 : f32
    %368 = vector.broadcast %cst_118 : f32 to vector<32x1xf32>
    %369 = arith.divf %367, %368 : vector<32x1xf32>
    %370 = vector.broadcast %362 : vector<32x1xf32> to vector<32x32xf32>
    %371 = arith.subf %358, %370 : vector<32x32xf32>
    %cst_119 = arith.constant 9.99999974E-6 : f32
    %372 = vector.broadcast %cst_119 : f32 to vector<32x1xf32>
    %373 = arith.addf %369, %372 : vector<32x1xf32>
    %374 = math.sqrt %373 : vector<32x1xf32>
    %375 = vector.broadcast %374 : vector<32x1xf32> to vector<32x32xf32>
    %376 = arith.divf %371, %375 : vector<32x32xf32>
    %377 = vector.broadcast %236 : vector<1x32xf32> to vector<32x32xf32>
    %378 = arith.mulf %376, %377 : vector<32x32xf32>
    %379 = vector.broadcast %237 : vector<1x32xf32> to vector<32x32xf32>
    %380 = arith.addf %378, %379 : vector<32x32xf32>
    %cst_120 = arith.constant dense<0.000000e+00> : vector<32x128xf32>
    %381 = tpu.matmul %380, %245, %cst_120 {dimension_numbers = #tpu.dot_dimension_numbers<[1], [0], [0], [1], [0, 0, 1, 1], [], []>} : vector<32x32xf32>, vector<32x128xf32>, vector<32x128xf32> -> vector<32x128xf32>
    %382 = vector.broadcast %240 : vector<1x128xf32> to vector<32x128xf32>
    %383 = arith.addf %381, %382 : vector<32x128xf32>
    %cst_121 = arith.constant 5.000000e-01 : f32
    %384 = vector.broadcast %cst_121 : f32 to vector<32x128xf32>
    %385 = arith.mulf %384, %383 : vector<32x128xf32>
    %cst_122 = arith.constant 0.707106769 : f32
    %386 = vector.broadcast %cst_122 : f32 to vector<32x128xf32>
    %387 = arith.mulf %383, %386 : vector<32x128xf32>
    %cst_123 = arith.constant 0.000000e+00 : f32
    %388 = vector.broadcast %cst_123 : f32 to vector<32x128xf32>
    %389 = arith.cmpf olt, %387, %388 : vector<32x128xf32>
    %cst_124 = arith.constant -1.000000e+00 : f32
    %cst_125 = arith.constant 1.000000e+00 : f32
    %390 = vector.broadcast %cst_124 : f32 to vector<32x128xf32>
    %391 = vector.broadcast %cst_125 : f32 to vector<32x128xf32>
    %392 = arith.select %389, %390, %391 : vector<32x128xi1>, vector<32x128xf32>
    %393 = math.absf %387 : vector<32x128xf32>
    %cst_126 = arith.constant 0.327591091 : f32
    %394 = vector.broadcast %cst_126 : f32 to vector<32x128xf32>
    %395 = arith.mulf %394, %393 : vector<32x128xf32>
    %cst_127 = arith.constant 1.000000e+00 : f32
    %396 = vector.broadcast %cst_127 : f32 to vector<32x128xf32>
    %397 = arith.addf %396, %395 : vector<32x128xf32>
    %cst_128 = arith.constant 1.000000e+00 : f32
    %398 = vector.broadcast %cst_128 : f32 to vector<32x128xf32>
    %399 = arith.divf %398, %397 : vector<32x128xf32>
    %cst_129 = arith.constant 1.06140542 : f32
    %400 = vector.broadcast %cst_129 : f32 to vector<32x128xf32>
    %401 = arith.mulf %400, %399 : vector<32x128xf32>
    %cst_130 = arith.constant -1.45315206 : f32
    %402 = vector.broadcast %cst_130 : f32 to vector<32x128xf32>
    %403 = arith.addf %401, %402 : vector<32x128xf32>
    %404 = arith.mulf %403, %399 : vector<32x128xf32>
    %cst_131 = arith.constant 1.42141378 : f32
    %405 = vector.broadcast %cst_131 : f32 to vector<32x128xf32>
    %406 = arith.addf %404, %405 : vector<32x128xf32>
    %407 = arith.mulf %406, %399 : vector<32x128xf32>
    %cst_132 = arith.constant -0.284496725 : f32
    %408 = vector.broadcast %cst_132 : f32 to vector<32x128xf32>
    %409 = arith.addf %407, %408 : vector<32x128xf32>
    %410 = arith.mulf %409, %399 : vector<32x128xf32>
    %cst_133 = arith.constant 0.254829586 : f32
    %411 = vector.broadcast %cst_133 : f32 to vector<32x128xf32>
    %412 = arith.addf %410, %411 : vector<32x128xf32>
    %413 = arith.mulf %412, %399 : vector<32x128xf32>
    %cst_134 = arith.constant 0.000000e+00 : f32
    %414 = vector.broadcast %cst_134 : f32 to vector<32x128xf32>
    %415 = arith.subf %414, %393 : vector<32x128xf32>
    %416 = arith.mulf %415, %393 : vector<32x128xf32>
    %417 = math.exp %416 : vector<32x128xf32>
    %418 = arith.mulf %413, %417 : vector<32x128xf32>
    %cst_135 = arith.constant 1.000000e+00 : f32
    %419 = vector.broadcast %cst_135 : f32 to vector<32x128xf32>
    %420 = arith.subf %419, %418 : vector<32x128xf32>
    %421 = arith.mulf %392, %420 : vector<32x128xf32>
    %cst_136 = arith.constant 1.000000e+00 : f32
    %422 = vector.broadcast %cst_136 : f32 to vector<32x128xf32>
    %423 = arith.addf %422, %421 : vector<32x128xf32>
    %424 = arith.mulf %385, %423 : vector<32x128xf32>
    %cst_137 = arith.constant dense<0.000000e+00> : vector<32x32xf32>
    %425 = tpu.matmul %424, %248, %cst_137 {dimension_numbers = #tpu.dot_dimension_numbers<[1], [0], [0], [1], [0, 0, 1, 1], [], []>} : vector<32x128xf32>, vector<128x32xf32>, vector<32x32xf32> -> vector<32x32xf32>
    %426 = arith.addf %358, %425 : vector<32x32xf32>
    %427 = vector.broadcast %241 : vector<1x32xf32> to vector<32x32xf32>
    %428 = arith.addf %426, %427 : vector<32x32xf32>
    %c0_138 = arith.constant 0 : index
    %c0_139 = arith.constant 0 : index
    %429 = vector.load %arg6[%c0_138, %c0_139] : memref<32x32xf32, #tpu.memory_space<vmem>>, vector<32x32xf32>
    tpu.vector_store %arg6[%c0_138, %c0_139], %428 {strides = array<i32>} : memref<32x32xf32, #tpu.memory_space<vmem>>, vector<32x32xf32>,
    return
  }
}

</mosaic_0001>

<llo_original>
// kernel: squeeze.1
$region0: #{squeeze.1}
  %s0 = inlined_call_operand.vmem [shape: f32[1,16,2], index: 0, kind: input, shape index: {}]
  %s1 = inlined_call_operand.vmem [shape: f32[32], index: 1, kind: output, shape index: {}]
  $region1: #{squeeze.1} parent=0
    #allocation0 [shape = 'u8[4096]{0}', space=vmem, size = 0x1000, scoped, tag = 'scoped mem for output reshape']
    %v2 = vld [vmem:[%s0] sm:$0x1]
    %vm3 = vcmask 15360
    %4 = vst.msk [vmem:[#allocation0] sm:$0x1] %vm3, %v2
    %s5 = scalar_lea.vmem %s0, 15
    %v6 = vld [vmem:[%s5] sm:$0x1]
    %7 = vrot.lane.b32.xlu0 %v6, 30
    %v8 = vpop.permute.xlu0 %7
    %vm9 = vcmask 261360
    %10 = vst.msk [vmem:[#allocation0] sm:$0x1] %vm9, %v8
    %s11 = scalar_lea.vmem %s0, 14
    %v12 = vld [vmem:[%s11] sm:$0x1]
    %13 = vrot.lane.b32.xlu0 %v12, 28
    %v14 = vpop.permute.xlu0 %13
    %vm15 = vcmask 244960
    %16 = vst.msk [vmem:[#allocation0] sm:$0x1] %vm15, %v14
    %s17 = scalar_lea.vmem %s0, 13
    %v18 = vld [vmem:[%s17] sm:$0x1]
    %19 = vrot.lane.b32.xlu0 %v18, 26
    %v20 = vpop.permute.xlu0 %19
    %vm21 = vcmask 228560
    %22 = vst.msk [vmem:[#allocation0] sm:$0x1] %vm21, %v20
    %s23 = scalar_lea.vmem %s0, 12
    %v24 = vld [vmem:[%s23] sm:$0x1]
    %25 = vrot.lane.b32.xlu0 %v24, 24
    %v26 = vpop.permute.xlu0 %25
    %vm27 = vcmask 212160
    %28 = vst.msk [vmem:[#allocation0] sm:$0x1] %vm27, %v26
    %s29 = scalar_lea.vmem %s0, 11
    %v30 = vld [vmem:[%s29] sm:$0x1]
    %31 = vrot.lane.b32.xlu0 %v30, 22
    %v32 = vpop.permute.xlu0 %31
    %vm33 = vcmask 195760
    %34 = vst.msk [vmem:[#allocation0] sm:$0x1] %vm33, %v32
    %s35 = scalar_lea.vmem %s0, 10
    %v36 = vld [vmem:[%s35] sm:$0x1]
    %37 = vrot.lane.b32.xlu0 %v36, 20
    %v38 = vpop.permute.xlu0 %37
    %vm39 = vcmask 179360
    %40 = vst.msk [vmem:[#allocation0] sm:$0x1] %vm39, %v38
    %s41 = scalar_lea.vmem %s0, 9
    %v42 = vld [vmem:[%s41] sm:$0x1]
    %43 = vrot.lane.b32.xlu0 %v42, 18
    %v44 = vpop.permute.xlu0 %43
    %vm45 = vcmask 162960
    %46 = vst.msk [vmem:[#allocation0] sm:$0x1] %vm45, %v44
    %s47 = scalar_lea.vmem %s0, 8
    %v48 = vld [vmem:[%s47] sm:$0x1]
    %49 = vrot.lane.b32.xlu0 %v48, 16
    %v50 = vpop.permute.xlu0 %49
    %vm51 = vcmask 146560
    %52 = vst.msk [vmem:[#allocation0] sm:$0x1] %vm51, %v50
    %s53 = scalar_lea.vmem %s0, 7
    %v54 = vld [vmem:[%s53] sm:$0x1]
    %55 = vrot.lane.b32.xlu0 %v54, 14
    %v56 = vpop.permute.xlu0 %55
    %vm57 = vcmask 130160
    %58 = vst.msk [vmem:[#allocation0] sm:$0x1] %vm57, %v56
    %s59 = scalar_lea.vmem %s0, 6
    %v60 = vld [vmem:[%s59] sm:$0x1]
    %61 = vrot.lane.b32.xlu0 %v60, 12
    %v62 = vpop.permute.xlu0 %61
    %vm63 = vcmask 113760
    %64 = vst.msk [vmem:[#allocation0] sm:$0x1] %vm63, %v62
    %s65 = scalar_lea.vmem %s0, 5
    %v66 = vld [vmem:[%s65] sm:$0x1]
    %67 = vrot.lane.b32.xlu0 %v66, 10
    %v68 = vpop.permute.xlu0 %67
    %vm69 = vcmask 97360
    %70 = vst.msk [vmem:[#allocation0] sm:$0x1] %vm69, %v68
    %s71 = scalar_lea.vmem %s0, 4
    %v72 = vld [vmem:[%s71] sm:$0x1]
    %73 = vrot.lane.b32.xlu0 %v72, 8
    %v74 = vpop.permute.xlu0 %73
    %vm75 = vcmask 80960
    %76 = vst.msk [vmem:[#allocation0] sm:$0x1] %vm75, %v74
    %s77 = scalar_lea.vmem %s0, 3
    %v78 = vld [vmem:[%s77] sm:$0x1]
    %79 = vrot.lane.b32.xlu0 %v78, 6
    %v80 = vpop.permute.xlu0 %79
    %vm81 = vcmask 64560
    %82 = vst.msk [vmem:[#allocation0] sm:$0x1] %vm81, %v80
    %s83 = scalar_lea.vmem %s0, 2
    %v84 = vld [vmem:[%s83] sm:$0x1]
    %85 = vrot.lane.b32.xlu0 %v84, 4
    %v86 = vpop.permute.xlu0 %85
    %vm87 = vcmask 48160
    %88 = vst.msk [vmem:[#allocation0] sm:$0x1] %vm87, %v86
    %s89 = scalar_lea.vmem %s0, 1
    %v90 = vld [vmem:[%s89] sm:$0x1]
    %91 = vrot.lane.b32.xlu0 %v90, 2
    %v92 = vpop.permute.xlu0 %91
    %vm93 = vcmask 31760
    %94 = vst.msk [vmem:[#allocation0] sm:$0x1] %vm93, %v92
    %s96 = sshll.u32 1, 1
    %s97 = ssub.s32 %s96, 1
    %v99 = vld [vmem:[#allocation0] sm:%s97]
    %s100 = sshll.u32 1, 1
    %s101 = ssub.s32 %s100, 1
    %102 = vst [vmem:[%s1] sm:%s101] %v99

// kernel: cross_cond_trans_base_forward.1
$region0: #{cross_cond_trans_base_forward.1}
  #allocation0 [shape = 'u32[]', space=smem, size = 0x4, offset = 0x4, fixed_abs, tag = 'smem constant byte address 0x4 - core index']
  #allocation1 [shape = 'u32[144,128]{1,0:T(1,128)}', space=vmem, size = 0x12000, scoped, tag = 'internal scratch']
  %s0 = inlined_call_operand.vmem [shape: s32[32,1], index: 0, kind: input, shape index: {}]
  %s1 = inlined_call_operand.vmem [shape: f32[2,32], index: 1, kind: input, shape index: {}]
  %s2 = inlined_call_operand.vmem [shape: f32[136,32], index: 2, kind: input, shape index: {}]
  %s3 = inlined_call_operand.vmem [shape: f32[2,8,128], index: 3, kind: input, shape index: {}]
  %s4 = inlined_call_operand.vmem [shape: f32[2,32,288], index: 4, kind: input, shape index: {}]
  %s5 = inlined_call_operand.vmem [shape: f32[2,128,32], index: 5, kind: input, shape index: {}]
  %s6 = inlined_call_operand.vmem [shape: f32[32,32], index: 6, kind: output, shape index: {}]
  %s7 = sld [smem:[#allocation0]]
  $region34: #{cross_cond_trans_base_forward.1} parent=0
    _
  %s9 = ssub.s32 1, %s7
  %s10 = scalar_select 0, %s9, %s7
  // Predicated region
  $region2: #{cross_cond_trans_base_forward.1} parent=0 // pred_check
    _
  $region3: #{cross_cond_trans_base_forward.1} parent=0 // pred_check_branch
    %12 = sbr.rel (0) target = $region5
  $region4: #{cross_cond_trans_base_forward.1} parent=0 // pred_region
    _
  $region5: #{cross_cond_trans_base_forward.1} parent=0 // pred_fallthru
    _
  // Predicated region
  $region6: #{cross_cond_trans_base_forward.1} parent=0 // pred_check
    _
  $region7: #{cross_cond_trans_base_forward.1} parent=0 // pred_check_branch
    %14 = sbr.rel (0) target = $region9
  $region8: #{cross_cond_trans_base_forward.1} parent=0 // pred_region
    _
  $region9: #{cross_cond_trans_base_forward.1} parent=0 // pred_fallthru
    _
  // Predicated region
  $region10: #{cross_cond_trans_base_forward.1} parent=0 // pred_check
    _
  $region11: #{cross_cond_trans_base_forward.1} parent=0 // pred_check_branch
    %16 = sbr.rel (0) target = $region13
  $region12: #{cross_cond_trans_base_forward.1} parent=0 // pred_region
    _
  $region13: #{cross_cond_trans_base_forward.1} parent=0 // pred_fallthru
    _
  // Predicated region
  $region14: #{cross_cond_trans_base_forward.1} parent=0 // pred_check
    _
  $region15: #{cross_cond_trans_base_forward.1} parent=0 // pred_check_branch
    %18 = sbr.rel (0) target = $region17
  $region16: #{cross_cond_trans_base_forward.1} parent=0 // pred_region
    _
  $region17: #{cross_cond_trans_base_forward.1} parent=0 // pred_fallthru
    _
  // Predicated region
  $region18: #{cross_cond_trans_base_forward.1} parent=0 // pred_check
    _
  $region19: #{cross_cond_trans_base_forward.1} parent=0 // pred_check_branch
    %20 = sbr.rel (0) target = $region21
  $region20: #{cross_cond_trans_base_forward.1} parent=0 // pred_region
    _
  $region21: #{cross_cond_trans_base_forward.1} parent=0 // pred_fallthru
    _
  // Predicated region
  $region22: #{cross_cond_trans_base_forward.1} parent=0 // pred_check
    _
  $region23: #{cross_cond_trans_base_forward.1} parent=0 // pred_check_branch
    %22 = sbr.rel (0) target = $region25
  $region24: #{cross_cond_trans_base_forward.1} parent=0 // pred_region
    _
  $region25: #{cross_cond_trans_base_forward.1} parent=0 // pred_fallthru
    _
  %v23 = vlaneseq
  %v24 = vand.u32 %v23, 127
  %v25 = vld [vmem:[%s0] sm:$0xff]
  %v26 = vld [vmem:[%s0 + $0x8] sm:$0xff]
  %v27 = vld [vmem:[%s0 + $0x10] sm:$0xff]
  %v28 = vld [vmem:[%s0 + $0x18] sm:$0xff]
  %29 = vset.pattern.permute.xlu0 0
  %30 = vperm.xlu0 %29, %v25
  %v31 = vpop.permute.xlu0 %30
  %32 = vset.pattern.permute.xlu0 0
  %33 = vperm.xlu0 %32, %v26
  %v34 = vpop.permute.xlu0 %33
  %35 = vset.pattern.permute.xlu0 0
  %36 = vperm.xlu0 %35, %v27
  %v37 = vpop.permute.xlu0 %36
  %38 = vset.pattern.permute.xlu0 0
  %39 = vperm.xlu0 %38, %v28
  %v40 = vpop.permute.xlu0 %39
  %vm41 = vcmp.eq.s32.totalorder %v24, %v31
  %vm42 = vcmp.eq.s32.totalorder %v24, %v34
  %vm43 = vcmp.eq.s32.totalorder %v24, %v37
  %vm44 = vcmp.eq.s32.totalorder %v24, %v40
  %v45 = vsel %vm41, 1, 0
  %v46 = vsel %vm42, 1, 0
  %v47 = vsel %vm43, 1, 0
  %v48 = vsel %vm44, 1, 0
  %v49 = vcvt.s32.f32 %v45
  %v50 = vcvt.s32.f32 %v46
  %v51 = vcvt.s32.f32 %v47
  %v52 = vcvt.s32.f32 %v48
  %v53 = vld [vmem:[%s2] sm:$0xff]
  %v54 = vld [vmem:[%s2 + $0x8] sm:$0xff]
  %v55 = vld [vmem:[%s2 + $0x10] sm:$0xff]
  %v56 = vld [vmem:[%s2 + $0x18] sm:$0xff]
  %v57 = vld [vmem:[%s2 + $0x20] sm:$0xff]
  %v58 = vld [vmem:[%s2 + $0x28] sm:$0xff]
  %v59 = vld [vmem:[%s2 + $0x30] sm:$0xff]
  %v60 = vld [vmem:[%s2 + $0x38] sm:$0xff]
  %v61 = vld [vmem:[%s2 + $0x40] sm:$0xff]
  %v62 = vld [vmem:[%s1] sm:$0x3]
  %v63 = vld [vmem:[%s2 + $0x48] sm:$0xff]
  %v64 = vld [vmem:[%s2 + $0x50] sm:$0xff]
  %v65 = vld [vmem:[%s2 + $0x58] sm:$0xff]
  %v66 = vld [vmem:[%s2 + $0x60] sm:$0xff]
  %vm67 = vcmask 261120
  %v69 = vsel %vm67, %v62, 0
  %71 = vmatprep.subr.mxu0 0.0
  %72 = vmatpush1.msra.mxu0 0.0
  %73 = vmatprep.subr.mxu0 0.0
  %74 = vmatpush1.msra.mxu0 0.0
  %75 = vmatprep.subr.mxu0 0.0
  %76 = vmatpush1.msra.mxu0 0.0
  %77 = vmatprep.subr.mxu0 0.0
  %78 = vmatpush1.msra.mxu0 0.0
  %79 = vmatprep.subr.mxu0 0.0
  %80 = vmatpush1.msra.mxu0 0.0
  %81 = vmatprep.subr.mxu0 0.0
  %82 = vmatpush1.msra.mxu0 0.0
  %83 = vmatprep.subr.mxu0 0.0
  %84 = vmatpush1.msra.mxu0 0.0
  %85 = vmatprep.subr.mxu0 0.0
  %86 = vmatpush1.msra.mxu0 0.0
  %87 = vmatprep.subr.mxu0 0.0
  %88 = vmatpush1.msra.mxu0 0.0
  %89 = vmatprep.subr.mxu0 0.0
  %90 = vmatpush1.msra.mxu0 0.0
  %91 = vmatprep.subr.mxu0 0.0
  %92 = vmatpush1.msra.mxu0 0.0
  %93 = vmatprep.subr.mxu0 0.0
  %94 = vmatpush1.msra.mxu0 0.0
  %95 = vmatprep.subr.mxu0 0.0
  %96 = vmatpush1.msra.mxu0 %v66
  %97 = vmatprep.subr.mxu0 0.0
  %98 = vmatpush1.msra.mxu0 %v65
  %99 = vmatprep.subr.mxu0 0.0
  %100 = vmatpush1.msra.mxu0 %v64
  %101 = vmatprep.subr.mxu0 0.0
  %102 = vmatpush1.msra.mxu0 %v63
  %103 = vmatprep.subr.mxu0 0.0
  %104 = vmatpush2.msra.mxu0 0.0
  %105 = vmatprep.subr.mxu0 0.0
  %106 = vmatpush2.msra.mxu0 0.0
  %107 = vmatprep.subr.mxu0 0.0
  %108 = vmatpush2.msra.mxu0 0.0
  %109 = vmatprep.subr.mxu0 0.0
  %110 = vmatpush2.msra.mxu0 0.0
  %111 = vmatprep.subr.mxu0 0.0
  %112 = vmatpush2.msra.mxu0 0.0
  %113 = vmatprep.subr.mxu0 0.0
  %114 = vmatpush2.msra.mxu0 0.0
  %115 = vmatprep.subr.mxu0 0.0
  %116 = vmatpush2.msra.mxu0 0.0
  %117 = vmatprep.subr.mxu0 0.0
  %118 = vmatpush2.msra.mxu0 0.0
  %119 = vmatprep.subr.mxu0 0.0
  %120 = vmatpush2.msra.mxu0 0.0
  %121 = vmatprep.subr.mxu0 0.0
  %122 = vmatpush2.msra.mxu0 0.0
  %123 = vmatprep.subr.mxu0 0.0
  %124 = vmatpush2.msra.mxu0 0.0
  %125 = vmatprep.subr.mxu0 0.0
  %126 = vmatpush2.msra.mxu0 0.0
  %127 = vmatprep.subr.mxu0 0.0
  %128 = vmatpush2.msra.mxu0 0.0
  %129 = vmatprep.subr.mxu0 0.0
  %130 = vmatpush2.msra.mxu0 0.0
  %131 = vmatprep.subr.mxu0 0.0
  %132 = vmatpush2.msra.mxu0 0.0
  %133 = vmatprep.subr.mxu0 0.0
  %134 = vmatpush2.msra.mxu0 0.0
  %135 = vmatprep.mubr.f32.mxu0 0.0
  %136 = vmatmul.mubr.f32.gmra.mxu0 %v69
  %v137 = vpop.f32.mrf.mxu0
  %v138 = vadd.f32 0.0, %v137
  %v139 = vpop.f32.mrf.mxu0
  %140 = vdwg.mxu0
  %v141 = vlaneseq
  %v142 = vshrl.u32 %v141, 7
  %v143 = vadd.s32 %v142, 8
  %v144 = vadd.s32 %v142, 16
  %v145 = vadd.s32 %v142, 24
  %v146 = vmul.u32 %v24, 16
  %vm147 = vcmp.eq.s32.totalorder %v142, %v146
  %vm148 = vcmp.eq.s32.totalorder %v143, %v146
  %vm149 = vcmp.eq.s32.totalorder %v144, %v146
  %vm150 = vcmp.eq.s32.totalorder %v145, %v146
  %v151 = vsel %vm147, 1, 0
  %v152 = vsel %vm148, 1, 0
  %v153 = vsel %vm149, 1, 0
  %v154 = vsel %vm150, 1, 0
  %v155 = vcvt.s32.f32 %v151
  %v156 = vcvt.s32.f32 %v152
  %v157 = vcvt.s32.f32 %v153
  %v158 = vcvt.s32.f32 %v154
  %vm159 = vcmask 15360
  %v161 = vsel %vm159, %v155, 0
  %v164 = vsel %vm159, %v156, 0
  %v167 = vsel %vm159, %v157, 0
  %v170 = vsel %vm159, %v158, 0
  %vm172 = vcmask 1041408
  %v174 = vsel %vm172, %v138, 0
  %176 = vmatprep.subr.mxu0 0.0
  %177 = vmatpush1.msra.mxu0 0.0
  %178 = vmatprep.subr.mxu0 0.0
  %179 = vmatpush1.msra.mxu0 0.0
  %180 = vmatprep.subr.mxu0 0.0
  %181 = vmatpush1.msra.mxu0 0.0
  %182 = vmatprep.subr.mxu0 0.0
  %183 = vmatpush1.msra.mxu0 0.0
  %184 = vmatprep.subr.mxu0 0.0
  %185 = vmatpush1.msra.mxu0 0.0
  %186 = vmatprep.subr.mxu0 0.0
  %187 = vmatpush1.msra.mxu0 0.0
  %188 = vmatprep.subr.mxu0 0.0
  %189 = vmatpush1.msra.mxu0 0.0
  %190 = vmatprep.subr.mxu0 0.0
  %191 = vmatpush1.msra.mxu0 0.0
  %192 = vmatprep.subr.mxu0 0.0
  %193 = vmatpush1.msra.mxu0 0.0
  %194 = vmatprep.subr.mxu0 0.0
  %195 = vmatpush1.msra.mxu0 0.0
  %196 = vmatprep.subr.mxu0 0.0
  %197 = vmatpush1.msra.mxu0 0.0
  %198 = vmatprep.subr.mxu0 0.0
  %199 = vmatpush1.msra.mxu0 0.0
  %200 = vmatprep.subr.mxu0 0.0
  %201 = vmatpush1.msra.mxu0 0.0
  %202 = vmatprep.subr.mxu0 0.0
  %203 = vmatpush1.msra.mxu0 0.0
  %204 = vmatprep.subr.mxu0 0.0
  %205 = vmatpush1.msra.mxu0 0.0
  %206 = vmatprep.subr.mxu0 0.0
  %207 = vmatpush1.msra.mxu0 %v174
  %208 = vmatprep.subr.mxu0 0.0
  %209 = vmatpush2.msra.mxu0 0.0
  %210 = vmatprep.subr.mxu0 0.0
  %211 = vmatpush2.msra.mxu0 0.0
  %212 = vmatprep.subr.mxu0 0.0
  %213 = vmatpush2.msra.mxu0 0.0
  %214 = vmatprep.subr.mxu0 0.0
  %215 = vmatpush2.msra.mxu0 0.0
  %216 = vmatprep.subr.mxu0 0.0
  %217 = vmatpush2.msra.mxu0 0.0
  %218 = vmatprep.subr.mxu0 0.0
  %219 = vmatpush2.msra.mxu0 0.0
  %220 = vmatprep.subr.mxu0 0.0
  %221 = vmatpush2.msra.mxu0 0.0
  %222 = vmatprep.subr.mxu0 0.0
  %223 = vmatpush2.msra.mxu0 0.0
  %224 = vmatprep.subr.mxu0 0.0
  %225 = vmatpush2.msra.mxu0 0.0
  %226 = vmatprep.subr.mxu0 0.0
  %227 = vmatpush2.msra.mxu0 0.0
  %228 = vmatprep.subr.mxu0 0.0
  %229 = vmatpush2.msra.mxu0 0.0
  %230 = vmatprep.subr.mxu0 0.0
  %231 = vmatpush2.msra.mxu0 0.0
  %232 = vmatprep.subr.mxu0 0.0
  %233 = vmatpush2.msra.mxu0 0.0
  %234 = vmatprep.subr.mxu0 0.0
  %235 = vmatpush2.msra.mxu0 0.0
  %236 = vmatprep.subr.mxu0 0.0
  %237 = vmatpush2.msra.mxu0 0.0
  %238 = vmatprep.subr.mxu0 0.0
  %239 = vmatpush2.msra.mxu0 0.0
  %240 = vmatprep.mubr.f32.mxu0 0.0
  %241 = vmatmul.mubr.f32.gmra.mxu0 %v161
  %v242 = vpop.f32.mrf.mxu0
  %v243 = vadd.f32 0.0, %v242
  %v244 = vpop.f32.mrf.mxu0
  %245 = vmatprep.mubr.f32.mxu0 0.0
  %246 = vmatmul.mubr.f32.gmra.mxu0 %v164
  %v247 = vpop.f32.mrf.mxu0
  %v248 = vadd.f32 0.0, %v247
  %v249 = vpop.f32.mrf.mxu0
  %250 = vmatprep.mubr.f32.mxu0 0.0
  %251 = vmatmul.mubr.f32.gmra.mxu0 %v167
  %v252 = vpop.f32.mrf.mxu0
  %v253 = vadd.f32 0.0, %v252
  %v254 = vpop.f32.mrf.mxu0
  %255 = vmatprep.mubr.f32.mxu0 0.0
  %256 = vmatmul.mubr.f32.gmra.mxu0 %v170
  %v257 = vpop.f32.mrf.mxu0
  %v258 = vadd.f32 0.0, %v257
  %v259 = vpop.f32.mrf.mxu0
  %260 = vdwg.mxu0
  %vm261 = vcmask 588800
  %v263 = vsel %vm261, %v49, 0
  %v266 = vsel %vm261, %v50, 0
  %v269 = vsel %vm261, %v51, 0
  %v272 = vsel %vm261, %v52, 0
  %274 = vmatprep.subr.mxu0 0.0
  %275 = vmatpush1.msra.mxu0 0.0
  %276 = vmatprep.subr.mxu0 0.0
  %277 = vmatpush1.msra.mxu0 0.0
  %278 = vmatprep.subr.mxu0 0.0
  %279 = vmatpush1.msra.mxu0 0.0
  %280 = vmatprep.subr.mxu0 0.0
  %281 = vmatpush1.msra.mxu0 0.0
  %282 = vmatprep.subr.mxu0 0.0
  %283 = vmatpush1.msra.mxu0 0.0
  %284 = vmatprep.subr.mxu0 0.0
  %285 = vmatpush1.msra.mxu0 0.0
  %286 = vmatprep.subr.mxu0 0.0
  %287 = vmatpush1.msra.mxu0 0.0
  %288 = vmatprep.subr.mxu0 0.0
  %289 = vmatpush1.msra.mxu0 %v61
  %290 = vmatprep.subr.mxu0 0.0
  %291 = vmatpush1.msra.mxu0 %v60
  %292 = vmatprep.subr.mxu0 0.0
  %293 = vmatpush1.msra.mxu0 %v59
  %294 = vmatprep.subr.mxu0 0.0
  %295 = vmatpush1.msra.mxu0 %v58
  %296 = vmatprep.subr.mxu0 0.0
  %297 = vmatpush1.msra.mxu0 %v57
  %298 = vmatprep.subr.mxu0 0.0
  %299 = vmatpush1.msra.mxu0 %v56
  %300 = vmatprep.subr.mxu0 0.0
  %301 = vmatpush1.msra.mxu0 %v55
  %302 = vmatprep.subr.mxu0 0.0
  %303 = vmatpush1.msra.mxu0 %v54
  %304 = vmatprep.subr.mxu0 0.0
  %305 = vmatpush1.msra.mxu0 %v53
  %306 = vmatprep.subr.mxu0 0.0
  %307 = vmatpush2.msra.mxu0 0.0
  %308 = vmatprep.subr.mxu0 0.0
  %309 = vmatpush2.msra.mxu0 0.0
  %310 = vmatprep.subr.mxu0 0.0
  %311 = vmatpush2.msra.mxu0 0.0
  %312 = vmatprep.subr.mxu0 0.0
  %313 = vmatpush2.msra.mxu0 0.0
  %314 = vmatprep.subr.mxu0 0.0
  %315 = vmatpush2.msra.mxu0 0.0
  %316 = vmatprep.subr.mxu0 0.0
  %317 = vmatpush2.msra.mxu0 0.0
  %318 = vmatprep.subr.mxu0 0.0
  %319 = vmatpush2.msra.mxu0 0.0
  %320 = vmatprep.subr.mxu0 0.0
  %321 = vmatpush2.msra.mxu0 0.0
  %322 = vmatprep.subr.mxu0 0.0
  %323 = vmatpush2.msra.mxu0 0.0
  %324 = vmatprep.subr.mxu0 0.0
  %325 = vmatpush2.msra.mxu0 0.0
  %326 = vmatprep.subr.mxu0 0.0
  %327 = vmatpush2.msra.mxu0 0.0
  %328 = vmatprep.subr.mxu0 0.0
  %329 = vmatpush2.msra.mxu0 0.0
  %330 = vmatprep.subr.mxu0 0.0
  %331 = vmatpush2.msra.mxu0 0.0
  %332 = vmatprep.subr.mxu0 0.0
  %333 = vmatpush2.msra.mxu0 0.0
  %334 = vmatprep.subr.mxu0 0.0
  %335 = vmatpush2.msra.mxu0 0.0
  %336 = vmatprep.subr.mxu0 0.0
  %337 = vmatpush2.msra.mxu0 0.0
  %338 = vmatprep.mubr.f32.mxu0 0.0
  %339 = vmatmul.mubr.f32.gmra.mxu0 %v263
  %v340 = vpop.f32.mrf.mxu0
  %v341 = vadd.f32 %v243, %v340
  %v342 = vpop.f32.mrf.mxu0
  %343 = vmatprep.mubr.f32.mxu0 0.0
  %344 = vmatmul.mubr.f32.gmra.mxu0 %v266
  %v345 = vpop.f32.mrf.mxu0
  %v346 = vadd.f32 %v248, %v345
  %v347 = vpop.f32.mrf.mxu0
  %348 = vmatprep.mubr.f32.mxu0 0.0
  %349 = vmatmul.mubr.f32.gmra.mxu0 %v269
  %v350 = vpop.f32.mrf.mxu0
  %v351 = vadd.f32 %v253, %v350
  %v352 = vpop.f32.mrf.mxu0
  %353 = vmatprep.mubr.f32.mxu0 0.0
  %354 = vmatmul.mubr.f32.gmra.mxu0 %v272
  %v355 = vpop.f32.mrf.mxu0
  %v356 = vadd.f32 %v258, %v355
  %v357 = vpop.f32.mrf.mxu0
  %358 = vdwg.mxu0
  %v359 = vld [vmem:[%s2 + $0x68] sm:$0xff]
  %v360 = vld [vmem:[%s2 + $0x70] sm:$0xff]
  %v361 = vld [vmem:[%s2 + $0x78] sm:$0xff]
  %v362 = vld [vmem:[%s2 + $0x80] sm:$0xff]
  %v363 = vadd.f32 %v341, %v359
  %v364 = vadd.f32 %v346, %v360
  %v365 = vadd.f32 %v351, %v361
  %v366 = vadd.f32 %v356, %v362
  %v367 = vshra.s32 %v142, 4
  %v368 = vshra.s32 %v143, 4
  %v369 = vshra.s32 %v144, 4
  %v370 = vshra.s32 %v145, 4
  %v371 = vshra.s32 %v24, 4
  %vm372 = vcmp.eq.s32.totalorder %v367, %v371
  %vm373 = vcmp.eq.s32.totalorder %v368, %v371
  %vm374 = vcmp.eq.s32.totalorder %v369, %v371
  %vm375 = vcmp.eq.s32.totalorder %v370, %v371
  %v376 = vand.u32 %v24, 15
  %v377 = vand.u32 %v142, 15
  %v378 = vand.u32 %v143, 15
  %v379 = vand.u32 %v144, 15
  %v380 = vand.u32 %v145, 15
  %vm381 = vcmp.le.s32.totalorder %v376, %v377
  %vm382 = vcmp.le.s32.totalorder %v376, %v378
  %vm383 = vcmp.le.s32.totalorder %v376, %v379
  %vm384 = vcmp.le.s32.totalorder %v376, %v380
  %vm385 = vmand %vm372, %vm381
  %vm386 = vmand %vm373, %vm382
  %vm387 = vmand %vm374, %vm383
  %vm388 = vmand %vm375, %vm384
  %v389 = vld [vmem:[%s3] sm:$0xff]
  %v390 = vld [vmem:[%s4] sm:$0xff]
  %v391 = vld [vmem:[%s4 + $0x8] sm:$0xff]
  %v392 = vld [vmem:[%s4 + $0x10] sm:$0xff]
  %v393 = vld [vmem:[%s4 + $0x18] sm:$0xff]
  %v394 = vld [vmem:[%s4 + $0x20] sm:$0xff]
  %v395 = vld [vmem:[%s4 + $0x28] sm:$0xff]
  %v396 = vld [vmem:[%s4 + $0x30] sm:$0xff]
  %v397 = vld [vmem:[%s4 + $0x38] sm:$0xff]
  %v398 = vld [vmem:[%s4 + $0x40] sm:$0xff]
  %v399 = vld [vmem:[%s4 + $0x48] sm:$0xff]
  %v400 = vld [vmem:[%s4 + $0x50] sm:$0xff]
  %v401 = vld [vmem:[%s4 + $0x58] sm:$0xff]
  %v402 = vld [vmem:[%s5] sm:$0xff]
  %v403 = vld [vmem:[%s5 + $0x8] sm:$0xff]
  %v404 = vld [vmem:[%s5 + $0x10] sm:$0xff]
  %v405 = vld [vmem:[%s5 + $0x18] sm:$0xff]
  %v406 = vld [vmem:[%s5 + $0x20] sm:$0xff]
  %v407 = vld [vmem:[%s5 + $0x28] sm:$0xff]
  %v408 = vld [vmem:[%s5 + $0x30] sm:$0xff]
  %v409 = vld [vmem:[%s5 + $0x38] sm:$0xff]
  %v410 = vld [vmem:[%s5 + $0x40] sm:$0xff]
  %v411 = vld [vmem:[%s5 + $0x48] sm:$0xff]
  %v412 = vld [vmem:[%s5 + $0x50] sm:$0xff]
  %v413 = vld [vmem:[%s5 + $0x58] sm:$0xff]
  %v414 = vld [vmem:[%s5 + $0x60] sm:$0xff]
  %v415 = vld [vmem:[%s5 + $0x68] sm:$0xff]
  %v416 = vld [vmem:[%s5 + $0x70] sm:$0xff]
  %v417 = vld [vmem:[%s5 + $0x78] sm:$0xff]
  %v418 = vsel %vm67, %v363, 0.0
  %419 = vadd.xlane.f32.xlu0 %v418
  %v420 = vpop.xlane.xlu0 %419
  %v421 = vsel %vm67, %v364, 0.0
  %422 = vadd.xlane.f32.xlu0 %v421
  %v423 = vpop.xlane.xlu0 %422
  %v424 = vsel %vm67, %v365, 0.0
  %425 = vadd.xlane.f32.xlu0 %v424
  %v426 = vpop.xlane.xlu0 %425
  %v427 = vsel %vm67, %v366, 0.0
  %428 = vadd.xlane.f32.xlu0 %v427
  %v429 = vpop.xlane.xlu0 %428
  %v430 = vrcp.pop 32.0
  %v431 = vmul.f32 %v420, %v430
  %v432 = vmul.f32 %v423, %v430
  %v433 = vmul.f32 %v426, %v430
  %v434 = vmul.f32 %v429, %v430
  %v435 = vsub.f32 %v363, %v431
  %v436 = vsub.f32 %v364, %v432
  %v437 = vsub.f32 %v365, %v433
  %v438 = vsub.f32 %v366, %v434
  %v439 = vmul.f32 %v435, %v435
  %v440 = vmul.f32 %v436, %v436
  %v441 = vmul.f32 %v437, %v437
  %v442 = vmul.f32 %v438, %v438
  %v443 = vsel %vm67, %v439, 0.0
  %444 = vadd.xlane.f32.xlu0 %v443
  %v445 = vpop.xlane.xlu0 %444
  %v446 = vsel %vm67, %v440, 0.0
  %447 = vadd.xlane.f32.xlu0 %v446
  %v448 = vpop.xlane.xlu0 %447
  %v449 = vsel %vm67, %v441, 0.0
  %450 = vadd.xlane.f32.xlu0 %v449
  %v451 = vpop.xlane.xlu0 %450
  %v452 = vsel %vm67, %v442, 0.0
  %453 = vadd.xlane.f32.xlu0 %v452
  %v454 = vpop.xlane.xlu0 %453
  %v455 = vmul.f32 %v445, %v430
  %v456 = vmul.f32 %v448, %v430
  %v457 = vmul.f32 %v451, %v430
  %v458 = vmul.f32 %v454, %v430
  %v459 = vadd.f32 %v455, 1e-05
  %v460 = vadd.f32 %v456, 1e-05
  %v461 = vadd.f32 %v457, 1e-05
  %v462 = vadd.f32 %v458, 1e-05
  %v463 = vrsqrt.pop %v459
  %v464 = vmul.f32 %v459, %v463
  %vm465 = vcmp.eq.f32.partialorder %v459, inf
  %v466 = vsel %vm465, %v459, %v464
  %vm467 = vcmp.eq.f32.partialorder %v459, 0.0
  %v468 = vand.u32 %v459, 2147483648
  %v469 = vsel %vm467, %v468, %v466
  %v470 = vrsqrt.pop %v460
  %v471 = vmul.f32 %v460, %v470
  %vm472 = vcmp.eq.f32.partialorder %v460, inf
  %v473 = vsel %vm472, %v460, %v471
  %vm474 = vcmp.eq.f32.partialorder %v460, 0.0
  %v475 = vand.u32 %v460, 2147483648
  %v476 = vsel %vm474, %v475, %v473
  %v477 = vrsqrt.pop %v461
  %v478 = vmul.f32 %v461, %v477
  %vm479 = vcmp.eq.f32.partialorder %v461, inf
  %v480 = vsel %vm479, %v461, %v478
  %vm481 = vcmp.eq.f32.partialorder %v461, 0.0
  %v482 = vand.u32 %v461, 2147483648
  %v483 = vsel %vm481, %v482, %v480
  %v484 = vrsqrt.pop %v462
  %v485 = vmul.f32 %v462, %v484
  %vm486 = vcmp.eq.f32.partialorder %v462, inf
  %v487 = vsel %vm486, %v462, %v485
  %vm488 = vcmp.eq.f32.partialorder %v462, 0.0
  %v489 = vand.u32 %v462, 2147483648
  %v490 = vsel %vm488, %v489, %v487
  %v491 = vrcp.pop %v469
  %v492 = vmul.f32 %v435, %v491
  %v493 = vrcp.pop %v476
  %v494 = vmul.f32 %v436, %v493
  %v495 = vrcp.pop %v483
  %v496 = vmul.f32 %v437, %v495
  %v497 = vrcp.pop %v490
  %v498 = vmul.f32 %v438, %v497
  %v499 = vlaneseq
  %v500 = vshrl.u32 %v499, 7
  %v501 = vsub.s32 0, %v500
  %v502 = vrot.slane %v389, %v501
  %v503 = vmul.f32 %v492, %v502
  %v504 = vmul.f32 %v494, %v502
  %v505 = vmul.f32 %v496, %v502
  %v506 = vmul.f32 %v498, %v502
  %v507 = vlaneseq
  %v508 = vshrl.u32 %v507, 7
  %v509 = vsub.s32 1, %v508
  %v510 = vrot.slane %v389, %v509
  %v511 = vadd.f32 %v503, %v510
  %v512 = vadd.f32 %v504, %v510
  %v513 = vadd.f32 %v505, %v510
  %v514 = vadd.f32 %v506, %v510
  %v515 = vlaneseq
  %v516 = vshrl.u32 %v515, 7
  %v517 = vsub.s32 4, %v516
  %v518 = vrot.slane %v389, %v517
  %v520 = vsel %vm67, %v511, 0
  %v523 = vsel %vm67, %v512, 0
  %v526 = vsel %vm67, %v513, 0
  %v529 = vsel %vm67, %v514, 0
  %531 = vmatprep.subr.mxu0 0.0
  %532 = vmatpush1.msra.mxu0 0.0
  %533 = vmatprep.subr.mxu0 0.0
  %534 = vmatpush1.msra.mxu0 0.0
  %535 = vmatprep.subr.mxu0 0.0
  %536 = vmatpush1.msra.mxu0 0.0
  %537 = vmatprep.subr.mxu0 0.0
  %538 = vmatpush1.msra.mxu0 0.0
  %539 = vmatprep.subr.mxu0 0.0
  %540 = vmatpush1.msra.mxu0 0.0
  %541 = vmatprep.subr.mxu0 0.0
  %542 = vmatpush1.msra.mxu0 0.0
  %543 = vmatprep.subr.mxu0 0.0
  %544 = vmatpush1.msra.mxu0 0.0
  %545 = vmatprep.subr.mxu0 0.0
  %546 = vmatpush1.msra.mxu0 0.0
  %547 = vmatprep.subr.mxu0 0.0
  %548 = vmatpush1.msra.mxu0 0.0
  %549 = vmatprep.subr.mxu0 0.0
  %550 = vmatpush1.msra.mxu0 0.0
  %551 = vmatprep.subr.mxu0 0.0
  %552 = vmatpush1.msra.mxu0 0.0
  %553 = vmatprep.subr.mxu0 0.0
  %554 = vmatpush1.msra.mxu0 0.0
  %555 = vmatprep.subr.mxu0 0.0
  %556 = vmatpush1.msra.mxu0 %v399
  %557 = vmatprep.subr.mxu0 0.0
  %558 = vmatpush1.msra.mxu0 %v396
  %559 = vmatprep.subr.mxu0 0.0
  %560 = vmatpush1.msra.mxu0 %v393
  %561 = vmatprep.subr.mxu0 0.0
  %562 = vmatpush1.msra.mxu0 %v390
  %563 = vmatprep.subr.mxu0 0.0
  %564 = vmatpush2.msra.mxu0 0.0
  %565 = vmatprep.subr.mxu0 0.0
  %566 = vmatpush2.msra.mxu0 0.0
  %567 = vmatprep.subr.mxu0 0.0
  %568 = vmatpush2.msra.mxu0 0.0
  %569 = vmatprep.subr.mxu0 0.0
  %570 = vmatpush2.msra.mxu0 0.0
  %571 = vmatprep.subr.mxu0 0.0
  %572 = vmatpush2.msra.mxu0 0.0
  %573 = vmatprep.subr.mxu0 0.0
  %574 = vmatpush2.msra.mxu0 0.0
  %575 = vmatprep.subr.mxu0 0.0
  %576 = vmatpush2.msra.mxu0 0.0
  %577 = vmatprep.subr.mxu0 0.0
  %578 = vmatpush2.msra.mxu0 0.0
  %579 = vmatprep.subr.mxu0 0.0
  %580 = vmatpush2.msra.mxu0 0.0
  %581 = vmatprep.subr.mxu0 0.0
  %582 = vmatpush2.msra.mxu0 0.0
  %583 = vmatprep.subr.mxu0 0.0
  %584 = vmatpush2.msra.mxu0 0.0
  %585 = vmatprep.subr.mxu0 0.0
  %586 = vmatpush2.msra.mxu0 0.0
  %587 = vmatprep.subr.mxu0 0.0
  %588 = vmatpush2.msra.mxu0 0.0
  %589 = vmatprep.subr.mxu0 0.0
  %590 = vmatpush2.msra.mxu0 0.0
  %591 = vmatprep.subr.mxu0 0.0
  %592 = vmatpush2.msra.mxu0 0.0
  %593 = vmatprep.subr.mxu0 0.0
  %594 = vmatpush2.msra.mxu0 0.0
  %595 = vmatprep.mubr.f32.mxu0 0.0
  %596 = vmatmul.mubr.f32.gmra.mxu0 %v520
  %v597 = vpop.f32.mrf.mxu0
  %v598 = vadd.f32 %v518, %v597
  %v599 = vpop.f32.mrf.mxu0
  %600 = vmatprep.mubr.f32.mxu0 0.0
  %601 = vmatmul.mubr.f32.gmra.mxu0 %v523
  %v602 = vpop.f32.mrf.mxu0
  %v603 = vadd.f32 %v518, %v602
  %v604 = vpop.f32.mrf.mxu0
  %605 = vmatprep.mubr.f32.mxu0 0.0
  %606 = vmatmul.mubr.f32.gmra.mxu0 %v526
  %v607 = vpop.f32.mrf.mxu0
  %v608 = vadd.f32 %v518, %v607
  %v609 = vpop.f32.mrf.mxu0
  %610 = vmatprep.mubr.f32.mxu0 0.0
  %611 = vmatmul.mubr.f32.gmra.mxu0 %v529
  %v612 = vpop.f32.mrf.mxu0
  %v613 = vadd.f32 %v518, %v612
  %v614 = vpop.f32.mrf.mxu0
  %615 = vdwg.mxu0
  %v616 = vmul.f32 %v598, 0.35355338
  %v617 = vmul.f32 %v603, 0.35355338
  %v618 = vmul.f32 %v608, 0.35355338
  %v619 = vmul.f32 %v613, 0.35355338
  %624 = vrot.lane.b32.xlu0 %v598, 96
  %v625 = vpop.permute.xlu0 %624
  %626 = vrot.lane.b32.xlu0 %v603, 96
  %v627 = vpop.permute.xlu0 %626
  %628 = vrot.lane.b32.xlu0 %v608, 96
  %v629 = vpop.permute.xlu0 %628
  %630 = vrot.lane.b32.xlu0 %v613, 96
  %v631 = vpop.permute.xlu0 %630
  %vm632 = vcmask 64512
  %v634 = vsel %vm632, %v616, 0
  %v637 = vsel %vm632, %v617, 0
  %v640 = vsel %vm632, %v618, 0
  %v643 = vsel %vm632, %v619, 0
  %v645 = vsel %vm632, %v625, 0
  %v647 = vsel %vm632, %v627, 0
  %v649 = vsel %vm632, %v629, 0
  %v651 = vsel %vm632, %v631, 0
  %653 = vmatprep.subr.mxu0 0.0
  %654 = vmatpush1.xpose.msra.mxu0 0.0
  %655 = vmatprep.subr.mxu0 0.0
  %656 = vmatpush1.xpose.msra.mxu0 0.0
  %657 = vmatprep.subr.mxu0 0.0
  %658 = vmatpush1.xpose.msra.mxu0 0.0
  %659 = vmatprep.subr.mxu0 0.0
  %660 = vmatpush1.xpose.msra.mxu0 0.0
  %661 = vmatprep.subr.mxu0 0.0
  %662 = vmatpush1.xpose.msra.mxu0 0.0
  %663 = vmatprep.subr.mxu0 0.0
  %664 = vmatpush1.xpose.msra.mxu0 0.0
  %665 = vmatprep.subr.mxu0 0.0
  %666 = vmatpush1.xpose.msra.mxu0 0.0
  %667 = vmatprep.subr.mxu0 0.0
  %668 = vmatpush1.xpose.msra.mxu0 0.0
  %669 = vmatprep.subr.mxu0 0.0
  %670 = vmatpush1.xpose.msra.mxu0 0.0
  %671 = vmatprep.subr.mxu0 0.0
  %672 = vmatpush1.xpose.msra.mxu0 0.0
  %673 = vmatprep.subr.mxu0 0.0
  %674 = vmatpush1.xpose.msra.mxu0 0.0
  %675 = vmatprep.subr.mxu0 0.0
  %676 = vmatpush1.xpose.msra.mxu0 0.0
  %677 = vmatprep.subr.mxu0 0.0
  %678 = vmatpush1.xpose.msra.mxu0 %v651
  %679 = vmatprep.subr.mxu0 0.0
  %680 = vmatpush1.xpose.msra.mxu0 %v649
  %681 = vmatprep.subr.mxu0 0.0
  %682 = vmatpush1.xpose.msra.mxu0 %v647
  %683 = vmatprep.subr.mxu0 0.0
  %684 = vmatpush1.xpose.msra.mxu0 %v645
  %685 = vmatprep.subr.mxu0 0.0
  %686 = vmatpush2.xpose.msra.mxu0 0.0
  %687 = vmatprep.subr.mxu0 0.0
  %688 = vmatpush2.xpose.msra.mxu0 0.0
  %689 = vmatprep.subr.mxu0 0.0
  %690 = vmatpush2.xpose.msra.mxu0 0.0
  %691 = vmatprep.subr.mxu0 0.0
  %692 = vmatpush2.xpose.msra.mxu0 0.0
  %693 = vmatprep.subr.mxu0 0.0
  %694 = vmatpush2.xpose.msra.mxu0 0.0
  %695 = vmatprep.subr.mxu0 0.0
  %696 = vmatpush2.xpose.msra.mxu0 0.0
  %697 = vmatprep.subr.mxu0 0.0
  %698 = vmatpush2.xpose.msra.mxu0 0.0
  %699 = vmatprep.subr.mxu0 0.0
  %700 = vmatpush2.xpose.msra.mxu0 0.0
  %701 = vmatprep.subr.mxu0 0.0
  %702 = vmatpush2.xpose.msra.mxu0 0.0
  %703 = vmatprep.subr.mxu0 0.0
  %704 = vmatpush2.xpose.msra.mxu0 0.0
  %705 = vmatprep.subr.mxu0 0.0
  %706 = vmatpush2.xpose.msra.mxu0 0.0
  %707 = vmatprep.subr.mxu0 0.0
  %708 = vmatpush2.xpose.msra.mxu0 0.0
  %709 = vmatprep.subr.mxu0 0.0
  %710 = vmatpush2.xpose.msra.mxu0 0.0
  %711 = vmatprep.subr.mxu0 0.0
  %712 = vmatpush2.xpose.msra.mxu0 0.0
  %713 = vmatprep.subr.mxu0 0.0
  %714 = vmatpush2.xpose.msra.mxu0 0.0
  %715 = vmatprep.subr.mxu0 0.0
  %716 = vmatpush2.xpose.msra.mxu0 0.0
  %717 = vmatprep.mubr.f32.mxu0 0.0
  %718 = vmatmul.mubr.f32.gmra.mxu0 %v634
  %v719 = vpop.f32.mrf.mxu0
  %v720 = vadd.f32 0.0, %v719
  %v721 = vpop.f32.mrf.mxu0
  %722 = vmatprep.mubr.f32.mxu0 0.0
  %723 = vmatmul.mubr.f32.gmra.mxu0 %v637
  %v724 = vpop.f32.mrf.mxu0
  %v725 = vadd.f32 0.0, %v724
  %v726 = vpop.f32.mrf.mxu0
  %727 = vmatprep.mubr.f32.mxu0 0.0
  %728 = vmatmul.mubr.f32.gmra.mxu0 %v640
  %v729 = vpop.f32.mrf.mxu0
  %v730 = vadd.f32 0.0, %v729
  %v731 = vpop.f32.mrf.mxu0
  %732 = vmatprep.mubr.f32.mxu0 0.0
  %733 = vmatmul.mubr.f32.gmra.mxu0 %v643
  %v734 = vpop.f32.mrf.mxu0
  %v735 = vadd.f32 0.0, %v734
  %v736 = vpop.f32.mrf.mxu0
  %737 = vdwg.mxu0
  %v738 = vsel %vm385, %v720, -1e+30
  %v739 = vsel %vm386, %v725, -1e+30
  %v740 = vsel %vm387, %v730, -1e+30
  %v741 = vsel %vm388, %v735, -1e+30
  %v742 = vsel %vm67, %v738, -inf
  %743 = vmax.xlane.f32.xlu0 %v742
  %v744 = vpop.xlane.xlu0 %743
  %v745 = vsel %vm67, %v739, -inf
  %746 = vmax.xlane.f32.xlu0 %v745
  %v747 = vpop.xlane.xlu0 %746
  %v748 = vsel %vm67, %v740, -inf
  %749 = vmax.xlane.f32.xlu0 %v748
  %v750 = vpop.xlane.xlu0 %749
  %v751 = vsel %vm67, %v741, -inf
  %752 = vmax.xlane.f32.xlu0 %v751
  %v753 = vpop.xlane.xlu0 %752
  %v754 = vsub.f32 %v738, %v744
  %v755 = vsub.f32 %v739, %v747
  %v756 = vsub.f32 %v740, %v750
  %v757 = vsub.f32 %v741, %v753
  %v758 = vmul.f32 %v754, 1.442695
  %v759 = vpow.pop %v758
  %v760 = vmul.f32 %v755, 1.442695
  %v761 = vpow.pop %v760
  %v762 = vmul.f32 %v756, 1.442695
  %v763 = vpow.pop %v762
  %v764 = vmul.f32 %v757, 1.442695
  %v765 = vpow.pop %v764
  %v766 = vsel %vm67, %v759, 0.0
  %767 = vadd.xlane.f32.xlu0 %v766
  %v768 = vpop.xlane.xlu0 %767
  %v769 = vsel %vm67, %v761, 0.0
  %770 = vadd.xlane.f32.xlu0 %v769
  %v771 = vpop.xlane.xlu0 %770
  %v772 = vsel %vm67, %v763, 0.0
  %773 = vadd.xlane.f32.xlu0 %v772
  %v774 = vpop.xlane.xlu0 %773
  %v775 = vsel %vm67, %v765, 0.0
  %776 = vadd.xlane.f32.xlu0 %v775
  %v777 = vpop.xlane.xlu0 %776
  %v778 = vrcp.pop %v768
  %v779 = vmul.f32 %v759, %v778
  %v780 = vrcp.pop %v771
  %v781 = vmul.f32 %v761, %v780
  %v782 = vrcp.pop %v774
  %v783 = vmul.f32 %v763, %v782
  %v784 = vrcp.pop %v777
  %v785 = vmul.f32 %v765, %v784
  %786 = vrot.lane.b32.xlu0 %v598, 64
  %v787 = vpop.permute.xlu0 %786
  %788 = vrot.lane.b32.xlu0 %v603, 64
  %v789 = vpop.permute.xlu0 %788
  %790 = vrot.lane.b32.xlu0 %v608, 64
  %v791 = vpop.permute.xlu0 %790
  %792 = vrot.lane.b32.xlu0 %v613, 64
  %v793 = vpop.permute.xlu0 %792
  %v799 = vsel %vm67, %v779, 0
  %v802 = vsel %vm67, %v781, 0
  %v805 = vsel %vm67, %v783, 0
  %v808 = vsel %vm67, %v785, 0
  %810 = vmatprep.subr.mxu0 0.0
  %811 = vmatpush1.msra.mxu0 0.0
  %812 = vmatprep.subr.mxu0 0.0
  %813 = vmatpush1.msra.mxu0 0.0
  %814 = vmatprep.subr.mxu0 0.0
  %815 = vmatpush1.msra.mxu0 0.0
  %816 = vmatprep.subr.mxu0 0.0
  %817 = vmatpush1.msra.mxu0 0.0
  %818 = vmatprep.subr.mxu0 0.0
  %819 = vmatpush1.msra.mxu0 0.0
  %820 = vmatprep.subr.mxu0 0.0
  %821 = vmatpush1.msra.mxu0 0.0
  %822 = vmatprep.subr.mxu0 0.0
  %823 = vmatpush1.msra.mxu0 0.0
  %824 = vmatprep.subr.mxu0 0.0
  %825 = vmatpush1.msra.mxu0 0.0
  %826 = vmatprep.subr.mxu0 0.0
  %827 = vmatpush1.msra.mxu0 0.0
  %828 = vmatprep.subr.mxu0 0.0
  %829 = vmatpush1.msra.mxu0 0.0
  %830 = vmatprep.subr.mxu0 0.0
  %831 = vmatpush1.msra.mxu0 0.0
  %832 = vmatprep.subr.mxu0 0.0
  %833 = vmatpush1.msra.mxu0 0.0
  %834 = vmatprep.subr.mxu0 0.0
  %835 = vmatpush1.msra.mxu0 %v793
  %836 = vmatprep.subr.mxu0 0.0
  %837 = vmatpush1.msra.mxu0 %v791
  %838 = vmatprep.subr.mxu0 0.0
  %839 = vmatpush1.msra.mxu0 %v789
  %840 = vmatprep.subr.mxu0 0.0
  %841 = vmatpush1.msra.mxu0 %v787
  %842 = vmatprep.subr.mxu0 0.0
  %843 = vmatpush2.msra.mxu0 0.0
  %844 = vmatprep.subr.mxu0 0.0
  %845 = vmatpush2.msra.mxu0 0.0
  %846 = vmatprep.subr.mxu0 0.0
  %847 = vmatpush2.msra.mxu0 0.0
  %848 = vmatprep.subr.mxu0 0.0
  %849 = vmatpush2.msra.mxu0 0.0
  %850 = vmatprep.subr.mxu0 0.0
  %851 = vmatpush2.msra.mxu0 0.0
  %852 = vmatprep.subr.mxu0 0.0
  %853 = vmatpush2.msra.mxu0 0.0
  %854 = vmatprep.subr.mxu0 0.0
  %855 = vmatpush2.msra.mxu0 0.0
  %856 = vmatprep.subr.mxu0 0.0
  %857 = vmatpush2.msra.mxu0 0.0
  %858 = vmatprep.subr.mxu0 0.0
  %859 = vmatpush2.msra.mxu0 0.0
  %860 = vmatprep.subr.mxu0 0.0
  %861 = vmatpush2.msra.mxu0 0.0
  %862 = vmatprep.subr.mxu0 0.0
  %863 = vmatpush2.msra.mxu0 0.0
  %864 = vmatprep.subr.mxu0 0.0
  %865 = vmatpush2.msra.mxu0 0.0
  %866 = vmatprep.subr.mxu0 0.0
  %867 = vmatpush2.msra.mxu0 0.0
  %868 = vmatprep.subr.mxu0 0.0
  %869 = vmatpush2.msra.mxu0 0.0
  %870 = vmatprep.subr.mxu0 0.0
  %871 = vmatpush2.msra.mxu0 0.0
  %872 = vmatprep.subr.mxu0 0.0
  %873 = vmatpush2.msra.mxu0 0.0
  %874 = vmatprep.mubr.f32.mxu0 0.0
  %875 = vmatmul.mubr.f32.gmra.mxu0 %v799
  %v876 = vpop.f32.mrf.mxu0
  %v877 = vadd.f32 0.0, %v876
  %v878 = vpop.f32.mrf.mxu0
  %879 = vmatprep.mubr.f32.mxu0 0.0
  %880 = vmatmul.mubr.f32.gmra.mxu0 %v802
  %v881 = vpop.f32.mrf.mxu0
  %v882 = vadd.f32 0.0, %v881
  %v883 = vpop.f32.mrf.mxu0
  %884 = vmatprep.mubr.f32.mxu0 0.0
  %885 = vmatmul.mubr.f32.gmra.mxu0 %v805
  %v886 = vpop.f32.mrf.mxu0
  %v887 = vadd.f32 0.0, %v886
  %v888 = vpop.f32.mrf.mxu0
  %889 = vmatprep.mubr.f32.mxu0 0.0
  %890 = vmatmul.mubr.f32.gmra.mxu0 %v808
  %v891 = vpop.f32.mrf.mxu0
  %v892 = vadd.f32 0.0, %v891
  %v893 = vpop.f32.mrf.mxu0
  %894 = vdwg.mxu0
  %895 = vrot.lane.b32.xlu0 %v616, 120
  %v896 = vpop.permute.xlu0 %895
  %897 = vrot.lane.b32.xlu0 %v617, 120
  %v898 = vpop.permute.xlu0 %897
  %899 = vrot.lane.b32.xlu0 %v618, 120
  %v900 = vpop.permute.xlu0 %899
  %901 = vrot.lane.b32.xlu0 %v619, 120
  %v902 = vpop.permute.xlu0 %901
  %903 = vrot.lane.b32.xlu0 %v598, 88
  %v904 = vpop.permute.xlu0 %903
  %905 = vrot.lane.b32.xlu0 %v603, 88
  %v906 = vpop.permute.xlu0 %905
  %907 = vrot.lane.b32.xlu0 %v608, 88
  %v908 = vpop.permute.xlu0 %907
  %909 = vrot.lane.b32.xlu0 %v613, 88
  %v910 = vpop.permute.xlu0 %909
  %v911 = vsel %vm632, %v896, 0
  %v913 = vsel %vm632, %v898, 0
  %v915 = vsel %vm632, %v900, 0
  %v917 = vsel %vm632, %v902, 0
  %v919 = vsel %vm632, %v904, 0
  %v921 = vsel %vm632, %v906, 0
  %v923 = vsel %vm632, %v908, 0
  %v925 = vsel %vm632, %v910, 0
  %927 = vmatprep.subr.mxu0 0.0
  %928 = vmatpush1.xpose.msra.mxu0 0.0
  %929 = vmatprep.subr.mxu0 0.0
  %930 = vmatpush1.xpose.msra.mxu0 0.0
  %931 = vmatprep.subr.mxu0 0.0
  %932 = vmatpush1.xpose.msra.mxu0 0.0
  %933 = vmatprep.subr.mxu0 0.0
  %934 = vmatpush1.xpose.msra.mxu0 0.0
  %935 = vmatprep.subr.mxu0 0.0
  %936 = vmatpush1.xpose.msra.mxu0 0.0
  %937 = vmatprep.subr.mxu0 0.0
  %938 = vmatpush1.xpose.msra.mxu0 0.0
  %939 = vmatprep.subr.mxu0 0.0
  %940 = vmatpush1.xpose.msra.mxu0 0.0
  %941 = vmatprep.subr.mxu0 0.0
  %942 = vmatpush1.xpose.msra.mxu0 0.0
  %943 = vmatprep.subr.mxu0 0.0
  %944 = vmatpush1.xpose.msra.mxu0 0.0
  %945 = vmatprep.subr.mxu0 0.0
  %946 = vmatpush1.xpose.msra.mxu0 0.0
  %947 = vmatprep.subr.mxu0 0.0
  %948 = vmatpush1.xpose.msra.mxu0 0.0
  %949 = vmatprep.subr.mxu0 0.0
  %950 = vmatpush1.xpose.msra.mxu0 0.0
  %951 = vmatprep.subr.mxu0 0.0
  %952 = vmatpush1.xpose.msra.mxu0 %v925
  %953 = vmatprep.subr.mxu0 0.0
  %954 = vmatpush1.xpose.msra.mxu0 %v923
  %955 = vmatprep.subr.mxu0 0.0
  %956 = vmatpush1.xpose.msra.mxu0 %v921
  %957 = vmatprep.subr.mxu0 0.0
  %958 = vmatpush1.xpose.msra.mxu0 %v919
  %959 = vmatprep.subr.mxu0 0.0
  %960 = vmatpush2.xpose.msra.mxu0 0.0
  %961 = vmatprep.subr.mxu0 0.0
  %962 = vmatpush2.xpose.msra.mxu0 0.0
  %963 = vmatprep.subr.mxu0 0.0
  %964 = vmatpush2.xpose.msra.mxu0 0.0
  %965 = vmatprep.subr.mxu0 0.0
  %966 = vmatpush2.xpose.msra.mxu0 0.0
  %967 = vmatprep.subr.mxu0 0.0
  %968 = vmatpush2.xpose.msra.mxu0 0.0
  %969 = vmatprep.subr.mxu0 0.0
  %970 = vmatpush2.xpose.msra.mxu0 0.0
  %971 = vmatprep.subr.mxu0 0.0
  %972 = vmatpush2.xpose.msra.mxu0 0.0
  %973 = vmatprep.subr.mxu0 0.0
  %974 = vmatpush2.xpose.msra.mxu0 0.0
  %975 = vmatprep.subr.mxu0 0.0
  %976 = vmatpush2.xpose.msra.mxu0 0.0
  %977 = vmatprep.subr.mxu0 0.0
  %978 = vmatpush2.xpose.msra.mxu0 0.0
  %979 = vmatprep.subr.mxu0 0.0
  %980 = vmatpush2.xpose.msra.mxu0 0.0
  %981 = vmatprep.subr.mxu0 0.0
  %982 = vmatpush2.xpose.msra.mxu0 0.0
  %983 = vmatprep.subr.mxu0 0.0
  %984 = vmatpush2.xpose.msra.mxu0 0.0
  %985 = vmatprep.subr.mxu0 0.0
  %986 = vmatpush2.xpose.msra.mxu0 0.0
  %987 = vmatprep.subr.mxu0 0.0
  %988 = vmatpush2.xpose.msra.mxu0 0.0
  %989 = vmatprep.subr.mxu0 0.0
  %990 = vmatpush2.xpose.msra.mxu0 0.0
  %991 = vmatprep.mubr.f32.mxu0 0.0
  %992 = vmatmul.mubr.f32.gmra.mxu0 %v911
  %v993 = vpop.f32.mrf.mxu0
  %v994 = vadd.f32 0.0, %v993
  %v995 = vpop.f32.mrf.mxu0
  %996 = vmatprep.mubr.f32.mxu0 0.0
  %997 = vmatmul.mubr.f32.gmra.mxu0 %v913
  %v998 = vpop.f32.mrf.mxu0
  %v999 = vadd.f32 0.0, %v998
  %v1000 = vpop.f32.mrf.mxu0
  %1001 = vmatprep.mubr.f32.mxu0 0.0
  %1002 = vmatmul.mubr.f32.gmra.mxu0 %v915
  %v1003 = vpop.f32.mrf.mxu0
  %v1004 = vadd.f32 0.0, %v1003
  %v1005 = vpop.f32.mrf.mxu0
  %1006 = vmatprep.mubr.f32.mxu0 0.0
  %1007 = vmatmul.mubr.f32.gmra.mxu0 %v917
  %v1008 = vpop.f32.mrf.mxu0
  %v1009 = vadd.f32 0.0, %v1008
  %v1010 = vpop.f32.mrf.mxu0
  %1011 = vdwg.mxu0
  %v1012 = vsel %vm385, %v994, -1e+30
  %v1013 = vsel %vm386, %v999, -1e+30
  %v1014 = vsel %vm387, %v1004, -1e+30
  %v1015 = vsel %vm388, %v1009, -1e+30
  %v1016 = vsel %vm67, %v1012, -inf
  %1017 = vmax.xlane.f32.xlu0 %v1016
  %v1018 = vpop.xlane.xlu0 %1017
  %v1019 = vsel %vm67, %v1013, -inf
  %1020 = vmax.xlane.f32.xlu0 %v1019
  %v1021 = vpop.xlane.xlu0 %1020
  %v1022 = vsel %vm67, %v1014, -inf
  %1023 = vmax.xlane.f32.xlu0 %v1022
  %v1024 = vpop.xlane.xlu0 %1023
  %v1025 = vsel %vm67, %v1015, -inf
  %1026 = vmax.xlane.f32.xlu0 %v1025
  %v1027 = vpop.xlane.xlu0 %1026
  %v1028 = vsub.f32 %v1012, %v1018
  %v1029 = vsub.f32 %v1013, %v1021
  %v1030 = vsub.f32 %v1014, %v1024
  %v1031 = vsub.f32 %v1015, %v1027
  %v1032 = vmul.f32 %v1028, 1.442695
  %v1033 = vpow.pop %v1032
  %v1034 = vmul.f32 %v1029, 1.442695
  %v1035 = vpow.pop %v1034
  %v1036 = vmul.f32 %v1030, 1.442695
  %v1037 = vpow.pop %v1036
  %v1038 = vmul.f32 %v1031, 1.442695
  %v1039 = vpow.pop %v1038
  %v1040 = vsel %vm67, %v1033, 0.0
  %1041 = vadd.xlane.f32.xlu0 %v1040
  %v1042 = vpop.xlane.xlu0 %1041
  %v1043 = vsel %vm67, %v1035, 0.0
  %1044 = vadd.xlane.f32.xlu0 %v1043
  %v1045 = vpop.xlane.xlu0 %1044
  %v1046 = vsel %vm67, %v1037, 0.0
  %1047 = vadd.xlane.f32.xlu0 %v1046
  %v1048 = vpop.xlane.xlu0 %1047
  %v1049 = vsel %vm67, %v1039, 0.0
  %1050 = vadd.xlane.f32.xlu0 %v1049
  %v1051 = vpop.xlane.xlu0 %1050
  %v1052 = vrcp.pop %v1042
  %v1053 = vmul.f32 %v1033, %v1052
  %v1054 = vrcp.pop %v1045
  %v1055 = vmul.f32 %v1035, %v1054
  %v1056 = vrcp.pop %v1048
  %v1057 = vmul.f32 %v1037, %v1056
  %v1058 = vrcp.pop %v1051
  %v1059 = vmul.f32 %v1039, %v1058
  %1060 = vrot.lane.b32.xlu0 %v598, 56
  %v1061 = vpop.permute.xlu0 %1060
  %1062 = vrot.lane.b32.xlu0 %v603, 56
  %v1063 = vpop.permute.xlu0 %1062
  %1064 = vrot.lane.b32.xlu0 %v608, 56
  %v1065 = vpop.permute.xlu0 %1064
  %1066 = vrot.lane.b32.xlu0 %v613, 56
  %v1067 = vpop.permute.xlu0 %1066
  %v1073 = vsel %vm67, %v1053, 0
  %v1076 = vsel %vm67, %v1055, 0
  %v1079 = vsel %vm67, %v1057, 0
  %v1082 = vsel %vm67, %v1059, 0
  %1084 = vmatprep.subr.mxu0 0.0
  %1085 = vmatpush1.msra.mxu0 0.0
  %1086 = vmatprep.subr.mxu0 0.0
  %1087 = vmatpush1.msra.mxu0 0.0
  %1088 = vmatprep.subr.mxu0 0.0
  %1089 = vmatpush1.msra.mxu0 0.0
  %1090 = vmatprep.subr.mxu0 0.0
  %1091 = vmatpush1.msra.mxu0 0.0
  %1092 = vmatprep.subr.mxu0 0.0
  %1093 = vmatpush1.msra.mxu0 0.0
  %1094 = vmatprep.subr.mxu0 0.0
  %1095 = vmatpush1.msra.mxu0 0.0
  %1096 = vmatprep.subr.mxu0 0.0
  %1097 = vmatpush1.msra.mxu0 0.0
  %1098 = vmatprep.subr.mxu0 0.0
  %1099 = vmatpush1.msra.mxu0 0.0
  %1100 = vmatprep.subr.mxu0 0.0
  %1101 = vmatpush1.msra.mxu0 0.0
  %1102 = vmatprep.subr.mxu0 0.0
  %1103 = vmatpush1.msra.mxu0 0.0
  %1104 = vmatprep.subr.mxu0 0.0
  %1105 = vmatpush1.msra.mxu0 0.0
  %1106 = vmatprep.subr.mxu0 0.0
  %1107 = vmatpush1.msra.mxu0 0.0
  %1108 = vmatprep.subr.mxu0 0.0
  %1109 = vmatpush1.msra.mxu0 %v1067
  %1110 = vmatprep.subr.mxu0 0.0
  %1111 = vmatpush1.msra.mxu0 %v1065
  %1112 = vmatprep.subr.mxu0 0.0
  %1113 = vmatpush1.msra.mxu0 %v1063
  %1114 = vmatprep.subr.mxu0 0.0
  %1115 = vmatpush1.msra.mxu0 %v1061
  %1116 = vmatprep.subr.mxu0 0.0
  %1117 = vmatpush2.msra.mxu0 0.0
  %1118 = vmatprep.subr.mxu0 0.0
  %1119 = vmatpush2.msra.mxu0 0.0
  %1120 = vmatprep.subr.mxu0 0.0
  %1121 = vmatpush2.msra.mxu0 0.0
  %1122 = vmatprep.subr.mxu0 0.0
  %1123 = vmatpush2.msra.mxu0 0.0
  %1124 = vmatprep.subr.mxu0 0.0
  %1125 = vmatpush2.msra.mxu0 0.0
  %1126 = vmatprep.subr.mxu0 0.0
  %1127 = vmatpush2.msra.mxu0 0.0
  %1128 = vmatprep.subr.mxu0 0.0
  %1129 = vmatpush2.msra.mxu0 0.0
  %1130 = vmatprep.subr.mxu0 0.0
  %1131 = vmatpush2.msra.mxu0 0.0
  %1132 = vmatprep.subr.mxu0 0.0
  %1133 = vmatpush2.msra.mxu0 0.0
  %1134 = vmatprep.subr.mxu0 0.0
  %1135 = vmatpush2.msra.mxu0 0.0
  %1136 = vmatprep.subr.mxu0 0.0
  %1137 = vmatpush2.msra.mxu0 0.0
  %1138 = vmatprep.subr.mxu0 0.0
  %1139 = vmatpush2.msra.mxu0 0.0
  %1140 = vmatprep.subr.mxu0 0.0
  %1141 = vmatpush2.msra.mxu0 0.0
  %1142 = vmatprep.subr.mxu0 0.0
  %1143 = vmatpush2.msra.mxu0 0.0
  %1144 = vmatprep.subr.mxu0 0.0
  %1145 = vmatpush2.msra.mxu0 0.0
  %1146 = vmatprep.subr.mxu0 0.0
  %1147 = vmatpush2.msra.mxu0 0.0
  %1148 = vmatprep.mubr.f32.mxu0 0.0
  %1149 = vmatmul.mubr.f32.gmra.mxu0 %v1073
  %v1150 = vpop.f32.mrf.mxu0
  %v1151 = vadd.f32 0.0, %v1150
  %v1152 = vpop.f32.mrf.mxu0
  %1153 = vmatprep.mubr.f32.mxu0 0.0
  %1154 = vmatmul.mubr.f32.gmra.mxu0 %v1076
  %v1155 = vpop.f32.mrf.mxu0
  %v1156 = vadd.f32 0.0, %v1155
  %v1157 = vpop.f32.mrf.mxu0
  %1158 = vmatprep.mubr.f32.mxu0 0.0
  %1159 = vmatmul.mubr.f32.gmra.mxu0 %v1079
  %v1160 = vpop.f32.mrf.mxu0
  %v1161 = vadd.f32 0.0, %v1160
  %v1162 = vpop.f32.mrf.mxu0
  %1163 = vmatprep.mubr.f32.mxu0 0.0
  %1164 = vmatmul.mubr.f32.gmra.mxu0 %v1082
  %v1165 = vpop.f32.mrf.mxu0
  %v1166 = vadd.f32 0.0, %v1165
  %v1167 = vpop.f32.mrf.mxu0
  %1168 = vdwg.mxu0
  %v1170 = vsel %vm632, %v1151, 0
  %v1173 = vsel %vm632, %v1156, 0
  %v1176 = vsel %vm632, %v1161, 0
  %v1179 = vsel %vm632, %v1166, 0
  %1181 = vmatprep.subr.mxu0 0.0
  %1182 = vmatpush1.msra.mxu0 0.0
  %1183 = vmatprep.subr.mxu0 0.0
  %1184 = vmatpush1.msra.mxu0 0.0
  %1185 = vmatprep.subr.mxu0 0.0
  %1186 = vmatpush1.msra.mxu0 0.0
  %1187 = vmatprep.subr.mxu0 0.0
  %1188 = vmatpush1.msra.mxu0 0.0
  %1189 = vmatprep.subr.mxu0 0.0
  %1190 = vmatpush1.msra.mxu0 0.0
  %1191 = vmatprep.subr.mxu0 0.0
  %1192 = vmatpush1.msra.mxu0 0.0
  %1193 = vmatprep.subr.mxu0 0.0
  %1194 = vmatpush1.msra.mxu0 0.0
  %1195 = vmatprep.subr.mxu0 0.0
  %1196 = vmatpush1.msra.mxu0 0.0
  %1197 = vmatprep.subr.mxu0 0.0
  %1198 = vmatpush1.msra.mxu0 0.0
  %1199 = vmatprep.subr.mxu0 0.0
  %1200 = vmatpush1.msra.mxu0 0.0
  %1201 = vmatprep.subr.mxu0 0.0
  %1202 = vmatpush1.msra.mxu0 0.0
  %1203 = vmatprep.subr.mxu0 0.0
  %1204 = vmatpush1.msra.mxu0 0.0
  %1205 = vmatprep.subr.mxu0 0.0
  %1206 = vmatpush1.msra.mxu0 0.0
  %1207 = vmatprep.subr.mxu0 0.0
  %1208 = vmatpush1.msra.mxu0 0.0
  %1209 = vmatprep.subr.mxu0 0.0
  %1210 = vmatpush1.msra.mxu0 0.0
  %1211 = vmatprep.subr.mxu0 0.0
  %1212 = vmatpush1.msra.mxu0 %v395
  %1213 = vmatprep.subr.mxu0 0.0
  %1214 = vmatpush2.msra.mxu0 0.0
  %1215 = vmatprep.subr.mxu0 0.0
  %1216 = vmatpush2.msra.mxu0 0.0
  %1217 = vmatprep.subr.mxu0 0.0
  %1218 = vmatpush2.msra.mxu0 0.0
  %1219 = vmatprep.subr.mxu0 0.0
  %1220 = vmatpush2.msra.mxu0 0.0
  %1221 = vmatprep.subr.mxu0 0.0
  %1222 = vmatpush2.msra.mxu0 0.0
  %1223 = vmatprep.subr.mxu0 0.0
  %1224 = vmatpush2.msra.mxu0 0.0
  %1225 = vmatprep.subr.mxu0 0.0
  %1226 = vmatpush2.msra.mxu0 0.0
  %1227 = vmatprep.subr.mxu0 0.0
  %1228 = vmatpush2.msra.mxu0 0.0
  %1229 = vmatprep.subr.mxu0 0.0
  %1230 = vmatpush2.msra.mxu0 0.0
  %1231 = vmatprep.subr.mxu0 0.0
  %1232 = vmatpush2.msra.mxu0 0.0
  %1233 = vmatprep.subr.mxu0 0.0
  %1234 = vmatpush2.msra.mxu0 0.0
  %1235 = vmatprep.subr.mxu0 0.0
  %1236 = vmatpush2.msra.mxu0 0.0
  %1237 = vmatprep.subr.mxu0 0.0
  %1238 = vmatpush2.msra.mxu0 0.0
  %1239 = vmatprep.subr.mxu0 0.0
  %1240 = vmatpush2.msra.mxu0 0.0
  %1241 = vmatprep.subr.mxu0 0.0
  %1242 = vmatpush2.msra.mxu0 0.0
  %1243 = vmatprep.subr.mxu0 0.0
  %1244 = vmatpush2.msra.mxu0 0.0
  %1245 = vmatprep.mubr.f32.mxu0 0.0
  %1246 = vmatmul.mubr.f32.gmra.mxu0 %v1170
  %v1247 = vpop.f32.mrf.mxu0
  %v1248 = vadd.f32 0.0, %v1247
  %v1249 = vpop.f32.mrf.mxu0
  %1250 = vmatprep.mubr.f32.mxu0 0.0
  %1251 = vmatmul.mubr.f32.gmra.mxu0 %v1173
  %v1252 = vpop.f32.mrf.mxu0
  %v1253 = vadd.f32 0.0, %v1252
  %v1254 = vpop.f32.mrf.mxu0
  %1255 = vmatprep.mubr.f32.mxu0 0.0
  %1256 = vmatmul.mubr.f32.gmra.mxu0 %v1176
  %v1257 = vpop.f32.mrf.mxu0
  %v1258 = vadd.f32 0.0, %v1257
  %v1259 = vpop.f32.mrf.mxu0
  %1260 = vmatprep.mubr.f32.mxu0 0.0
  %1261 = vmatmul.mubr.f32.gmra.mxu0 %v1179
  %v1262 = vpop.f32.mrf.mxu0
  %v1263 = vadd.f32 0.0, %v1262
  %v1264 = vpop.f32.mrf.mxu0
  %1265 = vdwg.mxu0
  %v1267 = vsel %vm632, %v877, 0
  %v1270 = vsel %vm632, %v882, 0
  %v1273 = vsel %vm632, %v887, 0
  %v1276 = vsel %vm632, %v892, 0
  %1278 = vmatprep.subr.mxu0 0.0
  %1279 = vmatpush1.msra.mxu0 0.0
  %1280 = vmatprep.subr.mxu0 0.0
  %1281 = vmatpush1.msra.mxu0 0.0
  %1282 = vmatprep.subr.mxu0 0.0
  %1283 = vmatpush1.msra.mxu0 0.0
  %1284 = vmatprep.subr.mxu0 0.0
  %1285 = vmatpush1.msra.mxu0 0.0
  %1286 = vmatprep.subr.mxu0 0.0
  %1287 = vmatpush1.msra.mxu0 0.0
  %1288 = vmatprep.subr.mxu0 0.0
  %1289 = vmatpush1.msra.mxu0 0.0
  %1290 = vmatprep.subr.mxu0 0.0
  %1291 = vmatpush1.msra.mxu0 0.0
  %1292 = vmatprep.subr.mxu0 0.0
  %1293 = vmatpush1.msra.mxu0 0.0
  %1294 = vmatprep.subr.mxu0 0.0
  %1295 = vmatpush1.msra.mxu0 0.0
  %1296 = vmatprep.subr.mxu0 0.0
  %1297 = vmatpush1.msra.mxu0 0.0
  %1298 = vmatprep.subr.mxu0 0.0
  %1299 = vmatpush1.msra.mxu0 0.0
  %1300 = vmatprep.subr.mxu0 0.0
  %1301 = vmatpush1.msra.mxu0 0.0
  %1302 = vmatprep.subr.mxu0 0.0
  %1303 = vmatpush1.msra.mxu0 0.0
  %1304 = vmatprep.subr.mxu0 0.0
  %1305 = vmatpush1.msra.mxu0 0.0
  %1306 = vmatprep.subr.mxu0 0.0
  %1307 = vmatpush1.msra.mxu0 0.0
  %1308 = vmatprep.subr.mxu0 0.0
  %1309 = vmatpush1.msra.mxu0 %v392
  %1310 = vmatprep.subr.mxu0 0.0
  %1311 = vmatpush2.msra.mxu0 0.0
  %1312 = vmatprep.subr.mxu0 0.0
  %1313 = vmatpush2.msra.mxu0 0.0
  %1314 = vmatprep.subr.mxu0 0.0
  %1315 = vmatpush2.msra.mxu0 0.0
  %1316 = vmatprep.subr.mxu0 0.0
  %1317 = vmatpush2.msra.mxu0 0.0
  %1318 = vmatprep.subr.mxu0 0.0
  %1319 = vmatpush2.msra.mxu0 0.0
  %1320 = vmatprep.subr.mxu0 0.0
  %1321 = vmatpush2.msra.mxu0 0.0
  %1322 = vmatprep.subr.mxu0 0.0
  %1323 = vmatpush2.msra.mxu0 0.0
  %1324 = vmatprep.subr.mxu0 0.0
  %1325 = vmatpush2.msra.mxu0 0.0
  %1326 = vmatprep.subr.mxu0 0.0
  %1327 = vmatpush2.msra.mxu0 0.0
  %1328 = vmatprep.subr.mxu0 0.0
  %1329 = vmatpush2.msra.mxu0 0.0
  %1330 = vmatprep.subr.mxu0 0.0
  %1331 = vmatpush2.msra.mxu0 0.0
  %1332 = vmatprep.subr.mxu0 0.0
  %1333 = vmatpush2.msra.mxu0 0.0
  %1334 = vmatprep.subr.mxu0 0.0
  %1335 = vmatpush2.msra.mxu0 0.0
  %1336 = vmatprep.subr.mxu0 0.0
  %1337 = vmatpush2.msra.mxu0 0.0
  %1338 = vmatprep.subr.mxu0 0.0
  %1339 = vmatpush2.msra.mxu0 0.0
  %1340 = vmatprep.subr.mxu0 0.0
  %1341 = vmatpush2.msra.mxu0 0.0
  %1342 = vmatprep.mubr.f32.mxu0 0.0
  %1343 = vmatmul.mubr.f32.gmra.mxu0 %v1267
  %v1344 = vpop.f32.mrf.mxu0
  %v1345 = vadd.f32 %v1248, %v1344
  %v1346 = vpop.f32.mrf.mxu0
  %1347 = vmatprep.mubr.f32.mxu0 0.0
  %1348 = vmatmul.mubr.f32.gmra.mxu0 %v1270
  %v1349 = vpop.f32.mrf.mxu0
  %v1350 = vadd.f32 %v1253, %v1349
  %v1351 = vpop.f32.mrf.mxu0
  %1352 = vmatprep.mubr.f32.mxu0 0.0
  %1353 = vmatmul.mubr.f32.gmra.mxu0 %v1273
  %v1354 = vpop.f32.mrf.mxu0
  %v1355 = vadd.f32 %v1258, %v1354
  %v1356 = vpop.f32.mrf.mxu0
  %1357 = vmatprep.mubr.f32.mxu0 0.0
  %1358 = vmatmul.mubr.f32.gmra.mxu0 %v1276
  %v1359 = vpop.f32.mrf.mxu0
  %v1360 = vadd.f32 %v1263, %v1359
  %v1361 = vpop.f32.mrf.mxu0
  %1362 = vdwg.mxu0
  %1363 = vrot.lane.b32.xlu0 %v616, 112
  %v1364 = vpop.permute.xlu0 %1363
  %1365 = vrot.lane.b32.xlu0 %v617, 112
  %v1366 = vpop.permute.xlu0 %1365
  %1367 = vrot.lane.b32.xlu0 %v618, 112
  %v1368 = vpop.permute.xlu0 %1367
  %1369 = vrot.lane.b32.xlu0 %v619, 112
  %v1370 = vpop.permute.xlu0 %1369
  %1371 = vrot.lane.b32.xlu0 %v598, 80
  %v1372 = vpop.permute.xlu0 %1371
  %1373 = vrot.lane.b32.xlu0 %v603, 80
  %v1374 = vpop.permute.xlu0 %1373
  %1375 = vrot.lane.b32.xlu0 %v608, 80
  %v1376 = vpop.permute.xlu0 %1375
  %1377 = vrot.lane.b32.xlu0 %v613, 80
  %v1378 = vpop.permute.xlu0 %1377
  %v1379 = vsel %vm632, %v1364, 0
  %v1381 = vsel %vm632, %v1366, 0
  %v1383 = vsel %vm632, %v1368, 0
  %v1385 = vsel %vm632, %v1370, 0
  %v1387 = vsel %vm632, %v1372, 0
  %v1389 = vsel %vm632, %v1374, 0
  %v1391 = vsel %vm632, %v1376, 0
  %v1393 = vsel %vm632, %v1378, 0
  %1395 = vmatprep.subr.mxu0 0.0
  %1396 = vmatpush1.xpose.msra.mxu0 0.0
  %1397 = vmatprep.subr.mxu0 0.0
  %1398 = vmatpush1.xpose.msra.mxu0 0.0
  %1399 = vmatprep.subr.mxu0 0.0
  %1400 = vmatpush1.xpose.msra.mxu0 0.0
  %1401 = vmatprep.subr.mxu0 0.0
  %1402 = vmatpush1.xpose.msra.mxu0 0.0
  %1403 = vmatprep.subr.mxu0 0.0
  %1404 = vmatpush1.xpose.msra.mxu0 0.0
  %1405 = vmatprep.subr.mxu0 0.0
  %1406 = vmatpush1.xpose.msra.mxu0 0.0
  %1407 = vmatprep.subr.mxu0 0.0
  %1408 = vmatpush1.xpose.msra.mxu0 0.0
  %1409 = vmatprep.subr.mxu0 0.0
  %1410 = vmatpush1.xpose.msra.mxu0 0.0
  %1411 = vmatprep.subr.mxu0 0.0
  %1412 = vmatpush1.xpose.msra.mxu0 0.0
  %1413 = vmatprep.subr.mxu0 0.0
  %1414 = vmatpush1.xpose.msra.mxu0 0.0
  %1415 = vmatprep.subr.mxu0 0.0
  %1416 = vmatpush1.xpose.msra.mxu0 0.0
  %1417 = vmatprep.subr.mxu0 0.0
  %1418 = vmatpush1.xpose.msra.mxu0 0.0
  %1419 = vmatprep.subr.mxu0 0.0
  %1420 = vmatpush1.xpose.msra.mxu0 %v1393
  %1421 = vmatprep.subr.mxu0 0.0
  %1422 = vmatpush1.xpose.msra.mxu0 %v1391
  %1423 = vmatprep.subr.mxu0 0.0
  %1424 = vmatpush1.xpose.msra.mxu0 %v1389
  %1425 = vmatprep.subr.mxu0 0.0
  %1426 = vmatpush1.xpose.msra.mxu0 %v1387
  %1427 = vmatprep.subr.mxu0 0.0
  %1428 = vmatpush2.xpose.msra.mxu0 0.0
  %1429 = vmatprep.subr.mxu0 0.0
  %1430 = vmatpush2.xpose.msra.mxu0 0.0
  %1431 = vmatprep.subr.mxu0 0.0
  %1432 = vmatpush2.xpose.msra.mxu0 0.0
  %1433 = vmatprep.subr.mxu0 0.0
  %1434 = vmatpush2.xpose.msra.mxu0 0.0
  %1435 = vmatprep.subr.mxu0 0.0
  %1436 = vmatpush2.xpose.msra.mxu0 0.0
  %1437 = vmatprep.subr.mxu0 0.0
  %1438 = vmatpush2.xpose.msra.mxu0 0.0
  %1439 = vmatprep.subr.mxu0 0.0
  %1440 = vmatpush2.xpose.msra.mxu0 0.0
  %1441 = vmatprep.subr.mxu0 0.0
  %1442 = vmatpush2.xpose.msra.mxu0 0.0
  %1443 = vmatprep.subr.mxu0 0.0
  %1444 = vmatpush2.xpose.msra.mxu0 0.0
  %1445 = vmatprep.subr.mxu0 0.0
  %1446 = vmatpush2.xpose.msra.mxu0 0.0
  %1447 = vmatprep.subr.mxu0 0.0
  %1448 = vmatpush2.xpose.msra.mxu0 0.0
  %1449 = vmatprep.subr.mxu0 0.0
  %1450 = vmatpush2.xpose.msra.mxu0 0.0
  %1451 = vmatprep.subr.mxu0 0.0
  %1452 = vmatpush2.xpose.msra.mxu0 0.0
  %1453 = vmatprep.subr.mxu0 0.0
  %1454 = vmatpush2.xpose.msra.mxu0 0.0
  %1455 = vmatprep.subr.mxu0 0.0
  %1456 = vmatpush2.xpose.msra.mxu0 0.0
  %1457 = vmatprep.subr.mxu0 0.0
  %1458 = vmatpush2.xpose.msra.mxu0 0.0
  %1459 = vmatprep.mubr.f32.mxu0 0.0
  %1460 = vmatmul.mubr.f32.gmra.mxu0 %v1379
  %v1461 = vpop.f32.mrf.mxu0
  %v1462 = vadd.f32 0.0, %v1461
  %v1463 = vpop.f32.mrf.mxu0
  %1464 = vmatprep.mubr.f32.mxu0 0.0
  %1465 = vmatmul.mubr.f32.gmra.mxu0 %v1381
  %v1466 = vpop.f32.mrf.mxu0
  %v1467 = vadd.f32 0.0, %v1466
  %v1468 = vpop.f32.mrf.mxu0
  %1469 = vmatprep.mubr.f32.mxu0 0.0
  %1470 = vmatmul.mubr.f32.gmra.mxu0 %v1383
  %v1471 = vpop.f32.mrf.mxu0
  %v1472 = vadd.f32 0.0, %v1471
  %v1473 = vpop.f32.mrf.mxu0
  %1474 = vmatprep.mubr.f32.mxu0 0.0
  %1475 = vmatmul.mubr.f32.gmra.mxu0 %v1385
  %v1476 = vpop.f32.mrf.mxu0
  %v1477 = vadd.f32 0.0, %v1476
  %v1478 = vpop.f32.mrf.mxu0
  %1479 = vdwg.mxu0
  %v1480 = vsel %vm385, %v1462, -1e+30
  %v1481 = vsel %vm386, %v1467, -1e+30
  %v1482 = vsel %vm387, %v1472, -1e+30
  %v1483 = vsel %vm388, %v1477, -1e+30
  %v1484 = vsel %vm67, %v1480, -inf
  %1485 = vmax.xlane.f32.xlu0 %v1484
  %v1486 = vpop.xlane.xlu0 %1485
  %v1487 = vsel %vm67, %v1481, -inf
  %1488 = vmax.xlane.f32.xlu0 %v1487
  %v1489 = vpop.xlane.xlu0 %1488
  %v1490 = vsel %vm67, %v1482, -inf
  %1491 = vmax.xlane.f32.xlu0 %v1490
  %v1492 = vpop.xlane.xlu0 %1491
  %v1493 = vsel %vm67, %v1483, -inf
  %1494 = vmax.xlane.f32.xlu0 %v1493
  %v1495 = vpop.xlane.xlu0 %1494
  %v1496 = vsub.f32 %v1480, %v1486
  %v1497 = vsub.f32 %v1481, %v1489
  %v1498 = vsub.f32 %v1482, %v1492
  %v1499 = vsub.f32 %v1483, %v1495
  %v1500 = vmul.f32 %v1496, 1.442695
  %v1501 = vpow.pop %v1500
  %v1502 = vmul.f32 %v1497, 1.442695
  %v1503 = vpow.pop %v1502
  %v1504 = vmul.f32 %v1498, 1.442695
  %v1505 = vpow.pop %v1504
  %v1506 = vmul.f32 %v1499, 1.442695
  %v1507 = vpow.pop %v1506
  %v1508 = vsel %vm67, %v1501, 0.0
  %1509 = vadd.xlane.f32.xlu0 %v1508
  %v1510 = vpop.xlane.xlu0 %1509
  %v1511 = vsel %vm67, %v1503, 0.0
  %1512 = vadd.xlane.f32.xlu0 %v1511
  %v1513 = vpop.xlane.xlu0 %1512
  %v1514 = vsel %vm67, %v1505, 0.0
  %1515 = vadd.xlane.f32.xlu0 %v1514
  %v1516 = vpop.xlane.xlu0 %1515
  %v1517 = vsel %vm67, %v1507, 0.0
  %1518 = vadd.xlane.f32.xlu0 %v1517
  %v1519 = vpop.xlane.xlu0 %1518
  %v1520 = vrcp.pop %v1510
  %v1521 = vmul.f32 %v1501, %v1520
  %v1522 = vrcp.pop %v1513
  %v1523 = vmul.f32 %v1503, %v1522
  %v1524 = vrcp.pop %v1516
  %v1525 = vmul.f32 %v1505, %v1524
  %v1526 = vrcp.pop %v1519
  %v1527 = vmul.f32 %v1507, %v1526
  %1528 = vrot.lane.b32.xlu0 %v598, 48
  %v1529 = vpop.permute.xlu0 %1528
  %1530 = vrot.lane.b32.xlu0 %v603, 48
  %v1531 = vpop.permute.xlu0 %1530
  %1532 = vrot.lane.b32.xlu0 %v608, 48
  %v1533 = vpop.permute.xlu0 %1532
  %1534 = vrot.lane.b32.xlu0 %v613, 48
  %v1535 = vpop.permute.xlu0 %1534
  %v1541 = vsel %vm67, %v1521, 0
  %v1544 = vsel %vm67, %v1523, 0
  %v1547 = vsel %vm67, %v1525, 0
  %v1550 = vsel %vm67, %v1527, 0
  %1552 = vmatprep.subr.mxu0 0.0
  %1553 = vmatpush1.msra.mxu0 0.0
  %1554 = vmatprep.subr.mxu0 0.0
  %1555 = vmatpush1.msra.mxu0 0.0
  %1556 = vmatprep.subr.mxu0 0.0
  %1557 = vmatpush1.msra.mxu0 0.0
  %1558 = vmatprep.subr.mxu0 0.0
  %1559 = vmatpush1.msra.mxu0 0.0
  %1560 = vmatprep.subr.mxu0 0.0
  %1561 = vmatpush1.msra.mxu0 0.0
  %1562 = vmatprep.subr.mxu0 0.0
  %1563 = vmatpush1.msra.mxu0 0.0
  %1564 = vmatprep.subr.mxu0 0.0
  %1565 = vmatpush1.msra.mxu0 0.0
  %1566 = vmatprep.subr.mxu0 0.0
  %1567 = vmatpush1.msra.mxu0 0.0
  %1568 = vmatprep.subr.mxu0 0.0
  %1569 = vmatpush1.msra.mxu0 0.0
  %1570 = vmatprep.subr.mxu0 0.0
  %1571 = vmatpush1.msra.mxu0 0.0
  %1572 = vmatprep.subr.mxu0 0.0
  %1573 = vmatpush1.msra.mxu0 0.0
  %1574 = vmatprep.subr.mxu0 0.0
  %1575 = vmatpush1.msra.mxu0 0.0
  %1576 = vmatprep.subr.mxu0 0.0
  %1577 = vmatpush1.msra.mxu0 %v1535
  %1578 = vmatprep.subr.mxu0 0.0
  %1579 = vmatpush1.msra.mxu0 %v1533
  %1580 = vmatprep.subr.mxu0 0.0
  %1581 = vmatpush1.msra.mxu0 %v1531
  %1582 = vmatprep.subr.mxu0 0.0
  %1583 = vmatpush1.msra.mxu0 %v1529
  %1584 = vmatprep.subr.mxu0 0.0
  %1585 = vmatpush2.msra.mxu0 0.0
  %1586 = vmatprep.subr.mxu0 0.0
  %1587 = vmatpush2.msra.mxu0 0.0
  %1588 = vmatprep.subr.mxu0 0.0
  %1589 = vmatpush2.msra.mxu0 0.0
  %1590 = vmatprep.subr.mxu0 0.0
  %1591 = vmatpush2.msra.mxu0 0.0
  %1592 = vmatprep.subr.mxu0 0.0
  %1593 = vmatpush2.msra.mxu0 0.0
  %1594 = vmatprep.subr.mxu0 0.0
  %1595 = vmatpush2.msra.mxu0 0.0
  %1596 = vmatprep.subr.mxu0 0.0
  %1597 = vmatpush2.msra.mxu0 0.0
  %1598 = vmatprep.subr.mxu0 0.0
  %1599 = vmatpush2.msra.mxu0 0.0
  %1600 = vmatprep.subr.mxu0 0.0
  %1601 = vmatpush2.msra.mxu0 0.0
  %1602 = vmatprep.subr.mxu0 0.0
  %1603 = vmatpush2.msra.mxu0 0.0
  %1604 = vmatprep.subr.mxu0 0.0
  %1605 = vmatpush2.msra.mxu0 0.0
  %1606 = vmatprep.subr.mxu0 0.0
  %1607 = vmatpush2.msra.mxu0 0.0
  %1608 = vmatprep.subr.mxu0 0.0
  %1609 = vmatpush2.msra.mxu0 0.0
  %1610 = vmatprep.subr.mxu0 0.0
  %1611 = vmatpush2.msra.mxu0 0.0
  %1612 = vmatprep.subr.mxu0 0.0
  %1613 = vmatpush2.msra.mxu0 0.0
  %1614 = vmatprep.subr.mxu0 0.0
  %1615 = vmatpush2.msra.mxu0 0.0
  %1616 = vmatprep.mubr.f32.mxu0 0.0
  %1617 = vmatmul.mubr.f32.gmra.mxu0 %v1541
  %v1618 = vpop.f32.mrf.mxu0
  %v1619 = vadd.f32 0.0, %v1618
  %v1620 = vpop.f32.mrf.mxu0
  %1621 = vmatprep.mubr.f32.mxu0 0.0
  %1622 = vmatmul.mubr.f32.gmra.mxu0 %v1544
  %v1623 = vpop.f32.mrf.mxu0
  %v1624 = vadd.f32 0.0, %v1623
  %v1625 = vpop.f32.mrf.mxu0
  %1626 = vmatprep.mubr.f32.mxu0 0.0
  %1627 = vmatmul.mubr.f32.gmra.mxu0 %v1547
  %v1628 = vpop.f32.mrf.mxu0
  %v1629 = vadd.f32 0.0, %v1628
  %v1630 = vpop.f32.mrf.mxu0
  %1631 = vmatprep.mubr.f32.mxu0 0.0
  %1632 = vmatmul.mubr.f32.gmra.mxu0 %v1550
  %v1633 = vpop.f32.mrf.mxu0
  %v1634 = vadd.f32 0.0, %v1633
  %v1635 = vpop.f32.mrf.mxu0
  %1636 = vdwg.mxu0
  %v1638 = vsel %vm632, %v1619, 0
  %v1641 = vsel %vm632, %v1624, 0
  %v1644 = vsel %vm632, %v1629, 0
  %v1647 = vsel %vm632, %v1634, 0
  %1649 = vmatprep.subr.mxu0 0.0
  %1650 = vmatpush1.msra.mxu0 0.0
  %1651 = vmatprep.subr.mxu0 0.0
  %1652 = vmatpush1.msra.mxu0 0.0
  %1653 = vmatprep.subr.mxu0 0.0
  %1654 = vmatpush1.msra.mxu0 0.0
  %1655 = vmatprep.subr.mxu0 0.0
  %1656 = vmatpush1.msra.mxu0 0.0
  %1657 = vmatprep.subr.mxu0 0.0
  %1658 = vmatpush1.msra.mxu0 0.0
  %1659 = vmatprep.subr.mxu0 0.0
  %1660 = vmatpush1.msra.mxu0 0.0
  %1661 = vmatprep.subr.mxu0 0.0
  %1662 = vmatpush1.msra.mxu0 0.0
  %1663 = vmatprep.subr.mxu0 0.0
  %1664 = vmatpush1.msra.mxu0 0.0
  %1665 = vmatprep.subr.mxu0 0.0
  %1666 = vmatpush1.msra.mxu0 0.0
  %1667 = vmatprep.subr.mxu0 0.0
  %1668 = vmatpush1.msra.mxu0 0.0
  %1669 = vmatprep.subr.mxu0 0.0
  %1670 = vmatpush1.msra.mxu0 0.0
  %1671 = vmatprep.subr.mxu0 0.0
  %1672 = vmatpush1.msra.mxu0 0.0
  %1673 = vmatprep.subr.mxu0 0.0
  %1674 = vmatpush1.msra.mxu0 0.0
  %1675 = vmatprep.subr.mxu0 0.0
  %1676 = vmatpush1.msra.mxu0 0.0
  %1677 = vmatprep.subr.mxu0 0.0
  %1678 = vmatpush1.msra.mxu0 0.0
  %1679 = vmatprep.subr.mxu0 0.0
  %1680 = vmatpush1.msra.mxu0 %v398
  %1681 = vmatprep.subr.mxu0 0.0
  %1682 = vmatpush2.msra.mxu0 0.0
  %1683 = vmatprep.subr.mxu0 0.0
  %1684 = vmatpush2.msra.mxu0 0.0
  %1685 = vmatprep.subr.mxu0 0.0
  %1686 = vmatpush2.msra.mxu0 0.0
  %1687 = vmatprep.subr.mxu0 0.0
  %1688 = vmatpush2.msra.mxu0 0.0
  %1689 = vmatprep.subr.mxu0 0.0
  %1690 = vmatpush2.msra.mxu0 0.0
  %1691 = vmatprep.subr.mxu0 0.0
  %1692 = vmatpush2.msra.mxu0 0.0
  %1693 = vmatprep.subr.mxu0 0.0
  %1694 = vmatpush2.msra.mxu0 0.0
  %1695 = vmatprep.subr.mxu0 0.0
  %1696 = vmatpush2.msra.mxu0 0.0
  %1697 = vmatprep.subr.mxu0 0.0
  %1698 = vmatpush2.msra.mxu0 0.0
  %1699 = vmatprep.subr.mxu0 0.0
  %1700 = vmatpush2.msra.mxu0 0.0
  %1701 = vmatprep.subr.mxu0 0.0
  %1702 = vmatpush2.msra.mxu0 0.0
  %1703 = vmatprep.subr.mxu0 0.0
  %1704 = vmatpush2.msra.mxu0 0.0
  %1705 = vmatprep.subr.mxu0 0.0
  %1706 = vmatpush2.msra.mxu0 0.0
  %1707 = vmatprep.subr.mxu0 0.0
  %1708 = vmatpush2.msra.mxu0 0.0
  %1709 = vmatprep.subr.mxu0 0.0
  %1710 = vmatpush2.msra.mxu0 0.0
  %1711 = vmatprep.subr.mxu0 0.0
  %1712 = vmatpush2.msra.mxu0 0.0
  %1713 = vmatprep.mubr.f32.mxu0 0.0
  %1714 = vmatmul.mubr.f32.gmra.mxu0 %v1638
  %v1715 = vpop.f32.mrf.mxu0
  %v1716 = vadd.f32 0.0, %v1715
  %v1717 = vpop.f32.mrf.mxu0
  %1718 = vmatprep.mubr.f32.mxu0 0.0
  %1719 = vmatmul.mubr.f32.gmra.mxu0 %v1641
  %v1720 = vpop.f32.mrf.mxu0
  %v1721 = vadd.f32 0.0, %v1720
  %v1722 = vpop.f32.mrf.mxu0
  %1723 = vmatprep.mubr.f32.mxu0 0.0
  %1724 = vmatmul.mubr.f32.gmra.mxu0 %v1644
  %v1725 = vpop.f32.mrf.mxu0
  %v1726 = vadd.f32 0.0, %v1725
  %v1727 = vpop.f32.mrf.mxu0
  %1728 = vmatprep.mubr.f32.mxu0 0.0
  %1729 = vmatmul.mubr.f32.gmra.mxu0 %v1647
  %v1730 = vpop.f32.mrf.mxu0
  %v1731 = vadd.f32 0.0, %v1730
  %v1732 = vpop.f32.mrf.mxu0
  %1733 = vdwg.mxu0
  %v1734 = vadd.f32 %v1345, %v1716
  %v1735 = vadd.f32 %v1350, %v1721
  %v1736 = vadd.f32 %v1355, %v1726
  %v1737 = vadd.f32 %v1360, %v1731
  %1738 = vrot.lane.b32.xlu0 %v616, 104
  %v1739 = vpop.permute.xlu0 %1738
  %1740 = vrot.lane.b32.xlu0 %v617, 104
  %v1741 = vpop.permute.xlu0 %1740
  %1742 = vrot.lane.b32.xlu0 %v618, 104
  %v1743 = vpop.permute.xlu0 %1742
  %1744 = vrot.lane.b32.xlu0 %v619, 104
  %v1745 = vpop.permute.xlu0 %1744
  %1746 = vrot.lane.b32.xlu0 %v598, 72
  %v1747 = vpop.permute.xlu0 %1746
  %1748 = vrot.lane.b32.xlu0 %v603, 72
  %v1749 = vpop.permute.xlu0 %1748
  %1750 = vrot.lane.b32.xlu0 %v608, 72
  %v1751 = vpop.permute.xlu0 %1750
  %1752 = vrot.lane.b32.xlu0 %v613, 72
  %v1753 = vpop.permute.xlu0 %1752
  %v1754 = vsel %vm632, %v1739, 0
  %v1756 = vsel %vm632, %v1741, 0
  %v1758 = vsel %vm632, %v1743, 0
  %v1760 = vsel %vm632, %v1745, 0
  %v1762 = vsel %vm632, %v1747, 0
  %v1764 = vsel %vm632, %v1749, 0
  %v1766 = vsel %vm632, %v1751, 0
  %v1768 = vsel %vm632, %v1753, 0
  %1770 = vmatprep.subr.mxu0 0.0
  %1771 = vmatpush1.xpose.msra.mxu0 0.0
  %1772 = vmatprep.subr.mxu0 0.0
  %1773 = vmatpush1.xpose.msra.mxu0 0.0
  %1774 = vmatprep.subr.mxu0 0.0
  %1775 = vmatpush1.xpose.msra.mxu0 0.0
  %1776 = vmatprep.subr.mxu0 0.0
  %1777 = vmatpush1.xpose.msra.mxu0 0.0
  %1778 = vmatprep.subr.mxu0 0.0
  %1779 = vmatpush1.xpose.msra.mxu0 0.0
  %1780 = vmatprep.subr.mxu0 0.0
  %1781 = vmatpush1.xpose.msra.mxu0 0.0
  %1782 = vmatprep.subr.mxu0 0.0
  %1783 = vmatpush1.xpose.msra.mxu0 0.0
  %1784 = vmatprep.subr.mxu0 0.0
  %1785 = vmatpush1.xpose.msra.mxu0 0.0
  %1786 = vmatprep.subr.mxu0 0.0
  %1787 = vmatpush1.xpose.msra.mxu0 0.0
  %1788 = vmatprep.subr.mxu0 0.0
  %1789 = vmatpush1.xpose.msra.mxu0 0.0
  %1790 = vmatprep.subr.mxu0 0.0
  %1791 = vmatpush1.xpose.msra.mxu0 0.0
  %1792 = vmatprep.subr.mxu0 0.0
  %1793 = vmatpush1.xpose.msra.mxu0 0.0
  %1794 = vmatprep.subr.mxu0 0.0
  %1795 = vmatpush1.xpose.msra.mxu0 %v1768
  %1796 = vmatprep.subr.mxu0 0.0
  %1797 = vmatpush1.xpose.msra.mxu0 %v1766
  %1798 = vmatprep.subr.mxu0 0.0
  %1799 = vmatpush1.xpose.msra.mxu0 %v1764
  %1800 = vmatprep.subr.mxu0 0.0
  %1801 = vmatpush1.xpose.msra.mxu0 %v1762
  %1802 = vmatprep.subr.mxu0 0.0
  %1803 = vmatpush2.xpose.msra.mxu0 0.0
  %1804 = vmatprep.subr.mxu0 0.0
  %1805 = vmatpush2.xpose.msra.mxu0 0.0
  %1806 = vmatprep.subr.mxu0 0.0
  %1807 = vmatpush2.xpose.msra.mxu0 0.0
  %1808 = vmatprep.subr.mxu0 0.0
  %1809 = vmatpush2.xpose.msra.mxu0 0.0
  %1810 = vmatprep.subr.mxu0 0.0
  %1811 = vmatpush2.xpose.msra.mxu0 0.0
  %1812 = vmatprep.subr.mxu0 0.0
  %1813 = vmatpush2.xpose.msra.mxu0 0.0
  %1814 = vmatprep.subr.mxu0 0.0
  %1815 = vmatpush2.xpose.msra.mxu0 0.0
  %1816 = vmatprep.subr.mxu0 0.0
  %1817 = vmatpush2.xpose.msra.mxu0 0.0
  %1818 = vmatprep.subr.mxu0 0.0
  %1819 = vmatpush2.xpose.msra.mxu0 0.0
  %1820 = vmatprep.subr.mxu0 0.0
  %1821 = vmatpush2.xpose.msra.mxu0 0.0
  %1822 = vmatprep.subr.mxu0 0.0
  %1823 = vmatpush2.xpose.msra.mxu0 0.0
  %1824 = vmatprep.subr.mxu0 0.0
  %1825 = vmatpush2.xpose.msra.mxu0 0.0
  %1826 = vmatprep.subr.mxu0 0.0
  %1827 = vmatpush2.xpose.msra.mxu0 0.0
  %1828 = vmatprep.subr.mxu0 0.0
  %1829 = vmatpush2.xpose.msra.mxu0 0.0
  %1830 = vmatprep.subr.mxu0 0.0
  %1831 = vmatpush2.xpose.msra.mxu0 0.0
  %1832 = vmatprep.subr.mxu0 0.0
  %1833 = vmatpush2.xpose.msra.mxu0 0.0
  %1834 = vmatprep.mubr.f32.mxu0 0.0
  %1835 = vmatmul.mubr.f32.gmra.mxu0 %v1754
  %v1836 = vpop.f32.mrf.mxu0
  %v1837 = vadd.f32 0.0, %v1836
  %v1838 = vpop.f32.mrf.mxu0
  %1839 = vmatprep.mubr.f32.mxu0 0.0
  %1840 = vmatmul.mubr.f32.gmra.mxu0 %v1756
  %v1841 = vpop.f32.mrf.mxu0
  %v1842 = vadd.f32 0.0, %v1841
  %v1843 = vpop.f32.mrf.mxu0
  %1844 = vmatprep.mubr.f32.mxu0 0.0
  %1845 = vmatmul.mubr.f32.gmra.mxu0 %v1758
  %v1846 = vpop.f32.mrf.mxu0
  %v1847 = vadd.f32 0.0, %v1846
  %v1848 = vpop.f32.mrf.mxu0
  %1849 = vmatprep.mubr.f32.mxu0 0.0
  %1850 = vmatmul.mubr.f32.gmra.mxu0 %v1760
  %v1851 = vpop.f32.mrf.mxu0
  %v1852 = vadd.f32 0.0, %v1851
  %v1853 = vpop.f32.mrf.mxu0
  %1854 = vdwg.mxu0
  %v1855 = vsel %vm385, %v1837, -1e+30
  %v1856 = vsel %vm386, %v1842, -1e+30
  %v1857 = vsel %vm387, %v1847, -1e+30
  %v1858 = vsel %vm388, %v1852, -1e+30
  %v1859 = vsel %vm67, %v1855, -inf
  %1860 = vmax.xlane.f32.xlu0 %v1859
  %v1861 = vpop.xlane.xlu0 %1860
  %v1862 = vsel %vm67, %v1856, -inf
  %1863 = vmax.xlane.f32.xlu0 %v1862
  %v1864 = vpop.xlane.xlu0 %1863
  %v1865 = vsel %vm67, %v1857, -inf
  %1866 = vmax.xlane.f32.xlu0 %v1865
  %v1867 = vpop.xlane.xlu0 %1866
  %v1868 = vsel %vm67, %v1858, -inf
  %1869 = vmax.xlane.f32.xlu0 %v1868
  %v1870 = vpop.xlane.xlu0 %1869
  %v1871 = vsub.f32 %v1855, %v1861
  %v1872 = vsub.f32 %v1856, %v1864
  %v1873 = vsub.f32 %v1857, %v1867
  %v1874 = vsub.f32 %v1858, %v1870
  %v1875 = vmul.f32 %v1871, 1.442695
  %v1876 = vpow.pop %v1875
  %v1877 = vmul.f32 %v1872, 1.442695
  %v1878 = vpow.pop %v1877
  %v1879 = vmul.f32 %v1873, 1.442695
  %v1880 = vpow.pop %v1879
  %v1881 = vmul.f32 %v1874, 1.442695
  %v1882 = vpow.pop %v1881
  %v1883 = vsel %vm67, %v1876, 0.0
  %1884 = vadd.xlane.f32.xlu0 %v1883
  %v1885 = vpop.xlane.xlu0 %1884
  %v1886 = vsel %vm67, %v1878, 0.0
  %1887 = vadd.xlane.f32.xlu0 %v1886
  %v1888 = vpop.xlane.xlu0 %1887
  %v1889 = vsel %vm67, %v1880, 0.0
  %1890 = vadd.xlane.f32.xlu0 %v1889
  %v1891 = vpop.xlane.xlu0 %1890
  %v1892 = vsel %vm67, %v1882, 0.0
  %1893 = vadd.xlane.f32.xlu0 %v1892
  %v1894 = vpop.xlane.xlu0 %1893
  %v1895 = vrcp.pop %v1885
  %v1896 = vmul.f32 %v1876, %v1895
  %v1897 = vrcp.pop %v1888
  %v1898 = vmul.f32 %v1878, %v1897
  %v1899 = vrcp.pop %v1891
  %v1900 = vmul.f32 %v1880, %v1899
  %v1901 = vrcp.pop %v1894
  %v1902 = vmul.f32 %v1882, %v1901
  %1903 = vrot.lane.b32.xlu0 %v598, 40
  %v1904 = vpop.permute.xlu0 %1903
  %1905 = vrot.lane.b32.xlu0 %v603, 40
  %v1906 = vpop.permute.xlu0 %1905
  %1907 = vrot.lane.b32.xlu0 %v608, 40
  %v1908 = vpop.permute.xlu0 %1907
  %1909 = vrot.lane.b32.xlu0 %v613, 40
  %v1910 = vpop.permute.xlu0 %1909
  %v1916 = vsel %vm67, %v1896, 0
  %v1919 = vsel %vm67, %v1898, 0
  %v1922 = vsel %vm67, %v1900, 0
  %v1925 = vsel %vm67, %v1902, 0
  %1927 = vmatprep.subr.mxu0 0.0
  %1928 = vmatpush1.msra.mxu0 0.0
  %1929 = vmatprep.subr.mxu0 0.0
  %1930 = vmatpush1.msra.mxu0 0.0
  %1931 = vmatprep.subr.mxu0 0.0
  %1932 = vmatpush1.msra.mxu0 0.0
  %1933 = vmatprep.subr.mxu0 0.0
  %1934 = vmatpush1.msra.mxu0 0.0
  %1935 = vmatprep.subr.mxu0 0.0
  %1936 = vmatpush1.msra.mxu0 0.0
  %1937 = vmatprep.subr.mxu0 0.0
  %1938 = vmatpush1.msra.mxu0 0.0
  %1939 = vmatprep.subr.mxu0 0.0
  %1940 = vmatpush1.msra.mxu0 0.0
  %1941 = vmatprep.subr.mxu0 0.0
  %1942 = vmatpush1.msra.mxu0 0.0
  %1943 = vmatprep.subr.mxu0 0.0
  %1944 = vmatpush1.msra.mxu0 0.0
  %1945 = vmatprep.subr.mxu0 0.0
  %1946 = vmatpush1.msra.mxu0 0.0
  %1947 = vmatprep.subr.mxu0 0.0
  %1948 = vmatpush1.msra.mxu0 0.0
  %1949 = vmatprep.subr.mxu0 0.0
  %1950 = vmatpush1.msra.mxu0 0.0
  %1951 = vmatprep.subr.mxu0 0.0
  %1952 = vmatpush1.msra.mxu0 %v1910
  %1953 = vmatprep.subr.mxu0 0.0
  %1954 = vmatpush1.msra.mxu0 %v1908
  %1955 = vmatprep.subr.mxu0 0.0
  %1956 = vmatpush1.msra.mxu0 %v1906
  %1957 = vmatprep.subr.mxu0 0.0
  %1958 = vmatpush1.msra.mxu0 %v1904
  %1959 = vmatprep.subr.mxu0 0.0
  %1960 = vmatpush2.msra.mxu0 0.0
  %1961 = vmatprep.subr.mxu0 0.0
  %1962 = vmatpush2.msra.mxu0 0.0
  %1963 = vmatprep.subr.mxu0 0.0
  %1964 = vmatpush2.msra.mxu0 0.0
  %1965 = vmatprep.subr.mxu0 0.0
  %1966 = vmatpush2.msra.mxu0 0.0
  %1967 = vmatprep.subr.mxu0 0.0
  %1968 = vmatpush2.msra.mxu0 0.0
  %1969 = vmatprep.subr.mxu0 0.0
  %1970 = vmatpush2.msra.mxu0 0.0
  %1971 = vmatprep.subr.mxu0 0.0
  %1972 = vmatpush2.msra.mxu0 0.0
  %1973 = vmatprep.subr.mxu0 0.0
  %1974 = vmatpush2.msra.mxu0 0.0
  %1975 = vmatprep.subr.mxu0 0.0
  %1976 = vmatpush2.msra.mxu0 0.0
  %1977 = vmatprep.subr.mxu0 0.0
  %1978 = vmatpush2.msra.mxu0 0.0
  %1979 = vmatprep.subr.mxu0 0.0
  %1980 = vmatpush2.msra.mxu0 0.0
  %1981 = vmatprep.subr.mxu0 0.0
  %1982 = vmatpush2.msra.mxu0 0.0
  %1983 = vmatprep.subr.mxu0 0.0
  %1984 = vmatpush2.msra.mxu0 0.0
  %1985 = vmatprep.subr.mxu0 0.0
  %1986 = vmatpush2.msra.mxu0 0.0
  %1987 = vmatprep.subr.mxu0 0.0
  %1988 = vmatpush2.msra.mxu0 0.0
  %1989 = vmatprep.subr.mxu0 0.0
  %1990 = vmatpush2.msra.mxu0 0.0
  %1991 = vmatprep.mubr.f32.mxu0 0.0
  %1992 = vmatmul.mubr.f32.gmra.mxu0 %v1916
  %v1993 = vpop.f32.mrf.mxu0
  %v1994 = vadd.f32 0.0, %v1993
  %v1995 = vpop.f32.mrf.mxu0
  %1996 = vmatprep.mubr.f32.mxu0 0.0
  %1997 = vmatmul.mubr.f32.gmra.mxu0 %v1919
  %v1998 = vpop.f32.mrf.mxu0
  %v1999 = vadd.f32 0.0, %v1998
  %v2000 = vpop.f32.mrf.mxu0
  %2001 = vmatprep.mubr.f32.mxu0 0.0
  %2002 = vmatmul.mubr.f32.gmra.mxu0 %v1922
  %v2003 = vpop.f32.mrf.mxu0
  %v2004 = vadd.f32 0.0, %v2003
  %v2005 = vpop.f32.mrf.mxu0
  %2006 = vmatprep.mubr.f32.mxu0 0.0
  %2007 = vmatmul.mubr.f32.gmra.mxu0 %v1925
  %v2008 = vpop.f32.mrf.mxu0
  %v2009 = vadd.f32 0.0, %v2008
  %v2010 = vpop.f32.mrf.mxu0
  %2011 = vdwg.mxu0
  %v2013 = vsel %vm632, %v1994, 0
  %v2016 = vsel %vm632, %v1999, 0
  %v2019 = vsel %vm632, %v2004, 0
  %v2022 = vsel %vm632, %v2009, 0
  %2024 = vmatprep.subr.mxu0 0.0
  %2025 = vmatpush1.msra.mxu0 0.0
  %2026 = vmatprep.subr.mxu0 0.0
  %2027 = vmatpush1.msra.mxu0 0.0
  %2028 = vmatprep.subr.mxu0 0.0
  %2029 = vmatpush1.msra.mxu0 0.0
  %2030 = vmatprep.subr.mxu0 0.0
  %2031 = vmatpush1.msra.mxu0 0.0
  %2032 = vmatprep.subr.mxu0 0.0
  %2033 = vmatpush1.msra.mxu0 0.0
  %2034 = vmatprep.subr.mxu0 0.0
  %2035 = vmatpush1.msra.mxu0 0.0
  %2036 = vmatprep.subr.mxu0 0.0
  %2037 = vmatpush1.msra.mxu0 0.0
  %2038 = vmatprep.subr.mxu0 0.0
  %2039 = vmatpush1.msra.mxu0 0.0
  %2040 = vmatprep.subr.mxu0 0.0
  %2041 = vmatpush1.msra.mxu0 0.0
  %2042 = vmatprep.subr.mxu0 0.0
  %2043 = vmatpush1.msra.mxu0 0.0
  %2044 = vmatprep.subr.mxu0 0.0
  %2045 = vmatpush1.msra.mxu0 0.0
  %2046 = vmatprep.subr.mxu0 0.0
  %2047 = vmatpush1.msra.mxu0 0.0
  %2048 = vmatprep.subr.mxu0 0.0
  %2049 = vmatpush1.msra.mxu0 0.0
  %2050 = vmatprep.subr.mxu0 0.0
  %2051 = vmatpush1.msra.mxu0 0.0
  %2052 = vmatprep.subr.mxu0 0.0
  %2053 = vmatpush1.msra.mxu0 0.0
  %2054 = vmatprep.subr.mxu0 0.0
  %2055 = vmatpush1.msra.mxu0 %v401
  %2056 = vmatprep.subr.mxu0 0.0
  %2057 = vmatpush2.msra.mxu0 0.0
  %2058 = vmatprep.subr.mxu0 0.0
  %2059 = vmatpush2.msra.mxu0 0.0
  %2060 = vmatprep.subr.mxu0 0.0
  %2061 = vmatpush2.msra.mxu0 0.0
  %2062 = vmatprep.subr.mxu0 0.0
  %2063 = vmatpush2.msra.mxu0 0.0
  %2064 = vmatprep.subr.mxu0 0.0
  %2065 = vmatpush2.msra.mxu0 0.0
  %2066 = vmatprep.subr.mxu0 0.0
  %2067 = vmatpush2.msra.mxu0 0.0
  %2068 = vmatprep.subr.mxu0 0.0
  %2069 = vmatpush2.msra.mxu0 0.0
  %2070 = vmatprep.subr.mxu0 0.0
  %2071 = vmatpush2.msra.mxu0 0.0
  %2072 = vmatprep.subr.mxu0 0.0
  %2073 = vmatpush2.msra.mxu0 0.0
  %2074 = vmatprep.subr.mxu0 0.0
  %2075 = vmatpush2.msra.mxu0 0.0
  %2076 = vmatprep.subr.mxu0 0.0
  %2077 = vmatpush2.msra.mxu0 0.0
  %2078 = vmatprep.subr.mxu0 0.0
  %2079 = vmatpush2.msra.mxu0 0.0
  %2080 = vmatprep.subr.mxu0 0.0
  %2081 = vmatpush2.msra.mxu0 0.0
  %2082 = vmatprep.subr.mxu0 0.0
  %2083 = vmatpush2.msra.mxu0 0.0
  %2084 = vmatprep.subr.mxu0 0.0
  %2085 = vmatpush2.msra.mxu0 0.0
  %2086 = vmatprep.subr.mxu0 0.0
  %2087 = vmatpush2.msra.mxu0 0.0
  %2088 = vmatprep.mubr.f32.mxu0 0.0
  %2089 = vmatmul.mubr.f32.gmra.mxu0 %v2013
  %v2090 = vpop.f32.mrf.mxu0
  %v2091 = vadd.f32 0.0, %v2090
  %v2092 = vpop.f32.mrf.mxu0
  %2093 = vmatprep.mubr.f32.mxu0 0.0
  %2094 = vmatmul.mubr.f32.gmra.mxu0 %v2016
  %v2095 = vpop.f32.mrf.mxu0
  %v2096 = vadd.f32 0.0, %v2095
  %v2097 = vpop.f32.mrf.mxu0
  %2098 = vmatprep.mubr.f32.mxu0 0.0
  %2099 = vmatmul.mubr.f32.gmra.mxu0 %v2019
  %v2100 = vpop.f32.mrf.mxu0
  %v2101 = vadd.f32 0.0, %v2100
  %v2102 = vpop.f32.mrf.mxu0
  %2103 = vmatprep.mubr.f32.mxu0 0.0
  %2104 = vmatmul.mubr.f32.gmra.mxu0 %v2022
  %v2105 = vpop.f32.mrf.mxu0
  %v2106 = vadd.f32 0.0, %v2105
  %v2107 = vpop.f32.mrf.mxu0
  %2108 = vdwg.mxu0
  %v2109 = vadd.f32 %v1734, %v2091
  %v2110 = vadd.f32 %v1735, %v2096
  %v2111 = vadd.f32 %v1736, %v2101
  %v2112 = vadd.f32 %v1737, %v2106
  %v2113 = vadd.f32 %v363, %v2109
  %v2114 = vadd.f32 %v364, %v2110
  %v2115 = vadd.f32 %v365, %v2111
  %v2116 = vadd.f32 %v366, %v2112
  %v2117 = vlaneseq
  %v2118 = vshrl.u32 %v2117, 7
  %v2119 = vsub.s32 5, %v2118
  %v2120 = vrot.slane %v389, %v2119
  %v2121 = vadd.f32 %v2113, %v2120
  %v2122 = vadd.f32 %v2114, %v2120
  %v2123 = vadd.f32 %v2115, %v2120
  %v2124 = vadd.f32 %v2116, %v2120
  %v2125 = vsel %vm67, %v2121, 0.0
  %2126 = vadd.xlane.f32.xlu0 %v2125
  %v2127 = vpop.xlane.xlu0 %2126
  %v2128 = vsel %vm67, %v2122, 0.0
  %2129 = vadd.xlane.f32.xlu0 %v2128
  %v2130 = vpop.xlane.xlu0 %2129
  %v2131 = vsel %vm67, %v2123, 0.0
  %2132 = vadd.xlane.f32.xlu0 %v2131
  %v2133 = vpop.xlane.xlu0 %2132
  %v2134 = vsel %vm67, %v2124, 0.0
  %2135 = vadd.xlane.f32.xlu0 %v2134
  %v2136 = vpop.xlane.xlu0 %2135
  %v2137 = vmul.f32 %v2127, %v430
  %v2138 = vmul.f32 %v2130, %v430
  %v2139 = vmul.f32 %v2133, %v430
  %v2140 = vmul.f32 %v2136, %v430
  %v2141 = vsub.f32 %v2121, %v2137
  %v2142 = vsub.f32 %v2122, %v2138
  %v2143 = vsub.f32 %v2123, %v2139
  %v2144 = vsub.f32 %v2124, %v2140
  %v2145 = vmul.f32 %v2141, %v2141
  %v2146 = vmul.f32 %v2142, %v2142
  %v2147 = vmul.f32 %v2143, %v2143
  %v2148 = vmul.f32 %v2144, %v2144
  %v2149 = vsel %vm67, %v2145, 0.0
  %2150 = vadd.xlane.f32.xlu0 %v2149
  %v2151 = vpop.xlane.xlu0 %2150
  %v2152 = vsel %vm67, %v2146, 0.0
  %2153 = vadd.xlane.f32.xlu0 %v2152
  %v2154 = vpop.xlane.xlu0 %2153
  %v2155 = vsel %vm67, %v2147, 0.0
  %2156 = vadd.xlane.f32.xlu0 %v2155
  %v2157 = vpop.xlane.xlu0 %2156
  %v2158 = vsel %vm67, %v2148, 0.0
  %2159 = vadd.xlane.f32.xlu0 %v2158
  %v2160 = vpop.xlane.xlu0 %2159
  %v2161 = vmul.f32 %v2151, %v430
  %v2162 = vmul.f32 %v2154, %v430
  %v2163 = vmul.f32 %v2157, %v430
  %v2164 = vmul.f32 %v2160, %v430
  %v2165 = vadd.f32 %v2161, 1e-05
  %v2166 = vadd.f32 %v2162, 1e-05
  %v2167 = vadd.f32 %v2163, 1e-05
  %v2168 = vadd.f32 %v2164, 1e-05
  %v2169 = vrsqrt.pop %v2165
  %v2170 = vmul.f32 %v2165, %v2169
  %vm2171 = vcmp.eq.f32.partialorder %v2165, inf
  %v2172 = vsel %vm2171, %v2165, %v2170
  %vm2173 = vcmp.eq.f32.partialorder %v2165, 0.0
  %v2174 = vand.u32 %v2165, 2147483648
  %v2175 = vsel %vm2173, %v2174, %v2172
  %v2176 = vrsqrt.pop %v2166
  %v2177 = vmul.f32 %v2166, %v2176
  %vm2178 = vcmp.eq.f32.partialorder %v2166, inf
  %v2179 = vsel %vm2178, %v2166, %v2177
  %vm2180 = vcmp.eq.f32.partialorder %v2166, 0.0
  %v2181 = vand.u32 %v2166, 2147483648
  %v2182 = vsel %vm2180, %v2181, %v2179
  %v2183 = vrsqrt.pop %v2167
  %v2184 = vmul.f32 %v2167, %v2183
  %vm2185 = vcmp.eq.f32.partialorder %v2167, inf
  %v2186 = vsel %vm2185, %v2167, %v2184
  %vm2187 = vcmp.eq.f32.partialorder %v2167, 0.0
  %v2188 = vand.u32 %v2167, 2147483648
  %v2189 = vsel %vm2187, %v2188, %v2186
  %v2190 = vrsqrt.pop %v2168
  %v2191 = vmul.f32 %v2168, %v2190
  %vm2192 = vcmp.eq.f32.partialorder %v2168, inf
  %v2193 = vsel %vm2192, %v2168, %v2191
  %vm2194 = vcmp.eq.f32.partialorder %v2168, 0.0
  %v2195 = vand.u32 %v2168, 2147483648
  %v2196 = vsel %vm2194, %v2195, %v2193
  %v2197 = vrcp.pop %v2175
  %v2198 = vmul.f32 %v2141, %v2197
  %v2199 = vrcp.pop %v2182
  %v2200 = vmul.f32 %v2142, %v2199
  %v2201 = vrcp.pop %v2189
  %v2202 = vmul.f32 %v2143, %v2201
  %v2203 = vrcp.pop %v2196
  %v2204 = vmul.f32 %v2144, %v2203
  %v2205 = vlaneseq
  %v2206 = vshrl.u32 %v2205, 7
  %v2207 = vsub.s32 2, %v2206
  %v2208 = vrot.slane %v389, %v2207
  %v2209 = vmul.f32 %v2198, %v2208
  %v2210 = vmul.f32 %v2200, %v2208
  %v2211 = vmul.f32 %v2202, %v2208
  %v2212 = vmul.f32 %v2204, %v2208
  %v2213 = vlaneseq
  %v2214 = vshrl.u32 %v2213, 7
  %v2215 = vsub.s32 3, %v2214
  %v2216 = vrot.slane %v389, %v2215
  %v2217 = vadd.f32 %v2209, %v2216
  %v2218 = vadd.f32 %v2210, %v2216
  %v2219 = vadd.f32 %v2211, %v2216
  %v2220 = vadd.f32 %v2212, %v2216
  %v2221 = vlaneseq
  %v2222 = vshrl.u32 %v2221, 7
  %v2223 = vsub.s32 6, %v2222
  %v2224 = vrot.slane %v389, %v2223
  %v2226 = vsel %vm67, %v2217, 0
  %v2229 = vsel %vm67, %v2218, 0
  %v2232 = vsel %vm67, %v2219, 0
  %v2235 = vsel %vm67, %v2220, 0
  %2237 = vmatprep.subr.mxu0 0.0
  %2238 = vmatpush1.msra.mxu0 0.0
  %2239 = vmatprep.subr.mxu0 0.0
  %2240 = vmatpush1.msra.mxu0 0.0
  %2241 = vmatprep.subr.mxu0 0.0
  %2242 = vmatpush1.msra.mxu0 0.0
  %2243 = vmatprep.subr.mxu0 0.0
  %2244 = vmatpush1.msra.mxu0 0.0
  %2245 = vmatprep.subr.mxu0 0.0
  %2246 = vmatpush1.msra.mxu0 0.0
  %2247 = vmatprep.subr.mxu0 0.0
  %2248 = vmatpush1.msra.mxu0 0.0
  %2249 = vmatprep.subr.mxu0 0.0
  %2250 = vmatpush1.msra.mxu0 0.0
  %2251 = vmatprep.subr.mxu0 0.0
  %2252 = vmatpush1.msra.mxu0 0.0
  %2253 = vmatprep.subr.mxu0 0.0
  %2254 = vmatpush1.msra.mxu0 0.0
  %2255 = vmatprep.subr.mxu0 0.0
  %2256 = vmatpush1.msra.mxu0 0.0
  %2257 = vmatprep.subr.mxu0 0.0
  %2258 = vmatpush1.msra.mxu0 0.0
  %2259 = vmatprep.subr.mxu0 0.0
  %2260 = vmatpush1.msra.mxu0 0.0
  %2261 = vmatprep.subr.mxu0 0.0
  %2262 = vmatpush1.msra.mxu0 %v400
  %2263 = vmatprep.subr.mxu0 0.0
  %2264 = vmatpush1.msra.mxu0 %v397
  %2265 = vmatprep.subr.mxu0 0.0
  %2266 = vmatpush1.msra.mxu0 %v394
  %2267 = vmatprep.subr.mxu0 0.0
  %2268 = vmatpush1.msra.mxu0 %v391
  %2269 = vmatprep.subr.mxu0 0.0
  %2270 = vmatpush2.msra.mxu0 0.0
  %2271 = vmatprep.subr.mxu0 0.0
  %2272 = vmatpush2.msra.mxu0 0.0
  %2273 = vmatprep.subr.mxu0 0.0
  %2274 = vmatpush2.msra.mxu0 0.0
  %2275 = vmatprep.subr.mxu0 0.0
  %2276 = vmatpush2.msra.mxu0 0.0
  %2277 = vmatprep.subr.mxu0 0.0
  %2278 = vmatpush2.msra.mxu0 0.0
  %2279 = vmatprep.subr.mxu0 0.0
  %2280 = vmatpush2.msra.mxu0 0.0
  %2281 = vmatprep.subr.mxu0 0.0
  %2282 = vmatpush2.msra.mxu0 0.0
  %2283 = vmatprep.subr.mxu0 0.0
  %2284 = vmatpush2.msra.mxu0 0.0
  %2285 = vmatprep.subr.mxu0 0.0
  %2286 = vmatpush2.msra.mxu0 0.0
  %2287 = vmatprep.subr.mxu0 0.0
  %2288 = vmatpush2.msra.mxu0 0.0
  %2289 = vmatprep.subr.mxu0 0.0
  %2290 = vmatpush2.msra.mxu0 0.0
  %2291 = vmatprep.subr.mxu0 0.0
  %2292 = vmatpush2.msra.mxu0 0.0
  %2293 = vmatprep.subr.mxu0 0.0
  %2294 = vmatpush2.msra.mxu0 0.0
  %2295 = vmatprep.subr.mxu0 0.0
  %2296 = vmatpush2.msra.mxu0 0.0
  %2297 = vmatprep.subr.mxu0 0.0
  %2298 = vmatpush2.msra.mxu0 0.0
  %2299 = vmatprep.subr.mxu0 0.0
  %2300 = vmatpush2.msra.mxu0 0.0
  %2301 = vmatprep.mubr.f32.mxu0 0.0
  %2302 = vmatmul.mubr.f32.gmra.mxu0 %v2226
  %v2303 = vpop.f32.mrf.mxu0
  %v2304 = vadd.f32 %v2224, %v2303
  %v2305 = vpop.f32.mrf.mxu0
  %2306 = vmatprep.mubr.f32.mxu0 0.0
  %2307 = vmatmul.mubr.f32.gmra.mxu0 %v2229
  %v2308 = vpop.f32.mrf.mxu0
  %v2309 = vadd.f32 %v2224, %v2308
  %v2310 = vpop.f32.mrf.mxu0
  %2311 = vmatprep.mubr.f32.mxu0 0.0
  %2312 = vmatmul.mubr.f32.gmra.mxu0 %v2232
  %v2313 = vpop.f32.mrf.mxu0
  %v2314 = vadd.f32 %v2224, %v2313
  %v2315 = vpop.f32.mrf.mxu0
  %2316 = vmatprep.mubr.f32.mxu0 0.0
  %2317 = vmatmul.mubr.f32.gmra.mxu0 %v2235
  %v2318 = vpop.f32.mrf.mxu0
  %v2319 = vadd.f32 %v2224, %v2318
  %v2320 = vpop.f32.mrf.mxu0
  %2321 = vdwg.mxu0
  %v2322 = vmul.f32 %v2304, 0.5
  %v2323 = vmul.f32 %v2309, 0.5
  %v2324 = vmul.f32 %v2314, 0.5
  %v2325 = vmul.f32 %v2319, 0.5
  %v2326 = vmul.f32 %v2304, 0.70710677
  %v2327 = vmul.f32 %v2309, 0.70710677
  %v2328 = vmul.f32 %v2314, 0.70710677
  %v2329 = vmul.f32 %v2319, 0.70710677
  %vm2330 = vcmp.lt.f32.partialorder %v2326, 0.0
  %vm2331 = vcmp.lt.f32.partialorder %v2327, 0.0
  %vm2332 = vcmp.lt.f32.partialorder %v2328, 0.0
  %vm2333 = vcmp.lt.f32.partialorder %v2329, 0.0
  %v2334 = vsel %vm2330, -1.0, 1.0
  %v2335 = vsel %vm2331, -1.0, 1.0
  %v2336 = vsel %vm2332, -1.0, 1.0
  %v2337 = vsel %vm2333, -1.0, 1.0
  %v2338 = vand.u32 2147483647, %v2326
  %v2339 = vand.u32 2147483647, %v2327
  %v2340 = vand.u32 2147483647, %v2328
  %v2341 = vand.u32 2147483647, %v2329
  %v2342 = vmul.f32 %v2338, 0.3275911
  %v2343 = vmul.f32 %v2339, 0.3275911
  %v2344 = vmul.f32 %v2340, 0.3275911
  %v2345 = vmul.f32 %v2341, 0.3275911
  %v2346 = vadd.f32 %v2342, 1.0
  %v2347 = vadd.f32 %v2343, 1.0
  %v2348 = vadd.f32 %v2344, 1.0
  %v2349 = vadd.f32 %v2345, 1.0
  %v2350 = vrcp.pop %v2346
  %v2351 = vmul.f32 1.0, %v2350
  %v2352 = vrcp.pop %v2347
  %v2353 = vmul.f32 1.0, %v2352
  %v2354 = vrcp.pop %v2348
  %v2355 = vmul.f32 1.0, %v2354
  %v2356 = vrcp.pop %v2349
  %v2357 = vmul.f32 1.0, %v2356
  %v2358 = vmul.f32 %v2351, 1.0614054
  %v2359 = vmul.f32 %v2353, 1.0614054
  %v2360 = vmul.f32 %v2355, 1.0614054
  %v2361 = vmul.f32 %v2357, 1.0614054
  %v2362 = vadd.f32 %v2358, -1.4531521
  %v2363 = vadd.f32 %v2359, -1.4531521
  %v2364 = vadd.f32 %v2360, -1.4531521
  %v2365 = vadd.f32 %v2361, -1.4531521
  %v2366 = vmul.f32 %v2362, %v2351
  %v2367 = vmul.f32 %v2363, %v2353
  %v2368 = vmul.f32 %v2364, %v2355
  %v2369 = vmul.f32 %v2365, %v2357
  %v2370 = vadd.f32 %v2366, 1.4214138
  %v2371 = vadd.f32 %v2367, 1.4214138
  %v2372 = vadd.f32 %v2368, 1.4214138
  %v2373 = vadd.f32 %v2369, 1.4214138
  %v2374 = vmul.f32 %v2370, %v2351
  %v2375 = vmul.f32 %v2371, %v2353
  %v2376 = vmul.f32 %v2372, %v2355
  %v2377 = vmul.f32 %v2373, %v2357
  %v2378 = vadd.f32 %v2374, -0.28449672
  %v2379 = vadd.f32 %v2375, -0.28449672
  %v2380 = vadd.f32 %v2376, -0.28449672
  %v2381 = vadd.f32 %v2377, -0.28449672
  %v2382 = vmul.f32 %v2378, %v2351
  %v2383 = vmul.f32 %v2379, %v2353
  %v2384 = vmul.f32 %v2380, %v2355
  %v2385 = vmul.f32 %v2381, %v2357
  %v2386 = vadd.f32 %v2382, 0.2548296
  %v2387 = vadd.f32 %v2383, 0.2548296
  %v2388 = vadd.f32 %v2384, 0.2548296
  %v2389 = vadd.f32 %v2385, 0.2548296
  %v2390 = vmul.f32 %v2386, %v2351
  %v2391 = vmul.f32 %v2387, %v2353
  %v2392 = vmul.f32 %v2388, %v2355
  %v2393 = vmul.f32 %v2389, %v2357
  %v2394 = vsub.f32 0.0, %v2338
  %v2395 = vsub.f32 0.0, %v2339
  %v2396 = vsub.f32 0.0, %v2340
  %v2397 = vsub.f32 0.0, %v2341
  %v2398 = vmul.f32 %v2394, %v2338
  %v2399 = vmul.f32 %v2395, %v2339
  %v2400 = vmul.f32 %v2396, %v2340
  %v2401 = vmul.f32 %v2397, %v2341
  %v2402 = vmul.f32 %v2398, 1.442695
  %v2403 = vpow.pop %v2402
  %v2404 = vmul.f32 %v2399, 1.442695
  %v2405 = vpow.pop %v2404
  %v2406 = vmul.f32 %v2400, 1.442695
  %v2407 = vpow.pop %v2406
  %v2408 = vmul.f32 %v2401, 1.442695
  %v2409 = vpow.pop %v2408
  %v2410 = vmul.f32 %v2390, %v2403
  %v2411 = vmul.f32 %v2391, %v2405
  %v2412 = vmul.f32 %v2392, %v2407
  %v2413 = vmul.f32 %v2393, %v2409
  %v2414 = vsub.f32 1.0, %v2410
  %v2415 = vsub.f32 1.0, %v2411
  %v2416 = vsub.f32 1.0, %v2412
  %v2417 = vsub.f32 1.0, %v2413
  %v2418 = vmul.f32 %v2334, %v2414
  %v2419 = vmul.f32 %v2335, %v2415
  %v2420 = vmul.f32 %v2336, %v2416
  %v2421 = vmul.f32 %v2337, %v2417
  %v2422 = vadd.f32 %v2418, 1.0
  %v2423 = vadd.f32 %v2419, 1.0
  %v2424 = vadd.f32 %v2420, 1.0
  %v2425 = vadd.f32 %v2421, 1.0
  %v2426 = vmul.f32 %v2322, %v2422
  %v2427 = vmul.f32 %v2323, %v2423
  %v2428 = vmul.f32 %v2324, %v2424
  %v2429 = vmul.f32 %v2325, %v2425
  %2430 = vmatprep.subr.mxu0 0.0
  %2431 = vmatpush1.msra.mxu0 %v417
  %2432 = vmatprep.subr.mxu0 0.0
  %2433 = vmatpush1.msra.mxu0 %v416
  %2434 = vmatprep.subr.mxu0 0.0
  %2435 = vmatpush1.msra.mxu0 %v415
  %2436 = vmatprep.subr.mxu0 0.0
  %2437 = vmatpush1.msra.mxu0 %v414
  %2438 = vmatprep.subr.mxu0 0.0
  %2439 = vmatpush1.msra.mxu0 %v413
  %2440 = vmatprep.subr.mxu0 0.0
  %2441 = vmatpush1.msra.mxu0 %v412
  %2442 = vmatprep.subr.mxu0 0.0
  %2443 = vmatpush1.msra.mxu0 %v411
  %2444 = vmatprep.subr.mxu0 0.0
  %2445 = vmatpush1.msra.mxu0 %v410
  %2446 = vmatprep.subr.mxu0 0.0
  %2447 = vmatpush1.msra.mxu0 %v409
  %2448 = vmatprep.subr.mxu0 0.0
  %2449 = vmatpush1.msra.mxu0 %v408
  %2450 = vmatprep.subr.mxu0 0.0
  %2451 = vmatpush1.msra.mxu0 %v407
  %2452 = vmatprep.subr.mxu0 0.0
  %2453 = vmatpush1.msra.mxu0 %v406
  %2454 = vmatprep.subr.mxu0 0.0
  %2455 = vmatpush1.msra.mxu0 %v405
  %2456 = vmatprep.subr.mxu0 0.0
  %2457 = vmatpush1.msra.mxu0 %v404
  %2458 = vmatprep.subr.mxu0 0.0
  %2459 = vmatpush1.msra.mxu0 %v403
  %2460 = vmatprep.subr.mxu0 0.0
  %2461 = vmatpush1.msra.mxu0 %v402
  %2462 = vmatprep.subr.mxu0 0.0
  %2463 = vmatpush2.msra.mxu0 0.0
  %2464 = vmatprep.subr.mxu0 0.0
  %2465 = vmatpush2.msra.mxu0 0.0
  %2466 = vmatprep.subr.mxu0 0.0
  %2467 = vmatpush2.msra.mxu0 0.0
  %2468 = vmatprep.subr.mxu0 0.0
  %2469 = vmatpush2.msra.mxu0 0.0
  %2470 = vmatprep.subr.mxu0 0.0
  %2471 = vmatpush2.msra.mxu0 0.0
  %2472 = vmatprep.subr.mxu0 0.0
  %2473 = vmatpush2.msra.mxu0 0.0
  %2474 = vmatprep.subr.mxu0 0.0
  %2475 = vmatpush2.msra.mxu0 0.0
  %2476 = vmatprep.subr.mxu0 0.0
  %2477 = vmatpush2.msra.mxu0 0.0
  %2478 = vmatprep.subr.mxu0 0.0
  %2479 = vmatpush2.msra.mxu0 0.0
  %2480 = vmatprep.subr.mxu0 0.0
  %2481 = vmatpush2.msra.mxu0 0.0
  %2482 = vmatprep.subr.mxu0 0.0
  %2483 = vmatpush2.msra.mxu0 0.0
  %2484 = vmatprep.subr.mxu0 0.0
  %2485 = vmatpush2.msra.mxu0 0.0
  %2486 = vmatprep.subr.mxu0 0.0
  %2487 = vmatpush2.msra.mxu0 0.0
  %2488 = vmatprep.subr.mxu0 0.0
  %2489 = vmatpush2.msra.mxu0 0.0
  %2490 = vmatprep.subr.mxu0 0.0
  %2491 = vmatpush2.msra.mxu0 0.0
  %2492 = vmatprep.subr.mxu0 0.0
  %2493 = vmatpush2.msra.mxu0 0.0
  %2494 = vmatprep.mubr.f32.mxu0 0.0
  %2495 = vmatmul.mubr.f32.gmra.mxu0 %v2426
  %v2496 = vpop.f32.mrf.mxu0
  %v2497 = vadd.f32 0.0, %v2496
  %v2498 = vpop.f32.mrf.mxu0
  %2499 = vmatprep.mubr.f32.mxu0 0.0
  %2500 = vmatmul.mubr.f32.gmra.mxu0 %v2427
  %v2501 = vpop.f32.mrf.mxu0
  %v2502 = vadd.f32 0.0, %v2501
  %v2503 = vpop.f32.mrf.mxu0
  %2504 = vmatprep.mubr.f32.mxu0 0.0
  %2505 = vmatmul.mubr.f32.gmra.mxu0 %v2428
  %v2506 = vpop.f32.mrf.mxu0
  %v2507 = vadd.f32 0.0, %v2506
  %v2508 = vpop.f32.mrf.mxu0
  %2509 = vmatprep.mubr.f32.mxu0 0.0
  %2510 = vmatmul.mubr.f32.gmra.mxu0 %v2429
  %v2511 = vpop.f32.mrf.mxu0
  %v2512 = vadd.f32 0.0, %v2511
  %v2513 = vpop.f32.mrf.mxu0
  %2514 = vdwg.mxu0
  %v2515 = vadd.f32 %v2121, %v2497
  %v2516 = vadd.f32 %v2122, %v2502
  %v2517 = vadd.f32 %v2123, %v2507
  %v2518 = vadd.f32 %v2124, %v2512
  %v2519 = vlaneseq
  %v2520 = vshrl.u32 %v2519, 7
  %v2521 = vsub.s32 7, %v2520
  %v2522 = vrot.slane %v389, %v2521
  %v2523 = vadd.f32 %v2515, %v2522
  %v2524 = vadd.f32 %v2516, %v2522
  %v2525 = vadd.f32 %v2517, %v2522
  %v2526 = vadd.f32 %v2518, %v2522
  %s2527 = scalar_lea.vmem %s3, 8
  %v2528 = vld [vmem:[%s2527] sm:$0xff]
  %s2529 = scalar_lea.vmem %s4, 96
  %v2530 = vld [vmem:[%s2529] sm:$0xff]
  %v2531 = vld [vmem:[%s2529 + $0x8] sm:$0xff]
  %v2532 = vld [vmem:[%s2529 + $0x10] sm:$0xff]
  %v2533 = vld [vmem:[%s2529 + $0x18] sm:$0xff]
  %v2534 = vld [vmem:[%s2529 + $0x20] sm:$0xff]
  %v2535 = vld [vmem:[%s2529 + $0x28] sm:$0xff]
  %v2536 = vld [vmem:[%s2529 + $0x30] sm:$0xff]
  %v2537 = vld [vmem:[%s2529 + $0x38] sm:$0xff]
  %v2538 = vld [vmem:[%s2529 + $0x40] sm:$0xff]
  %v2539 = vld [vmem:[%s2529 + $0x48] sm:$0xff]
  %v2540 = vld [vmem:[%s2529 + $0x50] sm:$0xff]
  %v2541 = vld [vmem:[%s2529 + $0x58] sm:$0xff]
  %s2542 = scalar_lea.vmem %s5, 128
  %v2543 = vld [vmem:[%s2542] sm:$0xff]
  %v2544 = vld [vmem:[%s2542 + $0x8] sm:$0xff]
  %v2545 = vld [vmem:[%s2542 + $0x10] sm:$0xff]
  %v2546 = vld [vmem:[%s2542 + $0x18] sm:$0xff]
  %v2547 = vld [vmem:[%s2542 + $0x20] sm:$0xff]
  %v2548 = vld [vmem:[%s2542 + $0x28] sm:$0xff]
  %v2549 = vld [vmem:[%s2542 + $0x30] sm:$0xff]
  %v2550 = vld [vmem:[%s2542 + $0x38] sm:$0xff]
  %v2551 = vld [vmem:[%s2542 + $0x40] sm:$0xff]
  %v2552 = vld [vmem:[%s2542 + $0x48] sm:$0xff]
  %v2553 = vld [vmem:[%s2542 + $0x50] sm:$0xff]
  %v2554 = vld [vmem:[%s2542 + $0x58] sm:$0xff]
  %v2555 = vld [vmem:[%s2542 + $0x60] sm:$0xff]
  %v2556 = vld [vmem:[%s2542 + $0x68] sm:$0xff]
  %v2557 = vld [vmem:[%s2542 + $0x70] sm:$0xff]
  %v2558 = vld [vmem:[%s2542 + $0x78] sm:$0xff]
  %v2559 = vsel %vm67, %v2523, 0.0
  %2560 = vadd.xlane.f32.xlu0 %v2559
  %v2561 = vpop.xlane.xlu0 %2560
  %v2562 = vsel %vm67, %v2524, 0.0
  %2563 = vadd.xlane.f32.xlu0 %v2562
  %v2564 = vpop.xlane.xlu0 %2563
  %v2565 = vsel %vm67, %v2525, 0.0
  %2566 = vadd.xlane.f32.xlu0 %v2565
  %v2567 = vpop.xlane.xlu0 %2566
  %v2568 = vsel %vm67, %v2526, 0.0
  %2569 = vadd.xlane.f32.xlu0 %v2568
  %v2570 = vpop.xlane.xlu0 %2569
  %v2571 = vmul.f32 %v2561, %v430
  %v2572 = vmul.f32 %v2564, %v430
  %v2573 = vmul.f32 %v2567, %v430
  %v2574 = vmul.f32 %v2570, %v430
  %v2575 = vsub.f32 %v2523, %v2571
  %v2576 = vsub.f32 %v2524, %v2572
  %v2577 = vsub.f32 %v2525, %v2573
  %v2578 = vsub.f32 %v2526, %v2574
  %v2579 = vmul.f32 %v2575, %v2575
  %v2580 = vmul.f32 %v2576, %v2576
  %v2581 = vmul.f32 %v2577, %v2577
  %v2582 = vmul.f32 %v2578, %v2578
  %v2583 = vsel %vm67, %v2579, 0.0
  %2584 = vadd.xlane.f32.xlu0 %v2583
  %v2585 = vpop.xlane.xlu0 %2584
  %v2586 = vsel %vm67, %v2580, 0.0
  %2587 = vadd.xlane.f32.xlu0 %v2586
  %v2588 = vpop.xlane.xlu0 %2587
  %v2589 = vsel %vm67, %v2581, 0.0
  %2590 = vadd.xlane.f32.xlu0 %v2589
  %v2591 = vpop.xlane.xlu0 %2590
  %v2592 = vsel %vm67, %v2582, 0.0
  %2593 = vadd.xlane.f32.xlu0 %v2592
  %v2594 = vpop.xlane.xlu0 %2593
  %v2595 = vmul.f32 %v2585, %v430
  %v2596 = vmul.f32 %v2588, %v430
  %v2597 = vmul.f32 %v2591, %v430
  %v2598 = vmul.f32 %v2594, %v430
  %v2599 = vadd.f32 %v2595, 1e-05
  %v2600 = vadd.f32 %v2596, 1e-05
  %v2601 = vadd.f32 %v2597, 1e-05
  %v2602 = vadd.f32 %v2598, 1e-05
  %v2603 = vrsqrt.pop %v2599
  %v2604 = vmul.f32 %v2599, %v2603
  %vm2605 = vcmp.eq.f32.partialorder %v2599, inf
  %v2606 = vsel %vm2605, %v2599, %v2604
  %vm2607 = vcmp.eq.f32.partialorder %v2599, 0.0
  %v2608 = vand.u32 %v2599, 2147483648
  %v2609 = vsel %vm2607, %v2608, %v2606
  %v2610 = vrsqrt.pop %v2600
  %v2611 = vmul.f32 %v2600, %v2610
  %vm2612 = vcmp.eq.f32.partialorder %v2600, inf
  %v2613 = vsel %vm2612, %v2600, %v2611
  %vm2614 = vcmp.eq.f32.partialorder %v2600, 0.0
  %v2615 = vand.u32 %v2600, 2147483648
  %v2616 = vsel %vm2614, %v2615, %v2613
  %v2617 = vrsqrt.pop %v2601
  %v2618 = vmul.f32 %v2601, %v2617
  %vm2619 = vcmp.eq.f32.partialorder %v2601, inf
  %v2620 = vsel %vm2619, %v2601, %v2618
  %vm2621 = vcmp.eq.f32.partialorder %v2601, 0.0
  %v2622 = vand.u32 %v2601, 2147483648
  %v2623 = vsel %vm2621, %v2622, %v2620
  %v2624 = vrsqrt.pop %v2602
  %v2625 = vmul.f32 %v2602, %v2624
  %vm2626 = vcmp.eq.f32.partialorder %v2602, inf
  %v2627 = vsel %vm2626, %v2602, %v2625
  %vm2628 = vcmp.eq.f32.partialorder %v2602, 0.0
  %v2629 = vand.u32 %v2602, 2147483648
  %v2630 = vsel %vm2628, %v2629, %v2627
  %v2631 = vrcp.pop %v2609
  %v2632 = vmul.f32 %v2575, %v2631
  %v2633 = vrcp.pop %v2616
  %v2634 = vmul.f32 %v2576, %v2633
  %v2635 = vrcp.pop %v2623
  %v2636 = vmul.f32 %v2577, %v2635
  %v2637 = vrcp.pop %v2630
  %v2638 = vmul.f32 %v2578, %v2637
  %v2639 = vlaneseq
  %v2640 = vshrl.u32 %v2639, 7
  %v2641 = vsub.s32 0, %v2640
  %v2642 = vrot.slane %v2528, %v2641
  %v2643 = vmul.f32 %v2632, %v2642
  %v2644 = vmul.f32 %v2634, %v2642
  %v2645 = vmul.f32 %v2636, %v2642
  %v2646 = vmul.f32 %v2638, %v2642
  %v2647 = vlaneseq
  %v2648 = vshrl.u32 %v2647, 7
  %v2649 = vsub.s32 1, %v2648
  %v2650 = vrot.slane %v2528, %v2649
  %v2651 = vadd.f32 %v2643, %v2650
  %v2652 = vadd.f32 %v2644, %v2650
  %v2653 = vadd.f32 %v2645, %v2650
  %v2654 = vadd.f32 %v2646, %v2650
  %v2655 = vlaneseq
  %v2656 = vshrl.u32 %v2655, 7
  %v2657 = vsub.s32 4, %v2656
  %v2658 = vrot.slane %v2528, %v2657
  %v2660 = vsel %vm67, %v2651, 0
  %v2663 = vsel %vm67, %v2652, 0
  %v2666 = vsel %vm67, %v2653, 0
  %v2669 = vsel %vm67, %v2654, 0
  %2671 = vmatprep.subr.mxu0 0.0
  %2672 = vmatpush1.msra.mxu0 0.0
  %2673 = vmatprep.subr.mxu0 0.0
  %2674 = vmatpush1.msra.mxu0 0.0
  %2675 = vmatprep.subr.mxu0 0.0
  %2676 = vmatpush1.msra.mxu0 0.0
  %2677 = vmatprep.subr.mxu0 0.0
  %2678 = vmatpush1.msra.mxu0 0.0
  %2679 = vmatprep.subr.mxu0 0.0
  %2680 = vmatpush1.msra.mxu0 0.0
  %2681 = vmatprep.subr.mxu0 0.0
  %2682 = vmatpush1.msra.mxu0 0.0
  %2683 = vmatprep.subr.mxu0 0.0
  %2684 = vmatpush1.msra.mxu0 0.0
  %2685 = vmatprep.subr.mxu0 0.0
  %2686 = vmatpush1.msra.mxu0 0.0
  %2687 = vmatprep.subr.mxu0 0.0
  %2688 = vmatpush1.msra.mxu0 0.0
  %2689 = vmatprep.subr.mxu0 0.0
  %2690 = vmatpush1.msra.mxu0 0.0
  %2691 = vmatprep.subr.mxu0 0.0
  %2692 = vmatpush1.msra.mxu0 0.0
  %2693 = vmatprep.subr.mxu0 0.0
  %2694 = vmatpush1.msra.mxu0 0.0
  %2695 = vmatprep.subr.mxu0 0.0
  %2696 = vmatpush1.msra.mxu0 %v2539
  %2697 = vmatprep.subr.mxu0 0.0
  %2698 = vmatpush1.msra.mxu0 %v2536
  %2699 = vmatprep.subr.mxu0 0.0
  %2700 = vmatpush1.msra.mxu0 %v2533
  %2701 = vmatprep.subr.mxu0 0.0
  %2702 = vmatpush1.msra.mxu0 %v2530
  %2703 = vmatprep.subr.mxu0 0.0
  %2704 = vmatpush2.msra.mxu0 0.0
  %2705 = vmatprep.subr.mxu0 0.0
  %2706 = vmatpush2.msra.mxu0 0.0
  %2707 = vmatprep.subr.mxu0 0.0
  %2708 = vmatpush2.msra.mxu0 0.0
  %2709 = vmatprep.subr.mxu0 0.0
  %2710 = vmatpush2.msra.mxu0 0.0
  %2711 = vmatprep.subr.mxu0 0.0
  %2712 = vmatpush2.msra.mxu0 0.0
  %2713 = vmatprep.subr.mxu0 0.0
  %2714 = vmatpush2.msra.mxu0 0.0
  %2715 = vmatprep.subr.mxu0 0.0
  %2716 = vmatpush2.msra.mxu0 0.0
  %2717 = vmatprep.subr.mxu0 0.0
  %2718 = vmatpush2.msra.mxu0 0.0
  %2719 = vmatprep.subr.mxu0 0.0
  %2720 = vmatpush2.msra.mxu0 0.0
  %2721 = vmatprep.subr.mxu0 0.0
  %2722 = vmatpush2.msra.mxu0 0.0
  %2723 = vmatprep.subr.mxu0 0.0
  %2724 = vmatpush2.msra.mxu0 0.0
  %2725 = vmatprep.subr.mxu0 0.0
  %2726 = vmatpush2.msra.mxu0 0.0
  %2727 = vmatprep.subr.mxu0 0.0
  %2728 = vmatpush2.msra.mxu0 0.0
  %2729 = vmatprep.subr.mxu0 0.0
  %2730 = vmatpush2.msra.mxu0 0.0
  %2731 = vmatprep.subr.mxu0 0.0
  %2732 = vmatpush2.msra.mxu0 0.0
  %2733 = vmatprep.subr.mxu0 0.0
  %2734 = vmatpush2.msra.mxu0 0.0
  %2735 = vmatprep.mubr.f32.mxu0 0.0
  %2736 = vmatmul.mubr.f32.gmra.mxu0 %v2660
  %v2737 = vpop.f32.mrf.mxu0
  %v2738 = vadd.f32 %v2658, %v2737
  %v2739 = vpop.f32.mrf.mxu0
  %2740 = vmatprep.mubr.f32.mxu0 0.0
  %2741 = vmatmul.mubr.f32.gmra.mxu0 %v2663
  %v2742 = vpop.f32.mrf.mxu0
  %v2743 = vadd.f32 %v2658, %v2742
  %v2744 = vpop.f32.mrf.mxu0
  %2745 = vmatprep.mubr.f32.mxu0 0.0
  %2746 = vmatmul.mubr.f32.gmra.mxu0 %v2666
  %v2747 = vpop.f32.mrf.mxu0
  %v2748 = vadd.f32 %v2658, %v2747
  %v2749 = vpop.f32.mrf.mxu0
  %2750 = vmatprep.mubr.f32.mxu0 0.0
  %2751 = vmatmul.mubr.f32.gmra.mxu0 %v2669
  %v2752 = vpop.f32.mrf.mxu0
  %v2753 = vadd.f32 %v2658, %v2752
  %v2754 = vpop.f32.mrf.mxu0
  %2755 = vdwg.mxu0
  %v2756 = vmul.f32 %v2738, 0.35355338
  %v2757 = vmul.f32 %v2743, 0.35355338
  %v2758 = vmul.f32 %v2748, 0.35355338
  %v2759 = vmul.f32 %v2753, 0.35355338
  %2764 = vrot.lane.b32.xlu0 %v2738, 96
  %v2765 = vpop.permute.xlu0 %2764
  %2766 = vrot.lane.b32.xlu0 %v2743, 96
  %v2767 = vpop.permute.xlu0 %2766
  %2768 = vrot.lane.b32.xlu0 %v2748, 96
  %v2769 = vpop.permute.xlu0 %2768
  %2770 = vrot.lane.b32.xlu0 %v2753, 96
  %v2771 = vpop.permute.xlu0 %2770
  %v2773 = vsel %vm632, %v2756, 0
  %v2776 = vsel %vm632, %v2757, 0
  %v2779 = vsel %vm632, %v2758, 0
  %v2782 = vsel %vm632, %v2759, 0
  %v2784 = vsel %vm632, %v2765, 0
  %v2786 = vsel %vm632, %v2767, 0
  %v2788 = vsel %vm632, %v2769, 0
  %v2790 = vsel %vm632, %v2771, 0
  %2792 = vmatprep.subr.mxu0 0.0
  %2793 = vmatpush1.xpose.msra.mxu0 0.0
  %2794 = vmatprep.subr.mxu0 0.0
  %2795 = vmatpush1.xpose.msra.mxu0 0.0
  %2796 = vmatprep.subr.mxu0 0.0
  %2797 = vmatpush1.xpose.msra.mxu0 0.0
  %2798 = vmatprep.subr.mxu0 0.0
  %2799 = vmatpush1.xpose.msra.mxu0 0.0
  %2800 = vmatprep.subr.mxu0 0.0
  %2801 = vmatpush1.xpose.msra.mxu0 0.0
  %2802 = vmatprep.subr.mxu0 0.0
  %2803 = vmatpush1.xpose.msra.mxu0 0.0
  %2804 = vmatprep.subr.mxu0 0.0
  %2805 = vmatpush1.xpose.msra.mxu0 0.0
  %2806 = vmatprep.subr.mxu0 0.0
  %2807 = vmatpush1.xpose.msra.mxu0 0.0
  %2808 = vmatprep.subr.mxu0 0.0
  %2809 = vmatpush1.xpose.msra.mxu0 0.0
  %2810 = vmatprep.subr.mxu0 0.0
  %2811 = vmatpush1.xpose.msra.mxu0 0.0
  %2812 = vmatprep.subr.mxu0 0.0
  %2813 = vmatpush1.xpose.msra.mxu0 0.0
  %2814 = vmatprep.subr.mxu0 0.0
  %2815 = vmatpush1.xpose.msra.mxu0 0.0
  %2816 = vmatprep.subr.mxu0 0.0
  %2817 = vmatpush1.xpose.msra.mxu0 %v2790
  %2818 = vmatprep.subr.mxu0 0.0
  %2819 = vmatpush1.xpose.msra.mxu0 %v2788
  %2820 = vmatprep.subr.mxu0 0.0
  %2821 = vmatpush1.xpose.msra.mxu0 %v2786
  %2822 = vmatprep.subr.mxu0 0.0
  %2823 = vmatpush1.xpose.msra.mxu0 %v2784
  %2824 = vmatprep.subr.mxu0 0.0
  %2825 = vmatpush2.xpose.msra.mxu0 0.0
  %2826 = vmatprep.subr.mxu0 0.0
  %2827 = vmatpush2.xpose.msra.mxu0 0.0
  %2828 = vmatprep.subr.mxu0 0.0
  %2829 = vmatpush2.xpose.msra.mxu0 0.0
  %2830 = vmatprep.subr.mxu0 0.0
  %2831 = vmatpush2.xpose.msra.mxu0 0.0
  %2832 = vmatprep.subr.mxu0 0.0
  %2833 = vmatpush2.xpose.msra.mxu0 0.0
  %2834 = vmatprep.subr.mxu0 0.0
  %2835 = vmatpush2.xpose.msra.mxu0 0.0
  %2836 = vmatprep.subr.mxu0 0.0
  %2837 = vmatpush2.xpose.msra.mxu0 0.0
  %2838 = vmatprep.subr.mxu0 0.0
  %2839 = vmatpush2.xpose.msra.mxu0 0.0
  %2840 = vmatprep.subr.mxu0 0.0
  %2841 = vmatpush2.xpose.msra.mxu0 0.0
  %2842 = vmatprep.subr.mxu0 0.0
  %2843 = vmatpush2.xpose.msra.mxu0 0.0
  %2844 = vmatprep.subr.mxu0 0.0
  %2845 = vmatpush2.xpose.msra.mxu0 0.0
  %2846 = vmatprep.subr.mxu0 0.0
  %2847 = vmatpush2.xpose.msra.mxu0 0.0
  %2848 = vmatprep.subr.mxu0 0.0
  %2849 = vmatpush2.xpose.msra.mxu0 0.0
  %2850 = vmatprep.subr.mxu0 0.0
  %2851 = vmatpush2.xpose.msra.mxu0 0.0
  %2852 = vmatprep.subr.mxu0 0.0
  %2853 = vmatpush2.xpose.msra.mxu0 0.0
  %2854 = vmatprep.subr.mxu0 0.0
  %2855 = vmatpush2.xpose.msra.mxu0 0.0
  %2856 = vmatprep.mubr.f32.mxu0 0.0
  %2857 = vmatmul.mubr.f32.gmra.mxu0 %v2773
  %v2858 = vpop.f32.mrf.mxu0
  %v2859 = vadd.f32 0.0, %v2858
  %v2860 = vpop.f32.mrf.mxu0
  %2861 = vmatprep.mubr.f32.mxu0 0.0
  %2862 = vmatmul.mubr.f32.gmra.mxu0 %v2776
  %v2863 = vpop.f32.mrf.mxu0
  %v2864 = vadd.f32 0.0, %v2863
  %v2865 = vpop.f32.mrf.mxu0
  %2866 = vmatprep.mubr.f32.mxu0 0.0
  %2867 = vmatmul.mubr.f32.gmra.mxu0 %v2779
  %v2868 = vpop.f32.mrf.mxu0
  %v2869 = vadd.f32 0.0, %v2868
  %v2870 = vpop.f32.mrf.mxu0
  %2871 = vmatprep.mubr.f32.mxu0 0.0
  %2872 = vmatmul.mubr.f32.gmra.mxu0 %v2782
  %v2873 = vpop.f32.mrf.mxu0
  %v2874 = vadd.f32 0.0, %v2873
  %v2875 = vpop.f32.mrf.mxu0
  %2876 = vdwg.mxu0
  %v2877 = vsel %vm385, %v2859, -1e+30
  %v2878 = vsel %vm386, %v2864, -1e+30
  %v2879 = vsel %vm387, %v2869, -1e+30
  %v2880 = vsel %vm388, %v2874, -1e+30
  %v2881 = vsel %vm67, %v2877, -inf
  %2882 = vmax.xlane.f32.xlu0 %v2881
  %v2883 = vpop.xlane.xlu0 %2882
  %v2884 = vsel %vm67, %v2878, -inf
  %2885 = vmax.xlane.f32.xlu0 %v2884
  %v2886 = vpop.xlane.xlu0 %2885
  %v2887 = vsel %vm67, %v2879, -inf
  %2888 = vmax.xlane.f32.xlu0 %v2887
  %v2889 = vpop.xlane.xlu0 %2888
  %v2890 = vsel %vm67, %v2880, -inf
  %2891 = vmax.xlane.f32.xlu0 %v2890
  %v2892 = vpop.xlane.xlu0 %2891
  %v2893 = vsub.f32 %v2877, %v2883
  %v2894 = vsub.f32 %v2878, %v2886
  %v2895 = vsub.f32 %v2879, %v2889
  %v2896 = vsub.f32 %v2880, %v2892
  %v2897 = vmul.f32 %v2893, 1.442695
  %v2898 = vpow.pop %v2897
  %v2899 = vmul.f32 %v2894, 1.442695
  %v2900 = vpow.pop %v2899
  %v2901 = vmul.f32 %v2895, 1.442695
  %v2902 = vpow.pop %v2901
  %v2903 = vmul.f32 %v2896, 1.442695
  %v2904 = vpow.pop %v2903
  %v2905 = vsel %vm67, %v2898, 0.0
  %2906 = vadd.xlane.f32.xlu0 %v2905
  %v2907 = vpop.xlane.xlu0 %2906
  %v2908 = vsel %vm67, %v2900, 0.0
  %2909 = vadd.xlane.f32.xlu0 %v2908
  %v2910 = vpop.xlane.xlu0 %2909
  %v2911 = vsel %vm67, %v2902, 0.0
  %2912 = vadd.xlane.f32.xlu0 %v2911
  %v2913 = vpop.xlane.xlu0 %2912
  %v2914 = vsel %vm67, %v2904, 0.0
  %2915 = vadd.xlane.f32.xlu0 %v2914
  %v2916 = vpop.xlane.xlu0 %2915
  %v2917 = vrcp.pop %v2907
  %v2918 = vmul.f32 %v2898, %v2917
  %v2919 = vrcp.pop %v2910
  %v2920 = vmul.f32 %v2900, %v2919
  %v2921 = vrcp.pop %v2913
  %v2922 = vmul.f32 %v2902, %v2921
  %v2923 = vrcp.pop %v2916
  %v2924 = vmul.f32 %v2904, %v2923
  %2925 = vrot.lane.b32.xlu0 %v2738, 64
  %v2926 = vpop.permute.xlu0 %2925
  %2927 = vrot.lane.b32.xlu0 %v2743, 64
  %v2928 = vpop.permute.xlu0 %2927
  %2929 = vrot.lane.b32.xlu0 %v2748, 64
  %v2930 = vpop.permute.xlu0 %2929
  %2931 = vrot.lane.b32.xlu0 %v2753, 64
  %v2932 = vpop.permute.xlu0 %2931
  %v2938 = vsel %vm67, %v2918, 0
  %v2941 = vsel %vm67, %v2920, 0
  %v2944 = vsel %vm67, %v2922, 0
  %v2947 = vsel %vm67, %v2924, 0
  %2949 = vmatprep.subr.mxu0 0.0
  %2950 = vmatpush1.msra.mxu0 0.0
  %2951 = vmatprep.subr.mxu0 0.0
  %2952 = vmatpush1.msra.mxu0 0.0
  %2953 = vmatprep.subr.mxu0 0.0
  %2954 = vmatpush1.msra.mxu0 0.0
  %2955 = vmatprep.subr.mxu0 0.0
  %2956 = vmatpush1.msra.mxu0 0.0
  %2957 = vmatprep.subr.mxu0 0.0
  %2958 = vmatpush1.msra.mxu0 0.0
  %2959 = vmatprep.subr.mxu0 0.0
  %2960 = vmatpush1.msra.mxu0 0.0
  %2961 = vmatprep.subr.mxu0 0.0
  %2962 = vmatpush1.msra.mxu0 0.0
  %2963 = vmatprep.subr.mxu0 0.0
  %2964 = vmatpush1.msra.mxu0 0.0
  %2965 = vmatprep.subr.mxu0 0.0
  %2966 = vmatpush1.msra.mxu0 0.0
  %2967 = vmatprep.subr.mxu0 0.0
  %2968 = vmatpush1.msra.mxu0 0.0
  %2969 = vmatprep.subr.mxu0 0.0
  %2970 = vmatpush1.msra.mxu0 0.0
  %2971 = vmatprep.subr.mxu0 0.0
  %2972 = vmatpush1.msra.mxu0 0.0
  %2973 = vmatprep.subr.mxu0 0.0
  %2974 = vmatpush1.msra.mxu0 %v2932
  %2975 = vmatprep.subr.mxu0 0.0
  %2976 = vmatpush1.msra.mxu0 %v2930
  %2977 = vmatprep.subr.mxu0 0.0
  %2978 = vmatpush1.msra.mxu0 %v2928
  %2979 = vmatprep.subr.mxu0 0.0
  %2980 = vmatpush1.msra.mxu0 %v2926
  %2981 = vmatprep.subr.mxu0 0.0
  %2982 = vmatpush2.msra.mxu0 0.0
  %2983 = vmatprep.subr.mxu0 0.0
  %2984 = vmatpush2.msra.mxu0 0.0
  %2985 = vmatprep.subr.mxu0 0.0
  %2986 = vmatpush2.msra.mxu0 0.0
  %2987 = vmatprep.subr.mxu0 0.0
  %2988 = vmatpush2.msra.mxu0 0.0
  %2989 = vmatprep.subr.mxu0 0.0
  %2990 = vmatpush2.msra.mxu0 0.0
  %2991 = vmatprep.subr.mxu0 0.0
  %2992 = vmatpush2.msra.mxu0 0.0
  %2993 = vmatprep.subr.mxu0 0.0
  %2994 = vmatpush2.msra.mxu0 0.0
  %2995 = vmatprep.subr.mxu0 0.0
  %2996 = vmatpush2.msra.mxu0 0.0
  %2997 = vmatprep.subr.mxu0 0.0
  %2998 = vmatpush2.msra.mxu0 0.0
  %2999 = vmatprep.subr.mxu0 0.0
  %3000 = vmatpush2.msra.mxu0 0.0
  %3001 = vmatprep.subr.mxu0 0.0
  %3002 = vmatpush2.msra.mxu0 0.0
  %3003 = vmatprep.subr.mxu0 0.0
  %3004 = vmatpush2.msra.mxu0 0.0
  %3005 = vmatprep.subr.mxu0 0.0
  %3006 = vmatpush2.msra.mxu0 0.0
  %3007 = vmatprep.subr.mxu0 0.0
  %3008 = vmatpush2.msra.mxu0 0.0
  %3009 = vmatprep.subr.mxu0 0.0
  %3010 = vmatpush2.msra.mxu0 0.0
  %3011 = vmatprep.subr.mxu0 0.0
  %3012 = vmatpush2.msra.mxu0 0.0
  %3013 = vmatprep.mubr.f32.mxu0 0.0
  %3014 = vmatmul.mubr.f32.gmra.mxu0 %v2938
  %v3015 = vpop.f32.mrf.mxu0
  %v3016 = vadd.f32 0.0, %v3015
  %v3017 = vpop.f32.mrf.mxu0
  %3018 = vmatprep.mubr.f32.mxu0 0.0
  %3019 = vmatmul.mubr.f32.gmra.mxu0 %v2941
  %v3020 = vpop.f32.mrf.mxu0
  %v3021 = vadd.f32 0.0, %v3020
  %v3022 = vpop.f32.mrf.mxu0
  %3023 = vmatprep.mubr.f32.mxu0 0.0
  %3024 = vmatmul.mubr.f32.gmra.mxu0 %v2944
  %v3025 = vpop.f32.mrf.mxu0
  %v3026 = vadd.f32 0.0, %v3025
  %v3027 = vpop.f32.mrf.mxu0
  %3028 = vmatprep.mubr.f32.mxu0 0.0
  %3029 = vmatmul.mubr.f32.gmra.mxu0 %v2947
  %v3030 = vpop.f32.mrf.mxu0
  %v3031 = vadd.f32 0.0, %v3030
  %v3032 = vpop.f32.mrf.mxu0
  %3033 = vdwg.mxu0
  %3034 = vrot.lane.b32.xlu0 %v2756, 120
  %v3035 = vpop.permute.xlu0 %3034
  %3036 = vrot.lane.b32.xlu0 %v2757, 120
  %v3037 = vpop.permute.xlu0 %3036
  %3038 = vrot.lane.b32.xlu0 %v2758, 120
  %v3039 = vpop.permute.xlu0 %3038
  %3040 = vrot.lane.b32.xlu0 %v2759, 120
  %v3041 = vpop.permute.xlu0 %3040
  %3042 = vrot.lane.b32.xlu0 %v2738, 88
  %v3043 = vpop.permute.xlu0 %3042
  %3044 = vrot.lane.b32.xlu0 %v2743, 88
  %v3045 = vpop.permute.xlu0 %3044
  %3046 = vrot.lane.b32.xlu0 %v2748, 88
  %v3047 = vpop.permute.xlu0 %3046
  %3048 = vrot.lane.b32.xlu0 %v2753, 88
  %v3049 = vpop.permute.xlu0 %3048
  %v3050 = vsel %vm632, %v3035, 0
  %v3052 = vsel %vm632, %v3037, 0
  %v3054 = vsel %vm632, %v3039, 0
  %v3056 = vsel %vm632, %v3041, 0
  %v3058 = vsel %vm632, %v3043, 0
  %v3060 = vsel %vm632, %v3045, 0
  %v3062 = vsel %vm632, %v3047, 0
  %v3064 = vsel %vm632, %v3049, 0
  %3066 = vmatprep.subr.mxu0 0.0
  %3067 = vmatpush1.xpose.msra.mxu0 0.0
  %3068 = vmatprep.subr.mxu0 0.0
  %3069 = vmatpush1.xpose.msra.mxu0 0.0
  %3070 = vmatprep.subr.mxu0 0.0
  %3071 = vmatpush1.xpose.msra.mxu0 0.0
  %3072 = vmatprep.subr.mxu0 0.0
  %3073 = vmatpush1.xpose.msra.mxu0 0.0
  %3074 = vmatprep.subr.mxu0 0.0
  %3075 = vmatpush1.xpose.msra.mxu0 0.0
  %3076 = vmatprep.subr.mxu0 0.0
  %3077 = vmatpush1.xpose.msra.mxu0 0.0
  %3078 = vmatprep.subr.mxu0 0.0
  %3079 = vmatpush1.xpose.msra.mxu0 0.0
  %3080 = vmatprep.subr.mxu0 0.0
  %3081 = vmatpush1.xpose.msra.mxu0 0.0
  %3082 = vmatprep.subr.mxu0 0.0
  %3083 = vmatpush1.xpose.msra.mxu0 0.0
  %3084 = vmatprep.subr.mxu0 0.0
  %3085 = vmatpush1.xpose.msra.mxu0 0.0
  %3086 = vmatprep.subr.mxu0 0.0
  %3087 = vmatpush1.xpose.msra.mxu0 0.0
  %3088 = vmatprep.subr.mxu0 0.0
  %3089 = vmatpush1.xpose.msra.mxu0 0.0
  %3090 = vmatprep.subr.mxu0 0.0
  %3091 = vmatpush1.xpose.msra.mxu0 %v3064
  %3092 = vmatprep.subr.mxu0 0.0
  %3093 = vmatpush1.xpose.msra.mxu0 %v3062
  %3094 = vmatprep.subr.mxu0 0.0
  %3095 = vmatpush1.xpose.msra.mxu0 %v3060
  %3096 = vmatprep.subr.mxu0 0.0
  %3097 = vmatpush1.xpose.msra.mxu0 %v3058
  %3098 = vmatprep.subr.mxu0 0.0
  %3099 = vmatpush2.xpose.msra.mxu0 0.0
  %3100 = vmatprep.subr.mxu0 0.0
  %3101 = vmatpush2.xpose.msra.mxu0 0.0
  %3102 = vmatprep.subr.mxu0 0.0
  %3103 = vmatpush2.xpose.msra.mxu0 0.0
  %3104 = vmatprep.subr.mxu0 0.0
  %3105 = vmatpush2.xpose.msra.mxu0 0.0
  %3106 = vmatprep.subr.mxu0 0.0
  %3107 = vmatpush2.xpose.msra.mxu0 0.0
  %3108 = vmatprep.subr.mxu0 0.0
  %3109 = vmatpush2.xpose.msra.mxu0 0.0
  %3110 = vmatprep.subr.mxu0 0.0
  %3111 = vmatpush2.xpose.msra.mxu0 0.0
  %3112 = vmatprep.subr.mxu0 0.0
  %3113 = vmatpush2.xpose.msra.mxu0 0.0
  %3114 = vmatprep.subr.mxu0 0.0
  %3115 = vmatpush2.xpose.msra.mxu0 0.0
  %3116 = vmatprep.subr.mxu0 0.0
  %3117 = vmatpush2.xpose.msra.mxu0 0.0
  %3118 = vmatprep.subr.mxu0 0.0
  %3119 = vmatpush2.xpose.msra.mxu0 0.0
  %3120 = vmatprep.subr.mxu0 0.0
  %3121 = vmatpush2.xpose.msra.mxu0 0.0
  %3122 = vmatprep.subr.mxu0 0.0
  %3123 = vmatpush2.xpose.msra.mxu0 0.0
  %3124 = vmatprep.subr.mxu0 0.0
  %3125 = vmatpush2.xpose.msra.mxu0 0.0
  %3126 = vmatprep.subr.mxu0 0.0
  %3127 = vmatpush2.xpose.msra.mxu0 0.0
  %3128 = vmatprep.subr.mxu0 0.0
  %3129 = vmatpush2.xpose.msra.mxu0 0.0
  %3130 = vmatprep.mubr.f32.mxu0 0.0
  %3131 = vmatmul.mubr.f32.gmra.mxu0 %v3050
  %v3132 = vpop.f32.mrf.mxu0
  %v3133 = vadd.f32 0.0, %v3132
  %v3134 = vpop.f32.mrf.mxu0
  %3135 = vmatprep.mubr.f32.mxu0 0.0
  %3136 = vmatmul.mubr.f32.gmra.mxu0 %v3052
  %v3137 = vpop.f32.mrf.mxu0
  %v3138 = vadd.f32 0.0, %v3137
  %v3139 = vpop.f32.mrf.mxu0
  %3140 = vmatprep.mubr.f32.mxu0 0.0
  %3141 = vmatmul.mubr.f32.gmra.mxu0 %v3054
  %v3142 = vpop.f32.mrf.mxu0
  %v3143 = vadd.f32 0.0, %v3142
  %v3144 = vpop.f32.mrf.mxu0
  %3145 = vmatprep.mubr.f32.mxu0 0.0
  %3146 = vmatmul.mubr.f32.gmra.mxu0 %v3056
  %v3147 = vpop.f32.mrf.mxu0
  %v3148 = vadd.f32 0.0, %v3147
  %v3149 = vpop.f32.mrf.mxu0
  %3150 = vdwg.mxu0
  %v3151 = vsel %vm385, %v3133, -1e+30
  %v3152 = vsel %vm386, %v3138, -1e+30
  %v3153 = vsel %vm387, %v3143, -1e+30
  %v3154 = vsel %vm388, %v3148, -1e+30
  %v3155 = vsel %vm67, %v3151, -inf
  %3156 = vmax.xlane.f32.xlu0 %v3155
  %v3157 = vpop.xlane.xlu0 %3156
  %v3158 = vsel %vm67, %v3152, -inf
  %3159 = vmax.xlane.f32.xlu0 %v3158
  %v3160 = vpop.xlane.xlu0 %3159
  %v3161 = vsel %vm67, %v3153, -inf
  %3162 = vmax.xlane.f32.xlu0 %v3161
  %v3163 = vpop.xlane.xlu0 %3162
  %v3164 = vsel %vm67, %v3154, -inf
  %3165 = vmax.xlane.f32.xlu0 %v3164
  %v3166 = vpop.xlane.xlu0 %3165
  %v3167 = vsub.f32 %v3151, %v3157
  %v3168 = vsub.f32 %v3152, %v3160
  %v3169 = vsub.f32 %v3153, %v3163
  %v3170 = vsub.f32 %v3154, %v3166
  %v3171 = vmul.f32 %v3167, 1.442695
  %v3172 = vpow.pop %v3171
  %v3173 = vmul.f32 %v3168, 1.442695
  %v3174 = vpow.pop %v3173
  %v3175 = vmul.f32 %v3169, 1.442695
  %v3176 = vpow.pop %v3175
  %v3177 = vmul.f32 %v3170, 1.442695
  %v3178 = vpow.pop %v3177
  %v3179 = vsel %vm67, %v3172, 0.0
  %3180 = vadd.xlane.f32.xlu0 %v3179
  %v3181 = vpop.xlane.xlu0 %3180
  %v3182 = vsel %vm67, %v3174, 0.0
  %3183 = vadd.xlane.f32.xlu0 %v3182
  %v3184 = vpop.xlane.xlu0 %3183
  %v3185 = vsel %vm67, %v3176, 0.0
  %3186 = vadd.xlane.f32.xlu0 %v3185
  %v3187 = vpop.xlane.xlu0 %3186
  %v3188 = vsel %vm67, %v3178, 0.0
  %3189 = vadd.xlane.f32.xlu0 %v3188
  %v3190 = vpop.xlane.xlu0 %3189
  %v3191 = vrcp.pop %v3181
  %v3192 = vmul.f32 %v3172, %v3191
  %v3193 = vrcp.pop %v3184
  %v3194 = vmul.f32 %v3174, %v3193
  %v3195 = vrcp.pop %v3187
  %v3196 = vmul.f32 %v3176, %v3195
  %v3197 = vrcp.pop %v3190
  %v3198 = vmul.f32 %v3178, %v3197
  %3199 = vrot.lane.b32.xlu0 %v2738, 56
  %v3200 = vpop.permute.xlu0 %3199
  %3201 = vrot.lane.b32.xlu0 %v2743, 56
  %v3202 = vpop.permute.xlu0 %3201
  %3203 = vrot.lane.b32.xlu0 %v2748, 56
  %v3204 = vpop.permute.xlu0 %3203
  %3205 = vrot.lane.b32.xlu0 %v2753, 56
  %v3206 = vpop.permute.xlu0 %3205
  %v3212 = vsel %vm67, %v3192, 0
  %v3215 = vsel %vm67, %v3194, 0
  %v3218 = vsel %vm67, %v3196, 0
  %v3221 = vsel %vm67, %v3198, 0
  %3223 = vmatprep.subr.mxu0 0.0
  %3224 = vmatpush1.msra.mxu0 0.0
  %3225 = vmatprep.subr.mxu0 0.0
  %3226 = vmatpush1.msra.mxu0 0.0
  %3227 = vmatprep.subr.mxu0 0.0
  %3228 = vmatpush1.msra.mxu0 0.0
  %3229 = vmatprep.subr.mxu0 0.0
  %3230 = vmatpush1.msra.mxu0 0.0
  %3231 = vmatprep.subr.mxu0 0.0
  %3232 = vmatpush1.msra.mxu0 0.0
  %3233 = vmatprep.subr.mxu0 0.0
  %3234 = vmatpush1.msra.mxu0 0.0
  %3235 = vmatprep.subr.mxu0 0.0
  %3236 = vmatpush1.msra.mxu0 0.0
  %3237 = vmatprep.subr.mxu0 0.0
  %3238 = vmatpush1.msra.mxu0 0.0
  %3239 = vmatprep.subr.mxu0 0.0
  %3240 = vmatpush1.msra.mxu0 0.0
  %3241 = vmatprep.subr.mxu0 0.0
  %3242 = vmatpush1.msra.mxu0 0.0
  %3243 = vmatprep.subr.mxu0 0.0
  %3244 = vmatpush1.msra.mxu0 0.0
  %3245 = vmatprep.subr.mxu0 0.0
  %3246 = vmatpush1.msra.mxu0 0.0
  %3247 = vmatprep.subr.mxu0 0.0
  %3248 = vmatpush1.msra.mxu0 %v3206
  %3249 = vmatprep.subr.mxu0 0.0
  %3250 = vmatpush1.msra.mxu0 %v3204
  %3251 = vmatprep.subr.mxu0 0.0
  %3252 = vmatpush1.msra.mxu0 %v3202
  %3253 = vmatprep.subr.mxu0 0.0
  %3254 = vmatpush1.msra.mxu0 %v3200
  %3255 = vmatprep.subr.mxu0 0.0
  %3256 = vmatpush2.msra.mxu0 0.0
  %3257 = vmatprep.subr.mxu0 0.0
  %3258 = vmatpush2.msra.mxu0 0.0
  %3259 = vmatprep.subr.mxu0 0.0
  %3260 = vmatpush2.msra.mxu0 0.0
  %3261 = vmatprep.subr.mxu0 0.0
  %3262 = vmatpush2.msra.mxu0 0.0
  %3263 = vmatprep.subr.mxu0 0.0
  %3264 = vmatpush2.msra.mxu0 0.0
  %3265 = vmatprep.subr.mxu0 0.0
  %3266 = vmatpush2.msra.mxu0 0.0
  %3267 = vmatprep.subr.mxu0 0.0
  %3268 = vmatpush2.msra.mxu0 0.0
  %3269 = vmatprep.subr.mxu0 0.0
  %3270 = vmatpush2.msra.mxu0 0.0
  %3271 = vmatprep.subr.mxu0 0.0
  %3272 = vmatpush2.msra.mxu0 0.0
  %3273 = vmatprep.subr.mxu0 0.0
  %3274 = vmatpush2.msra.mxu0 0.0
  %3275 = vmatprep.subr.mxu0 0.0
  %3276 = vmatpush2.msra.mxu0 0.0
  %3277 = vmatprep.subr.mxu0 0.0
  %3278 = vmatpush2.msra.mxu0 0.0
  %3279 = vmatprep.subr.mxu0 0.0
  %3280 = vmatpush2.msra.mxu0 0.0
  %3281 = vmatprep.subr.mxu0 0.0
  %3282 = vmatpush2.msra.mxu0 0.0
  %3283 = vmatprep.subr.mxu0 0.0
  %3284 = vmatpush2.msra.mxu0 0.0
  %3285 = vmatprep.subr.mxu0 0.0
  %3286 = vmatpush2.msra.mxu0 0.0
  %3287 = vmatprep.mubr.f32.mxu0 0.0
  %3288 = vmatmul.mubr.f32.gmra.mxu0 %v3212
  %v3289 = vpop.f32.mrf.mxu0
  %v3290 = vadd.f32 0.0, %v3289
  %v3291 = vpop.f32.mrf.mxu0
  %3292 = vmatprep.mubr.f32.mxu0 0.0
  %3293 = vmatmul.mubr.f32.gmra.mxu0 %v3215
  %v3294 = vpop.f32.mrf.mxu0
  %v3295 = vadd.f32 0.0, %v3294
  %v3296 = vpop.f32.mrf.mxu0
  %3297 = vmatprep.mubr.f32.mxu0 0.0
  %3298 = vmatmul.mubr.f32.gmra.mxu0 %v3218
  %v3299 = vpop.f32.mrf.mxu0
  %v3300 = vadd.f32 0.0, %v3299
  %v3301 = vpop.f32.mrf.mxu0
  %3302 = vmatprep.mubr.f32.mxu0 0.0
  %3303 = vmatmul.mubr.f32.gmra.mxu0 %v3221
  %v3304 = vpop.f32.mrf.mxu0
  %v3305 = vadd.f32 0.0, %v3304
  %v3306 = vpop.f32.mrf.mxu0
  %3307 = vdwg.mxu0
  %v3309 = vsel %vm632, %v3290, 0
  %v3312 = vsel %vm632, %v3295, 0
  %v3315 = vsel %vm632, %v3300, 0
  %v3318 = vsel %vm632, %v3305, 0
  %3320 = vmatprep.subr.mxu0 0.0
  %3321 = vmatpush1.msra.mxu0 0.0
  %3322 = vmatprep.subr.mxu0 0.0
  %3323 = vmatpush1.msra.mxu0 0.0
  %3324 = vmatprep.subr.mxu0 0.0
  %3325 = vmatpush1.msra.mxu0 0.0
  %3326 = vmatprep.subr.mxu0 0.0
  %3327 = vmatpush1.msra.mxu0 0.0
  %3328 = vmatprep.subr.mxu0 0.0
  %3329 = vmatpush1.msra.mxu0 0.0
  %3330 = vmatprep.subr.mxu0 0.0
  %3331 = vmatpush1.msra.mxu0 0.0
  %3332 = vmatprep.subr.mxu0 0.0
  %3333 = vmatpush1.msra.mxu0 0.0
  %3334 = vmatprep.subr.mxu0 0.0
  %3335 = vmatpush1.msra.mxu0 0.0
  %3336 = vmatprep.subr.mxu0 0.0
  %3337 = vmatpush1.msra.mxu0 0.0
  %3338 = vmatprep.subr.mxu0 0.0
  %3339 = vmatpush1.msra.mxu0 0.0
  %3340 = vmatprep.subr.mxu0 0.0
  %3341 = vmatpush1.msra.mxu0 0.0
  %3342 = vmatprep.subr.mxu0 0.0
  %3343 = vmatpush1.msra.mxu0 0.0
  %3344 = vmatprep.subr.mxu0 0.0
  %3345 = vmatpush1.msra.mxu0 0.0
  %3346 = vmatprep.subr.mxu0 0.0
  %3347 = vmatpush1.msra.mxu0 0.0
  %3348 = vmatprep.subr.mxu0 0.0
  %3349 = vmatpush1.msra.mxu0 0.0
  %3350 = vmatprep.subr.mxu0 0.0
  %3351 = vmatpush1.msra.mxu0 %v2535
  %3352 = vmatprep.subr.mxu0 0.0
  %3353 = vmatpush2.msra.mxu0 0.0
  %3354 = vmatprep.subr.mxu0 0.0
  %3355 = vmatpush2.msra.mxu0 0.0
  %3356 = vmatprep.subr.mxu0 0.0
  %3357 = vmatpush2.msra.mxu0 0.0
  %3358 = vmatprep.subr.mxu0 0.0
  %3359 = vmatpush2.msra.mxu0 0.0
  %3360 = vmatprep.subr.mxu0 0.0
  %3361 = vmatpush2.msra.mxu0 0.0
  %3362 = vmatprep.subr.mxu0 0.0
  %3363 = vmatpush2.msra.mxu0 0.0
  %3364 = vmatprep.subr.mxu0 0.0
  %3365 = vmatpush2.msra.mxu0 0.0
  %3366 = vmatprep.subr.mxu0 0.0
  %3367 = vmatpush2.msra.mxu0 0.0
  %3368 = vmatprep.subr.mxu0 0.0
  %3369 = vmatpush2.msra.mxu0 0.0
  %3370 = vmatprep.subr.mxu0 0.0
  %3371 = vmatpush2.msra.mxu0 0.0
  %3372 = vmatprep.subr.mxu0 0.0
  %3373 = vmatpush2.msra.mxu0 0.0
  %3374 = vmatprep.subr.mxu0 0.0
  %3375 = vmatpush2.msra.mxu0 0.0
  %3376 = vmatprep.subr.mxu0 0.0
  %3377 = vmatpush2.msra.mxu0 0.0
  %3378 = vmatprep.subr.mxu0 0.0
  %3379 = vmatpush2.msra.mxu0 0.0
  %3380 = vmatprep.subr.mxu0 0.0
  %3381 = vmatpush2.msra.mxu0 0.0
  %3382 = vmatprep.subr.mxu0 0.0
  %3383 = vmatpush2.msra.mxu0 0.0
  %3384 = vmatprep.mubr.f32.mxu0 0.0
  %3385 = vmatmul.mubr.f32.gmra.mxu0 %v3309
  %v3386 = vpop.f32.mrf.mxu0
  %v3387 = vadd.f32 0.0, %v3386
  %v3388 = vpop.f32.mrf.mxu0
  %3389 = vmatprep.mubr.f32.mxu0 0.0
  %3390 = vmatmul.mubr.f32.gmra.mxu0 %v3312
  %v3391 = vpop.f32.mrf.mxu0
  %v3392 = vadd.f32 0.0, %v3391
  %v3393 = vpop.f32.mrf.mxu0
  %3394 = vmatprep.mubr.f32.mxu0 0.0
  %3395 = vmatmul.mubr.f32.gmra.mxu0 %v3315
  %v3396 = vpop.f32.mrf.mxu0
  %v3397 = vadd.f32 0.0, %v3396
  %v3398 = vpop.f32.mrf.mxu0
  %3399 = vmatprep.mubr.f32.mxu0 0.0
  %3400 = vmatmul.mubr.f32.gmra.mxu0 %v3318
  %v3401 = vpop.f32.mrf.mxu0
  %v3402 = vadd.f32 0.0, %v3401
  %v3403 = vpop.f32.mrf.mxu0
  %3404 = vdwg.mxu0
  %v3406 = vsel %vm632, %v3016, 0
  %v3409 = vsel %vm632, %v3021, 0
  %v3412 = vsel %vm632, %v3026, 0
  %v3415 = vsel %vm632, %v3031, 0
  %3417 = vmatprep.subr.mxu0 0.0
  %3418 = vmatpush1.msra.mxu0 0.0
  %3419 = vmatprep.subr.mxu0 0.0
  %3420 = vmatpush1.msra.mxu0 0.0
  %3421 = vmatprep.subr.mxu0 0.0
  %3422 = vmatpush1.msra.mxu0 0.0
  %3423 = vmatprep.subr.mxu0 0.0
  %3424 = vmatpush1.msra.mxu0 0.0
  %3425 = vmatprep.subr.mxu0 0.0
  %3426 = vmatpush1.msra.mxu0 0.0
  %3427 = vmatprep.subr.mxu0 0.0
  %3428 = vmatpush1.msra.mxu0 0.0
  %3429 = vmatprep.subr.mxu0 0.0
  %3430 = vmatpush1.msra.mxu0 0.0
  %3431 = vmatprep.subr.mxu0 0.0
  %3432 = vmatpush1.msra.mxu0 0.0
  %3433 = vmatprep.subr.mxu0 0.0
  %3434 = vmatpush1.msra.mxu0 0.0
  %3435 = vmatprep.subr.mxu0 0.0
  %3436 = vmatpush1.msra.mxu0 0.0
  %3437 = vmatprep.subr.mxu0 0.0
  %3438 = vmatpush1.msra.mxu0 0.0
  %3439 = vmatprep.subr.mxu0 0.0
  %3440 = vmatpush1.msra.mxu0 0.0
  %3441 = vmatprep.subr.mxu0 0.0
  %3442 = vmatpush1.msra.mxu0 0.0
  %3443 = vmatprep.subr.mxu0 0.0
  %3444 = vmatpush1.msra.mxu0 0.0
  %3445 = vmatprep.subr.mxu0 0.0
  %3446 = vmatpush1.msra.mxu0 0.0
  %3447 = vmatprep.subr.mxu0 0.0
  %3448 = vmatpush1.msra.mxu0 %v2532
  %3449 = vmatprep.subr.mxu0 0.0
  %3450 = vmatpush2.msra.mxu0 0.0
  %3451 = vmatprep.subr.mxu0 0.0
  %3452 = vmatpush2.msra.mxu0 0.0
  %3453 = vmatprep.subr.mxu0 0.0
  %3454 = vmatpush2.msra.mxu0 0.0
  %3455 = vmatprep.subr.mxu0 0.0
  %3456 = vmatpush2.msra.mxu0 0.0
  %3457 = vmatprep.subr.mxu0 0.0
  %3458 = vmatpush2.msra.mxu0 0.0
  %3459 = vmatprep.subr.mxu0 0.0
  %3460 = vmatpush2.msra.mxu0 0.0
  %3461 = vmatprep.subr.mxu0 0.0
  %3462 = vmatpush2.msra.mxu0 0.0
  %3463 = vmatprep.subr.mxu0 0.0
  %3464 = vmatpush2.msra.mxu0 0.0
  %3465 = vmatprep.subr.mxu0 0.0
  %3466 = vmatpush2.msra.mxu0 0.0
  %3467 = vmatprep.subr.mxu0 0.0
  %3468 = vmatpush2.msra.mxu0 0.0
  %3469 = vmatprep.subr.mxu0 0.0
  %3470 = vmatpush2.msra.mxu0 0.0
  %3471 = vmatprep.subr.mxu0 0.0
  %3472 = vmatpush2.msra.mxu0 0.0
  %3473 = vmatprep.subr.mxu0 0.0
  %3474 = vmatpush2.msra.mxu0 0.0
  %3475 = vmatprep.subr.mxu0 0.0
  %3476 = vmatpush2.msra.mxu0 0.0
  %3477 = vmatprep.subr.mxu0 0.0
  %3478 = vmatpush2.msra.mxu0 0.0
  %3479 = vmatprep.subr.mxu0 0.0
  %3480 = vmatpush2.msra.mxu0 0.0
  %3481 = vmatprep.mubr.f32.mxu0 0.0
  %3482 = vmatmul.mubr.f32.gmra.mxu0 %v3406
  %v3483 = vpop.f32.mrf.mxu0
  %v3484 = vadd.f32 %v3387, %v3483
  %v3485 = vpop.f32.mrf.mxu0
  %3486 = vmatprep.mubr.f32.mxu0 0.0
  %3487 = vmatmul.mubr.f32.gmra.mxu0 %v3409
  %v3488 = vpop.f32.mrf.mxu0
  %v3489 = vadd.f32 %v3392, %v3488
  %v3490 = vpop.f32.mrf.mxu0
  %3491 = vmatprep.mubr.f32.mxu0 0.0
  %3492 = vmatmul.mubr.f32.gmra.mxu0 %v3412
  %v3493 = vpop.f32.mrf.mxu0
  %v3494 = vadd.f32 %v3397, %v3493
  %v3495 = vpop.f32.mrf.mxu0
  %3496 = vmatprep.mubr.f32.mxu0 0.0
  %3497 = vmatmul.mubr.f32.gmra.mxu0 %v3415
  %v3498 = vpop.f32.mrf.mxu0
  %v3499 = vadd.f32 %v3402, %v3498
  %v3500 = vpop.f32.mrf.mxu0
  %3501 = vdwg.mxu0
  %3502 = vrot.lane.b32.xlu0 %v2756, 112
  %v3503 = vpop.permute.xlu0 %3502
  %3504 = vrot.lane.b32.xlu0 %v2757, 112
  %v3505 = vpop.permute.xlu0 %3504
  %3506 = vrot.lane.b32.xlu0 %v2758, 112
  %v3507 = vpop.permute.xlu0 %3506
  %3508 = vrot.lane.b32.xlu0 %v2759, 112
  %v3509 = vpop.permute.xlu0 %3508
  %3510 = vrot.lane.b32.xlu0 %v2738, 80
  %v3511 = vpop.permute.xlu0 %3510
  %3512 = vrot.lane.b32.xlu0 %v2743, 80
  %v3513 = vpop.permute.xlu0 %3512
  %3514 = vrot.lane.b32.xlu0 %v2748, 80
  %v3515 = vpop.permute.xlu0 %3514
  %3516 = vrot.lane.b32.xlu0 %v2753, 80
  %v3517 = vpop.permute.xlu0 %3516
  %v3518 = vsel %vm632, %v3503, 0
  %v3520 = vsel %vm632, %v3505, 0
  %v3522 = vsel %vm632, %v3507, 0
  %v3524 = vsel %vm632, %v3509, 0
  %v3526 = vsel %vm632, %v3511, 0
  %v3528 = vsel %vm632, %v3513, 0
  %v3530 = vsel %vm632, %v3515, 0
  %v3532 = vsel %vm632, %v3517, 0
  %3534 = vmatprep.subr.mxu0 0.0
  %3535 = vmatpush1.xpose.msra.mxu0 0.0
  %3536 = vmatprep.subr.mxu0 0.0
  %3537 = vmatpush1.xpose.msra.mxu0 0.0
  %3538 = vmatprep.subr.mxu0 0.0
  %3539 = vmatpush1.xpose.msra.mxu0 0.0
  %3540 = vmatprep.subr.mxu0 0.0
  %3541 = vmatpush1.xpose.msra.mxu0 0.0
  %3542 = vmatprep.subr.mxu0 0.0
  %3543 = vmatpush1.xpose.msra.mxu0 0.0
  %3544 = vmatprep.subr.mxu0 0.0
  %3545 = vmatpush1.xpose.msra.mxu0 0.0
  %3546 = vmatprep.subr.mxu0 0.0
  %3547 = vmatpush1.xpose.msra.mxu0 0.0
  %3548 = vmatprep.subr.mxu0 0.0
  %3549 = vmatpush1.xpose.msra.mxu0 0.0
  %3550 = vmatprep.subr.mxu0 0.0
  %3551 = vmatpush1.xpose.msra.mxu0 0.0
  %3552 = vmatprep.subr.mxu0 0.0
  %3553 = vmatpush1.xpose.msra.mxu0 0.0
  %3554 = vmatprep.subr.mxu0 0.0
  %3555 = vmatpush1.xpose.msra.mxu0 0.0
  %3556 = vmatprep.subr.mxu0 0.0
  %3557 = vmatpush1.xpose.msra.mxu0 0.0
  %3558 = vmatprep.subr.mxu0 0.0
  %3559 = vmatpush1.xpose.msra.mxu0 %v3532
  %3560 = vmatprep.subr.mxu0 0.0
  %3561 = vmatpush1.xpose.msra.mxu0 %v3530
  %3562 = vmatprep.subr.mxu0 0.0
  %3563 = vmatpush1.xpose.msra.mxu0 %v3528
  %3564 = vmatprep.subr.mxu0 0.0
  %3565 = vmatpush1.xpose.msra.mxu0 %v3526
  %3566 = vmatprep.subr.mxu0 0.0
  %3567 = vmatpush2.xpose.msra.mxu0 0.0
  %3568 = vmatprep.subr.mxu0 0.0
  %3569 = vmatpush2.xpose.msra.mxu0 0.0
  %3570 = vmatprep.subr.mxu0 0.0
  %3571 = vmatpush2.xpose.msra.mxu0 0.0
  %3572 = vmatprep.subr.mxu0 0.0
  %3573 = vmatpush2.xpose.msra.mxu0 0.0
  %3574 = vmatprep.subr.mxu0 0.0
  %3575 = vmatpush2.xpose.msra.mxu0 0.0
  %3576 = vmatprep.subr.mxu0 0.0
  %3577 = vmatpush2.xpose.msra.mxu0 0.0
  %3578 = vmatprep.subr.mxu0 0.0
  %3579 = vmatpush2.xpose.msra.mxu0 0.0
  %3580 = vmatprep.subr.mxu0 0.0
  %3581 = vmatpush2.xpose.msra.mxu0 0.0
  %3582 = vmatprep.subr.mxu0 0.0
  %3583 = vmatpush2.xpose.msra.mxu0 0.0
  %3584 = vmatprep.subr.mxu0 0.0
  %3585 = vmatpush2.xpose.msra.mxu0 0.0
  %3586 = vmatprep.subr.mxu0 0.0
  %3587 = vmatpush2.xpose.msra.mxu0 0.0
  %3588 = vmatprep.subr.mxu0 0.0
  %3589 = vmatpush2.xpose.msra.mxu0 0.0
  %3590 = vmatprep.subr.mxu0 0.0
  %3591 = vmatpush2.xpose.msra.mxu0 0.0
  %3592 = vmatprep.subr.mxu0 0.0
  %3593 = vmatpush2.xpose.msra.mxu0 0.0
  %3594 = vmatprep.subr.mxu0 0.0
  %3595 = vmatpush2.xpose.msra.mxu0 0.0
  %3596 = vmatprep.subr.mxu0 0.0
  %3597 = vmatpush2.xpose.msra.mxu0 0.0
  %3598 = vmatprep.mubr.f32.mxu0 0.0
  %3599 = vmatmul.mubr.f32.gmra.mxu0 %v3518
  %v3600 = vpop.f32.mrf.mxu0
  %v3601 = vadd.f32 0.0, %v3600
  %v3602 = vpop.f32.mrf.mxu0
  %3603 = vmatprep.mubr.f32.mxu0 0.0
  %3604 = vmatmul.mubr.f32.gmra.mxu0 %v3520
  %v3605 = vpop.f32.mrf.mxu0
  %v3606 = vadd.f32 0.0, %v3605
  %v3607 = vpop.f32.mrf.mxu0
  %3608 = vmatprep.mubr.f32.mxu0 0.0
  %3609 = vmatmul.mubr.f32.gmra.mxu0 %v3522
  %v3610 = vpop.f32.mrf.mxu0
  %v3611 = vadd.f32 0.0, %v3610
  %v3612 = vpop.f32.mrf.mxu0
  %3613 = vmatprep.mubr.f32.mxu0 0.0
  %3614 = vmatmul.mubr.f32.gmra.mxu0 %v3524
  %v3615 = vpop.f32.mrf.mxu0
  %v3616 = vadd.f32 0.0, %v3615
  %v3617 = vpop.f32.mrf.mxu0
  %3618 = vdwg.mxu0
  %v3619 = vsel %vm385, %v3601, -1e+30
  %v3620 = vsel %vm386, %v3606, -1e+30
  %v3621 = vsel %vm387, %v3611, -1e+30
  %v3622 = vsel %vm388, %v3616, -1e+30
  %v3623 = vsel %vm67, %v3619, -inf
  %3624 = vmax.xlane.f32.xlu0 %v3623
  %v3625 = vpop.xlane.xlu0 %3624
  %v3626 = vsel %vm67, %v3620, -inf
  %3627 = vmax.xlane.f32.xlu0 %v3626
  %v3628 = vpop.xlane.xlu0 %3627
  %v3629 = vsel %vm67, %v3621, -inf
  %3630 = vmax.xlane.f32.xlu0 %v3629
  %v3631 = vpop.xlane.xlu0 %3630
  %v3632 = vsel %vm67, %v3622, -inf
  %3633 = vmax.xlane.f32.xlu0 %v3632
  %v3634 = vpop.xlane.xlu0 %3633
  %v3635 = vsub.f32 %v3619, %v3625
  %v3636 = vsub.f32 %v3620, %v3628
  %v3637 = vsub.f32 %v3621, %v3631
  %v3638 = vsub.f32 %v3622, %v3634
  %v3639 = vmul.f32 %v3635, 1.442695
  %v3640 = vpow.pop %v3639
  %v3641 = vmul.f32 %v3636, 1.442695
  %v3642 = vpow.pop %v3641
  %v3643 = vmul.f32 %v3637, 1.442695
  %v3644 = vpow.pop %v3643
  %v3645 = vmul.f32 %v3638, 1.442695
  %v3646 = vpow.pop %v3645
  %v3647 = vsel %vm67, %v3640, 0.0
  %3648 = vadd.xlane.f32.xlu0 %v3647
  %v3649 = vpop.xlane.xlu0 %3648
  %v3650 = vsel %vm67, %v3642, 0.0
  %3651 = vadd.xlane.f32.xlu0 %v3650
  %v3652 = vpop.xlane.xlu0 %3651
  %v3653 = vsel %vm67, %v3644, 0.0
  %3654 = vadd.xlane.f32.xlu0 %v3653
  %v3655 = vpop.xlane.xlu0 %3654
  %v3656 = vsel %vm67, %v3646, 0.0
  %3657 = vadd.xlane.f32.xlu0 %v3656
  %v3658 = vpop.xlane.xlu0 %3657
  %v3659 = vrcp.pop %v3649
  %v3660 = vmul.f32 %v3640, %v3659
  %v3661 = vrcp.pop %v3652
  %v3662 = vmul.f32 %v3642, %v3661
  %v3663 = vrcp.pop %v3655
  %v3664 = vmul.f32 %v3644, %v3663
  %v3665 = vrcp.pop %v3658
  %v3666 = vmul.f32 %v3646, %v3665
  %3667 = vrot.lane.b32.xlu0 %v2738, 48
  %v3668 = vpop.permute.xlu0 %3667
  %3669 = vrot.lane.b32.xlu0 %v2743, 48
  %v3670 = vpop.permute.xlu0 %3669
  %3671 = vrot.lane.b32.xlu0 %v2748, 48
  %v3672 = vpop.permute.xlu0 %3671
  %3673 = vrot.lane.b32.xlu0 %v2753, 48
  %v3674 = vpop.permute.xlu0 %3673
  %v3680 = vsel %vm67, %v3660, 0
  %v3683 = vsel %vm67, %v3662, 0
  %v3686 = vsel %vm67, %v3664, 0
  %v3689 = vsel %vm67, %v3666, 0
  %3691 = vmatprep.subr.mxu0 0.0
  %3692 = vmatpush1.msra.mxu0 0.0
  %3693 = vmatprep.subr.mxu0 0.0
  %3694 = vmatpush1.msra.mxu0 0.0
  %3695 = vmatprep.subr.mxu0 0.0
  %3696 = vmatpush1.msra.mxu0 0.0
  %3697 = vmatprep.subr.mxu0 0.0
  %3698 = vmatpush1.msra.mxu0 0.0
  %3699 = vmatprep.subr.mxu0 0.0
  %3700 = vmatpush1.msra.mxu0 0.0
  %3701 = vmatprep.subr.mxu0 0.0
  %3702 = vmatpush1.msra.mxu0 0.0
  %3703 = vmatprep.subr.mxu0 0.0
  %3704 = vmatpush1.msra.mxu0 0.0
  %3705 = vmatprep.subr.mxu0 0.0
  %3706 = vmatpush1.msra.mxu0 0.0
  %3707 = vmatprep.subr.mxu0 0.0
  %3708 = vmatpush1.msra.mxu0 0.0
  %3709 = vmatprep.subr.mxu0 0.0
  %3710 = vmatpush1.msra.mxu0 0.0
  %3711 = vmatprep.subr.mxu0 0.0
  %3712 = vmatpush1.msra.mxu0 0.0
  %3713 = vmatprep.subr.mxu0 0.0
  %3714 = vmatpush1.msra.mxu0 0.0
  %3715 = vmatprep.subr.mxu0 0.0
  %3716 = vmatpush1.msra.mxu0 %v3674
  %3717 = vmatprep.subr.mxu0 0.0
  %3718 = vmatpush1.msra.mxu0 %v3672
  %3719 = vmatprep.subr.mxu0 0.0
  %3720 = vmatpush1.msra.mxu0 %v3670
  %3721 = vmatprep.subr.mxu0 0.0
  %3722 = vmatpush1.msra.mxu0 %v3668
  %3723 = vmatprep.subr.mxu0 0.0
  %3724 = vmatpush2.msra.mxu0 0.0
  %3725 = vmatprep.subr.mxu0 0.0
  %3726 = vmatpush2.msra.mxu0 0.0
  %3727 = vmatprep.subr.mxu0 0.0
  %3728 = vmatpush2.msra.mxu0 0.0
  %3729 = vmatprep.subr.mxu0 0.0
  %3730 = vmatpush2.msra.mxu0 0.0
  %3731 = vmatprep.subr.mxu0 0.0
  %3732 = vmatpush2.msra.mxu0 0.0
  %3733 = vmatprep.subr.mxu0 0.0
  %3734 = vmatpush2.msra.mxu0 0.0
  %3735 = vmatprep.subr.mxu0 0.0
  %3736 = vmatpush2.msra.mxu0 0.0
  %3737 = vmatprep.subr.mxu0 0.0
  %3738 = vmatpush2.msra.mxu0 0.0
  %3739 = vmatprep.subr.mxu0 0.0
  %3740 = vmatpush2.msra.mxu0 0.0
  %3741 = vmatprep.subr.mxu0 0.0
  %3742 = vmatpush2.msra.mxu0 0.0
  %3743 = vmatprep.subr.mxu0 0.0
  %3744 = vmatpush2.msra.mxu0 0.0
  %3745 = vmatprep.subr.mxu0 0.0
  %3746 = vmatpush2.msra.mxu0 0.0
  %3747 = vmatprep.subr.mxu0 0.0
  %3748 = vmatpush2.msra.mxu0 0.0
  %3749 = vmatprep.subr.mxu0 0.0
  %3750 = vmatpush2.msra.mxu0 0.0
  %3751 = vmatprep.subr.mxu0 0.0
  %3752 = vmatpush2.msra.mxu0 0.0
  %3753 = vmatprep.subr.mxu0 0.0
  %3754 = vmatpush2.msra.mxu0 0.0
  %3755 = vmatprep.mubr.f32.mxu0 0.0
  %3756 = vmatmul.mubr.f32.gmra.mxu0 %v3680
  %v3757 = vpop.f32.mrf.mxu0
  %v3758 = vadd.f32 0.0, %v3757
  %v3759 = vpop.f32.mrf.mxu0
  %3760 = vmatprep.mubr.f32.mxu0 0.0
  %3761 = vmatmul.mubr.f32.gmra.mxu0 %v3683
  %v3762 = vpop.f32.mrf.mxu0
  %v3763 = vadd.f32 0.0, %v3762
  %v3764 = vpop.f32.mrf.mxu0
  %3765 = vmatprep.mubr.f32.mxu0 0.0
  %3766 = vmatmul.mubr.f32.gmra.mxu0 %v3686
  %v3767 = vpop.f32.mrf.mxu0
  %v3768 = vadd.f32 0.0, %v3767
  %v3769 = vpop.f32.mrf.mxu0
  %3770 = vmatprep.mubr.f32.mxu0 0.0
  %3771 = vmatmul.mubr.f32.gmra.mxu0 %v3689
  %v3772 = vpop.f32.mrf.mxu0
  %v3773 = vadd.f32 0.0, %v3772
  %v3774 = vpop.f32.mrf.mxu0
  %3775 = vdwg.mxu0
  %v3777 = vsel %vm632, %v3758, 0
  %v3780 = vsel %vm632, %v3763, 0
  %v3783 = vsel %vm632, %v3768, 0
  %v3786 = vsel %vm632, %v3773, 0
  %3788 = vmatprep.subr.mxu0 0.0
  %3789 = vmatpush1.msra.mxu0 0.0
  %3790 = vmatprep.subr.mxu0 0.0
  %3791 = vmatpush1.msra.mxu0 0.0
  %3792 = vmatprep.subr.mxu0 0.0
  %3793 = vmatpush1.msra.mxu0 0.0
  %3794 = vmatprep.subr.mxu0 0.0
  %3795 = vmatpush1.msra.mxu0 0.0
  %3796 = vmatprep.subr.mxu0 0.0
  %3797 = vmatpush1.msra.mxu0 0.0
  %3798 = vmatprep.subr.mxu0 0.0
  %3799 = vmatpush1.msra.mxu0 0.0
  %3800 = vmatprep.subr.mxu0 0.0
  %3801 = vmatpush1.msra.mxu0 0.0
  %3802 = vmatprep.subr.mxu0 0.0
  %3803 = vmatpush1.msra.mxu0 0.0
  %3804 = vmatprep.subr.mxu0 0.0
  %3805 = vmatpush1.msra.mxu0 0.0
  %3806 = vmatprep.subr.mxu0 0.0
  %3807 = vmatpush1.msra.mxu0 0.0
  %3808 = vmatprep.subr.mxu0 0.0
  %3809 = vmatpush1.msra.mxu0 0.0
  %3810 = vmatprep.subr.mxu0 0.0
  %3811 = vmatpush1.msra.mxu0 0.0
  %3812 = vmatprep.subr.mxu0 0.0
  %3813 = vmatpush1.msra.mxu0 0.0
  %3814 = vmatprep.subr.mxu0 0.0
  %3815 = vmatpush1.msra.mxu0 0.0
  %3816 = vmatprep.subr.mxu0 0.0
  %3817 = vmatpush1.msra.mxu0 0.0
  %3818 = vmatprep.subr.mxu0 0.0
  %3819 = vmatpush1.msra.mxu0 %v2538
  %3820 = vmatprep.subr.mxu0 0.0
  %3821 = vmatpush2.msra.mxu0 0.0
  %3822 = vmatprep.subr.mxu0 0.0
  %3823 = vmatpush2.msra.mxu0 0.0
  %3824 = vmatprep.subr.mxu0 0.0
  %3825 = vmatpush2.msra.mxu0 0.0
  %3826 = vmatprep.subr.mxu0 0.0
  %3827 = vmatpush2.msra.mxu0 0.0
  %3828 = vmatprep.subr.mxu0 0.0
  %3829 = vmatpush2.msra.mxu0 0.0
  %3830 = vmatprep.subr.mxu0 0.0
  %3831 = vmatpush2.msra.mxu0 0.0
  %3832 = vmatprep.subr.mxu0 0.0
  %3833 = vmatpush2.msra.mxu0 0.0
  %3834 = vmatprep.subr.mxu0 0.0
  %3835 = vmatpush2.msra.mxu0 0.0
  %3836 = vmatprep.subr.mxu0 0.0
  %3837 = vmatpush2.msra.mxu0 0.0
  %3838 = vmatprep.subr.mxu0 0.0
  %3839 = vmatpush2.msra.mxu0 0.0
  %3840 = vmatprep.subr.mxu0 0.0
  %3841 = vmatpush2.msra.mxu0 0.0
  %3842 = vmatprep.subr.mxu0 0.0
  %3843 = vmatpush2.msra.mxu0 0.0
  %3844 = vmatprep.subr.mxu0 0.0
  %3845 = vmatpush2.msra.mxu0 0.0
  %3846 = vmatprep.subr.mxu0 0.0
  %3847 = vmatpush2.msra.mxu0 0.0
  %3848 = vmatprep.subr.mxu0 0.0
  %3849 = vmatpush2.msra.mxu0 0.0
  %3850 = vmatprep.subr.mxu0 0.0
  %3851 = vmatpush2.msra.mxu0 0.0
  %3852 = vmatprep.mubr.f32.mxu0 0.0
  %3853 = vmatmul.mubr.f32.gmra.mxu0 %v3777
  %v3854 = vpop.f32.mrf.mxu0
  %v3855 = vadd.f32 0.0, %v3854
  %v3856 = vpop.f32.mrf.mxu0
  %3857 = vmatprep.mubr.f32.mxu0 0.0
  %3858 = vmatmul.mubr.f32.gmra.mxu0 %v3780
  %v3859 = vpop.f32.mrf.mxu0
  %v3860 = vadd.f32 0.0, %v3859
  %v3861 = vpop.f32.mrf.mxu0
  %3862 = vmatprep.mubr.f32.mxu0 0.0
  %3863 = vmatmul.mubr.f32.gmra.mxu0 %v3783
  %v3864 = vpop.f32.mrf.mxu0
  %v3865 = vadd.f32 0.0, %v3864
  %v3866 = vpop.f32.mrf.mxu0
  %3867 = vmatprep.mubr.f32.mxu0 0.0
  %3868 = vmatmul.mubr.f32.gmra.mxu0 %v3786
  %v3869 = vpop.f32.mrf.mxu0
  %v3870 = vadd.f32 0.0, %v3869
  %v3871 = vpop.f32.mrf.mxu0
  %3872 = vdwg.mxu0
  %v3873 = vadd.f32 %v3484, %v3855
  %v3874 = vadd.f32 %v3489, %v3860
  %v3875 = vadd.f32 %v3494, %v3865
  %v3876 = vadd.f32 %v3499, %v3870
  %3877 = vrot.lane.b32.xlu0 %v2756, 104
  %v3878 = vpop.permute.xlu0 %3877
  %3879 = vrot.lane.b32.xlu0 %v2757, 104
  %v3880 = vpop.permute.xlu0 %3879
  %3881 = vrot.lane.b32.xlu0 %v2758, 104
  %v3882 = vpop.permute.xlu0 %3881
  %3883 = vrot.lane.b32.xlu0 %v2759, 104
  %v3884 = vpop.permute.xlu0 %3883
  %3885 = vrot.lane.b32.xlu0 %v2738, 72
  %v3886 = vpop.permute.xlu0 %3885
  %3887 = vrot.lane.b32.xlu0 %v2743, 72
  %v3888 = vpop.permute.xlu0 %3887
  %3889 = vrot.lane.b32.xlu0 %v2748, 72
  %v3890 = vpop.permute.xlu0 %3889
  %3891 = vrot.lane.b32.xlu0 %v2753, 72
  %v3892 = vpop.permute.xlu0 %3891
  %v3893 = vsel %vm632, %v3878, 0
  %v3895 = vsel %vm632, %v3880, 0
  %v3897 = vsel %vm632, %v3882, 0
  %v3899 = vsel %vm632, %v3884, 0
  %v3901 = vsel %vm632, %v3886, 0
  %v3903 = vsel %vm632, %v3888, 0
  %v3905 = vsel %vm632, %v3890, 0
  %v3907 = vsel %vm632, %v3892, 0
  %3909 = vmatprep.subr.mxu0 0.0
  %3910 = vmatpush1.xpose.msra.mxu0 0.0
  %3911 = vmatprep.subr.mxu0 0.0
  %3912 = vmatpush1.xpose.msra.mxu0 0.0
  %3913 = vmatprep.subr.mxu0 0.0
  %3914 = vmatpush1.xpose.msra.mxu0 0.0
  %3915 = vmatprep.subr.mxu0 0.0
  %3916 = vmatpush1.xpose.msra.mxu0 0.0
  %3917 = vmatprep.subr.mxu0 0.0
  %3918 = vmatpush1.xpose.msra.mxu0 0.0
  %3919 = vmatprep.subr.mxu0 0.0
  %3920 = vmatpush1.xpose.msra.mxu0 0.0
  %3921 = vmatprep.subr.mxu0 0.0
  %3922 = vmatpush1.xpose.msra.mxu0 0.0
  %3923 = vmatprep.subr.mxu0 0.0
  %3924 = vmatpush1.xpose.msra.mxu0 0.0
  %3925 = vmatprep.subr.mxu0 0.0
  %3926 = vmatpush1.xpose.msra.mxu0 0.0
  %3927 = vmatprep.subr.mxu0 0.0
  %3928 = vmatpush1.xpose.msra.mxu0 0.0
  %3929 = vmatprep.subr.mxu0 0.0
  %3930 = vmatpush1.xpose.msra.mxu0 0.0
  %3931 = vmatprep.subr.mxu0 0.0
  %3932 = vmatpush1.xpose.msra.mxu0 0.0
  %3933 = vmatprep.subr.mxu0 0.0
  %3934 = vmatpush1.xpose.msra.mxu0 %v3907
  %3935 = vmatprep.subr.mxu0 0.0
  %3936 = vmatpush1.xpose.msra.mxu0 %v3905
  %3937 = vmatprep.subr.mxu0 0.0
  %3938 = vmatpush1.xpose.msra.mxu0 %v3903
  %3939 = vmatprep.subr.mxu0 0.0
  %3940 = vmatpush1.xpose.msra.mxu0 %v3901
  %3941 = vmatprep.subr.mxu0 0.0
  %3942 = vmatpush2.xpose.msra.mxu0 0.0
  %3943 = vmatprep.subr.mxu0 0.0
  %3944 = vmatpush2.xpose.msra.mxu0 0.0
  %3945 = vmatprep.subr.mxu0 0.0
  %3946 = vmatpush2.xpose.msra.mxu0 0.0
  %3947 = vmatprep.subr.mxu0 0.0
  %3948 = vmatpush2.xpose.msra.mxu0 0.0
  %3949 = vmatprep.subr.mxu0 0.0
  %3950 = vmatpush2.xpose.msra.mxu0 0.0
  %3951 = vmatprep.subr.mxu0 0.0
  %3952 = vmatpush2.xpose.msra.mxu0 0.0
  %3953 = vmatprep.subr.mxu0 0.0
  %3954 = vmatpush2.xpose.msra.mxu0 0.0
  %3955 = vmatprep.subr.mxu0 0.0
  %3956 = vmatpush2.xpose.msra.mxu0 0.0
  %3957 = vmatprep.subr.mxu0 0.0
  %3958 = vmatpush2.xpose.msra.mxu0 0.0
  %3959 = vmatprep.subr.mxu0 0.0
  %3960 = vmatpush2.xpose.msra.mxu0 0.0
  %3961 = vmatprep.subr.mxu0 0.0
  %3962 = vmatpush2.xpose.msra.mxu0 0.0
  %3963 = vmatprep.subr.mxu0 0.0
  %3964 = vmatpush2.xpose.msra.mxu0 0.0
  %3965 = vmatprep.subr.mxu0 0.0
  %3966 = vmatpush2.xpose.msra.mxu0 0.0
  %3967 = vmatprep.subr.mxu0 0.0
  %3968 = vmatpush2.xpose.msra.mxu0 0.0
  %3969 = vmatprep.subr.mxu0 0.0
  %3970 = vmatpush2.xpose.msra.mxu0 0.0
  %3971 = vmatprep.subr.mxu0 0.0
  %3972 = vmatpush2.xpose.msra.mxu0 0.0
  %3973 = vmatprep.mubr.f32.mxu0 0.0
  %3974 = vmatmul.mubr.f32.gmra.mxu0 %v3893
  %v3975 = vpop.f32.mrf.mxu0
  %v3976 = vadd.f32 0.0, %v3975
  %v3977 = vpop.f32.mrf.mxu0
  %3978 = vmatprep.mubr.f32.mxu0 0.0
  %3979 = vmatmul.mubr.f32.gmra.mxu0 %v3895
  %v3980 = vpop.f32.mrf.mxu0
  %v3981 = vadd.f32 0.0, %v3980
  %v3982 = vpop.f32.mrf.mxu0
  %3983 = vmatprep.mubr.f32.mxu0 0.0
  %3984 = vmatmul.mubr.f32.gmra.mxu0 %v3897
  %v3985 = vpop.f32.mrf.mxu0
  %v3986 = vadd.f32 0.0, %v3985
  %v3987 = vpop.f32.mrf.mxu0
  %3988 = vmatprep.mubr.f32.mxu0 0.0
  %3989 = vmatmul.mubr.f32.gmra.mxu0 %v3899
  %v3990 = vpop.f32.mrf.mxu0
  %v3991 = vadd.f32 0.0, %v3990
  %v3992 = vpop.f32.mrf.mxu0
  %3993 = vdwg.mxu0
  %v3994 = vsel %vm385, %v3976, -1e+30
  %v3995 = vsel %vm386, %v3981, -1e+30
  %v3996 = vsel %vm387, %v3986, -1e+30
  %v3997 = vsel %vm388, %v3991, -1e+30
  %v3998 = vsel %vm67, %v3994, -inf
  %3999 = vmax.xlane.f32.xlu0 %v3998
  %v4000 = vpop.xlane.xlu0 %3999
  %v4001 = vsel %vm67, %v3995, -inf
  %4002 = vmax.xlane.f32.xlu0 %v4001
  %v4003 = vpop.xlane.xlu0 %4002
  %v4004 = vsel %vm67, %v3996, -inf
  %4005 = vmax.xlane.f32.xlu0 %v4004
  %v4006 = vpop.xlane.xlu0 %4005
  %v4007 = vsel %vm67, %v3997, -inf
  %4008 = vmax.xlane.f32.xlu0 %v4007
  %v4009 = vpop.xlane.xlu0 %4008
  %v4010 = vsub.f32 %v3994, %v4000
  %v4011 = vsub.f32 %v3995, %v4003
  %v4012 = vsub.f32 %v3996, %v4006
  %v4013 = vsub.f32 %v3997, %v4009
  %v4014 = vmul.f32 %v4010, 1.442695
  %v4015 = vpow.pop %v4014
  %v4016 = vmul.f32 %v4011, 1.442695
  %v4017 = vpow.pop %v4016
  %v4018 = vmul.f32 %v4012, 1.442695
  %v4019 = vpow.pop %v4018
  %v4020 = vmul.f32 %v4013, 1.442695
  %v4021 = vpow.pop %v4020
  %v4022 = vsel %vm67, %v4015, 0.0
  %4023 = vadd.xlane.f32.xlu0 %v4022
  %v4024 = vpop.xlane.xlu0 %4023
  %v4025 = vsel %vm67, %v4017, 0.0
  %4026 = vadd.xlane.f32.xlu0 %v4025
  %v4027 = vpop.xlane.xlu0 %4026
  %v4028 = vsel %vm67, %v4019, 0.0
  %4029 = vadd.xlane.f32.xlu0 %v4028
  %v4030 = vpop.xlane.xlu0 %4029
  %v4031 = vsel %vm67, %v4021, 0.0
  %4032 = vadd.xlane.f32.xlu0 %v4031
  %v4033 = vpop.xlane.xlu0 %4032
  %v4034 = vrcp.pop %v4024
  %v4035 = vmul.f32 %v4015, %v4034
  %v4036 = vrcp.pop %v4027
  %v4037 = vmul.f32 %v4017, %v4036
  %v4038 = vrcp.pop %v4030
  %v4039 = vmul.f32 %v4019, %v4038
  %v4040 = vrcp.pop %v4033
  %v4041 = vmul.f32 %v4021, %v4040
  %4042 = vrot.lane.b32.xlu0 %v2738, 40
  %v4043 = vpop.permute.xlu0 %4042
  %4044 = vrot.lane.b32.xlu0 %v2743, 40
  %v4045 = vpop.permute.xlu0 %4044
  %4046 = vrot.lane.b32.xlu0 %v2748, 40
  %v4047 = vpop.permute.xlu0 %4046
  %4048 = vrot.lane.b32.xlu0 %v2753, 40
  %v4049 = vpop.permute.xlu0 %4048
  %v4055 = vsel %vm67, %v4035, 0
  %v4058 = vsel %vm67, %v4037, 0
  %v4061 = vsel %vm67, %v4039, 0
  %v4064 = vsel %vm67, %v4041, 0
  %4066 = vmatprep.subr.mxu0 0.0
  %4067 = vmatpush1.msra.mxu0 0.0
  %4068 = vmatprep.subr.mxu0 0.0
  %4069 = vmatpush1.msra.mxu0 0.0
  %4070 = vmatprep.subr.mxu0 0.0
  %4071 = vmatpush1.msra.mxu0 0.0
  %4072 = vmatprep.subr.mxu0 0.0
  %4073 = vmatpush1.msra.mxu0 0.0
  %4074 = vmatprep.subr.mxu0 0.0
  %4075 = vmatpush1.msra.mxu0 0.0
  %4076 = vmatprep.subr.mxu0 0.0
  %4077 = vmatpush1.msra.mxu0 0.0
  %4078 = vmatprep.subr.mxu0 0.0
  %4079 = vmatpush1.msra.mxu0 0.0
  %4080 = vmatprep.subr.mxu0 0.0
  %4081 = vmatpush1.msra.mxu0 0.0
  %4082 = vmatprep.subr.mxu0 0.0
  %4083 = vmatpush1.msra.mxu0 0.0
  %4084 = vmatprep.subr.mxu0 0.0
  %4085 = vmatpush1.msra.mxu0 0.0
  %4086 = vmatprep.subr.mxu0 0.0
  %4087 = vmatpush1.msra.mxu0 0.0
  %4088 = vmatprep.subr.mxu0 0.0
  %4089 = vmatpush1.msra.mxu0 0.0
  %4090 = vmatprep.subr.mxu0 0.0
  %4091 = vmatpush1.msra.mxu0 %v4049
  %4092 = vmatprep.subr.mxu0 0.0
  %4093 = vmatpush1.msra.mxu0 %v4047
  %4094 = vmatprep.subr.mxu0 0.0
  %4095 = vmatpush1.msra.mxu0 %v4045
  %4096 = vmatprep.subr.mxu0 0.0
  %4097 = vmatpush1.msra.mxu0 %v4043
  %4098 = vmatprep.subr.mxu0 0.0
  %4099 = vmatpush2.msra.mxu0 0.0
  %4100 = vmatprep.subr.mxu0 0.0
  %4101 = vmatpush2.msra.mxu0 0.0
  %4102 = vmatprep.subr.mxu0 0.0
  %4103 = vmatpush2.msra.mxu0 0.0
  %4104 = vmatprep.subr.mxu0 0.0
  %4105 = vmatpush2.msra.mxu0 0.0
  %4106 = vmatprep.subr.mxu0 0.0
  %4107 = vmatpush2.msra.mxu0 0.0
  %4108 = vmatprep.subr.mxu0 0.0
  %4109 = vmatpush2.msra.mxu0 0.0
  %4110 = vmatprep.subr.mxu0 0.0
  %4111 = vmatpush2.msra.mxu0 0.0
  %4112 = vmatprep.subr.mxu0 0.0
  %4113 = vmatpush2.msra.mxu0 0.0
  %4114 = vmatprep.subr.mxu0 0.0
  %4115 = vmatpush2.msra.mxu0 0.0
  %4116 = vmatprep.subr.mxu0 0.0
  %4117 = vmatpush2.msra.mxu0 0.0
  %4118 = vmatprep.subr.mxu0 0.0
  %4119 = vmatpush2.msra.mxu0 0.0
  %4120 = vmatprep.subr.mxu0 0.0
  %4121 = vmatpush2.msra.mxu0 0.0
  %4122 = vmatprep.subr.mxu0 0.0
  %4123 = vmatpush2.msra.mxu0 0.0
  %4124 = vmatprep.subr.mxu0 0.0
  %4125 = vmatpush2.msra.mxu0 0.0
  %4126 = vmatprep.subr.mxu0 0.0
  %4127 = vmatpush2.msra.mxu0 0.0
  %4128 = vmatprep.subr.mxu0 0.0
  %4129 = vmatpush2.msra.mxu0 0.0
  %4130 = vmatprep.mubr.f32.mxu0 0.0
  %4131 = vmatmul.mubr.f32.gmra.mxu0 %v4055
  %v4132 = vpop.f32.mrf.mxu0
  %v4133 = vadd.f32 0.0, %v4132
  %v4134 = vpop.f32.mrf.mxu0
  %4135 = vmatprep.mubr.f32.mxu0 0.0
  %4136 = vmatmul.mubr.f32.gmra.mxu0 %v4058
  %v4137 = vpop.f32.mrf.mxu0
  %v4138 = vadd.f32 0.0, %v4137
  %v4139 = vpop.f32.mrf.mxu0
  %4140 = vmatprep.mubr.f32.mxu0 0.0
  %4141 = vmatmul.mubr.f32.gmra.mxu0 %v4061
  %v4142 = vpop.f32.mrf.mxu0
  %v4143 = vadd.f32 0.0, %v4142
  %v4144 = vpop.f32.mrf.mxu0
  %4145 = vmatprep.mubr.f32.mxu0 0.0
  %4146 = vmatmul.mubr.f32.gmra.mxu0 %v4064
  %v4147 = vpop.f32.mrf.mxu0
  %v4148 = vadd.f32 0.0, %v4147
  %v4149 = vpop.f32.mrf.mxu0
  %4150 = vdwg.mxu0
  %v4152 = vsel %vm632, %v4133, 0
  %v4155 = vsel %vm632, %v4138, 0
  %v4158 = vsel %vm632, %v4143, 0
  %v4161 = vsel %vm632, %v4148, 0
  %4163 = vmatprep.subr.mxu0 0.0
  %4164 = vmatpush1.msra.mxu0 0.0
  %4165 = vmatprep.subr.mxu0 0.0
  %4166 = vmatpush1.msra.mxu0 0.0
  %4167 = vmatprep.subr.mxu0 0.0
  %4168 = vmatpush1.msra.mxu0 0.0
  %4169 = vmatprep.subr.mxu0 0.0
  %4170 = vmatpush1.msra.mxu0 0.0
  %4171 = vmatprep.subr.mxu0 0.0
  %4172 = vmatpush1.msra.mxu0 0.0
  %4173 = vmatprep.subr.mxu0 0.0
  %4174 = vmatpush1.msra.mxu0 0.0
  %4175 = vmatprep.subr.mxu0 0.0
  %4176 = vmatpush1.msra.mxu0 0.0
  %4177 = vmatprep.subr.mxu0 0.0
  %4178 = vmatpush1.msra.mxu0 0.0
  %4179 = vmatprep.subr.mxu0 0.0
  %4180 = vmatpush1.msra.mxu0 0.0
  %4181 = vmatprep.subr.mxu0 0.0
  %4182 = vmatpush1.msra.mxu0 0.0
  %4183 = vmatprep.subr.mxu0 0.0
  %4184 = vmatpush1.msra.mxu0 0.0
  %4185 = vmatprep.subr.mxu0 0.0
  %4186 = vmatpush1.msra.mxu0 0.0
  %4187 = vmatprep.subr.mxu0 0.0
  %4188 = vmatpush1.msra.mxu0 0.0
  %4189 = vmatprep.subr.mxu0 0.0
  %4190 = vmatpush1.msra.mxu0 0.0
  %4191 = vmatprep.subr.mxu0 0.0
  %4192 = vmatpush1.msra.mxu0 0.0
  %4193 = vmatprep.subr.mxu0 0.0
  %4194 = vmatpush1.msra.mxu0 %v2541
  %4195 = vmatprep.subr.mxu0 0.0
  %4196 = vmatpush2.msra.mxu0 0.0
  %4197 = vmatprep.subr.mxu0 0.0
  %4198 = vmatpush2.msra.mxu0 0.0
  %4199 = vmatprep.subr.mxu0 0.0
  %4200 = vmatpush2.msra.mxu0 0.0
  %4201 = vmatprep.subr.mxu0 0.0
  %4202 = vmatpush2.msra.mxu0 0.0
  %4203 = vmatprep.subr.mxu0 0.0
  %4204 = vmatpush2.msra.mxu0 0.0
  %4205 = vmatprep.subr.mxu0 0.0
  %4206 = vmatpush2.msra.mxu0 0.0
  %4207 = vmatprep.subr.mxu0 0.0
  %4208 = vmatpush2.msra.mxu0 0.0
  %4209 = vmatprep.subr.mxu0 0.0
  %4210 = vmatpush2.msra.mxu0 0.0
  %4211 = vmatprep.subr.mxu0 0.0
  %4212 = vmatpush2.msra.mxu0 0.0
  %4213 = vmatprep.subr.mxu0 0.0
  %4214 = vmatpush2.msra.mxu0 0.0
  %4215 = vmatprep.subr.mxu0 0.0
  %4216 = vmatpush2.msra.mxu0 0.0
  %4217 = vmatprep.subr.mxu0 0.0
  %4218 = vmatpush2.msra.mxu0 0.0
  %4219 = vmatprep.subr.mxu0 0.0
  %4220 = vmatpush2.msra.mxu0 0.0
  %4221 = vmatprep.subr.mxu0 0.0
  %4222 = vmatpush2.msra.mxu0 0.0
  %4223 = vmatprep.subr.mxu0 0.0
  %4224 = vmatpush2.msra.mxu0 0.0
  %4225 = vmatprep.subr.mxu0 0.0
  %4226 = vmatpush2.msra.mxu0 0.0
  %4227 = vmatprep.mubr.f32.mxu0 0.0
  %4228 = vmatmul.mubr.f32.gmra.mxu0 %v4152
  %v4229 = vpop.f32.mrf.mxu0
  %v4230 = vadd.f32 0.0, %v4229
  %v4231 = vpop.f32.mrf.mxu0
  %4232 = vmatprep.mubr.f32.mxu0 0.0
  %4233 = vmatmul.mubr.f32.gmra.mxu0 %v4155
  %v4234 = vpop.f32.mrf.mxu0
  %v4235 = vadd.f32 0.0, %v4234
  %v4236 = vpop.f32.mrf.mxu0
  %4237 = vmatprep.mubr.f32.mxu0 0.0
  %4238 = vmatmul.mubr.f32.gmra.mxu0 %v4158
  %v4239 = vpop.f32.mrf.mxu0
  %v4240 = vadd.f32 0.0, %v4239
  %v4241 = vpop.f32.mrf.mxu0
  %4242 = vmatprep.mubr.f32.mxu0 0.0
  %4243 = vmatmul.mubr.f32.gmra.mxu0 %v4161
  %v4244 = vpop.f32.mrf.mxu0
  %v4245 = vadd.f32 0.0, %v4244
  %v4246 = vpop.f32.mrf.mxu0
  %4247 = vdwg.mxu0
  %v4248 = vadd.f32 %v3873, %v4230
  %v4249 = vadd.f32 %v3874, %v4235
  %v4250 = vadd.f32 %v3875, %v4240
  %v4251 = vadd.f32 %v3876, %v4245
  %v4252 = vadd.f32 %v2523, %v4248
  %v4253 = vadd.f32 %v2524, %v4249
  %v4254 = vadd.f32 %v2525, %v4250
  %v4255 = vadd.f32 %v2526, %v4251
  %v4256 = vlaneseq
  %v4257 = vshrl.u32 %v4256, 7
  %v4258 = vsub.s32 5, %v4257
  %v4259 = vrot.slane %v2528, %v4258
  %v4260 = vadd.f32 %v4252, %v4259
  %v4261 = vadd.f32 %v4253, %v4259
  %v4262 = vadd.f32 %v4254, %v4259
  %v4263 = vadd.f32 %v4255, %v4259
  %v4264 = vsel %vm67, %v4260, 0.0
  %4265 = vadd.xlane.f32.xlu0 %v4264
  %v4266 = vpop.xlane.xlu0 %4265
  %v4267 = vsel %vm67, %v4261, 0.0
  %4268 = vadd.xlane.f32.xlu0 %v4267
  %v4269 = vpop.xlane.xlu0 %4268
  %v4270 = vsel %vm67, %v4262, 0.0
  %4271 = vadd.xlane.f32.xlu0 %v4270
  %v4272 = vpop.xlane.xlu0 %4271
  %v4273 = vsel %vm67, %v4263, 0.0
  %4274 = vadd.xlane.f32.xlu0 %v4273
  %v4275 = vpop.xlane.xlu0 %4274
  %v4276 = vmul.f32 %v4266, %v430
  %v4277 = vmul.f32 %v4269, %v430
  %v4278 = vmul.f32 %v4272, %v430
  %v4279 = vmul.f32 %v4275, %v430
  %v4280 = vsub.f32 %v4260, %v4276
  %v4281 = vsub.f32 %v4261, %v4277
  %v4282 = vsub.f32 %v4262, %v4278
  %v4283 = vsub.f32 %v4263, %v4279
  %v4284 = vmul.f32 %v4280, %v4280
  %v4285 = vmul.f32 %v4281, %v4281
  %v4286 = vmul.f32 %v4282, %v4282
  %v4287 = vmul.f32 %v4283, %v4283
  %v4288 = vsel %vm67, %v4284, 0.0
  %4289 = vadd.xlane.f32.xlu0 %v4288
  %v4290 = vpop.xlane.xlu0 %4289
  %v4291 = vsel %vm67, %v4285, 0.0
  %4292 = vadd.xlane.f32.xlu0 %v4291
  %v4293 = vpop.xlane.xlu0 %4292
  %v4294 = vsel %vm67, %v4286, 0.0
  %4295 = vadd.xlane.f32.xlu0 %v4294
  %v4296 = vpop.xlane.xlu0 %4295
  %v4297 = vsel %vm67, %v4287, 0.0
  %4298 = vadd.xlane.f32.xlu0 %v4297
  %v4299 = vpop.xlane.xlu0 %4298
  %v4300 = vmul.f32 %v4290, %v430
  %v4301 = vmul.f32 %v4293, %v430
  %v4302 = vmul.f32 %v4296, %v430
  %v4303 = vmul.f32 %v4299, %v430
  %v4304 = vadd.f32 %v4300, 1e-05
  %v4305 = vadd.f32 %v4301, 1e-05
  %v4306 = vadd.f32 %v4302, 1e-05
  %v4307 = vadd.f32 %v4303, 1e-05
  %v4308 = vrsqrt.pop %v4304
  %v4309 = vmul.f32 %v4304, %v4308
  %vm4310 = vcmp.eq.f32.partialorder %v4304, inf
  %v4311 = vsel %vm4310, %v4304, %v4309
  %vm4312 = vcmp.eq.f32.partialorder %v4304, 0.0
  %v4313 = vand.u32 %v4304, 2147483648
  %v4314 = vsel %vm4312, %v4313, %v4311
  %v4315 = vrsqrt.pop %v4305
  %v4316 = vmul.f32 %v4305, %v4315
  %vm4317 = vcmp.eq.f32.partialorder %v4305, inf
  %v4318 = vsel %vm4317, %v4305, %v4316
  %vm4319 = vcmp.eq.f32.partialorder %v4305, 0.0
  %v4320 = vand.u32 %v4305, 2147483648
  %v4321 = vsel %vm4319, %v4320, %v4318
  %v4322 = vrsqrt.pop %v4306
  %v4323 = vmul.f32 %v4306, %v4322
  %vm4324 = vcmp.eq.f32.partialorder %v4306, inf
  %v4325 = vsel %vm4324, %v4306, %v4323
  %vm4326 = vcmp.eq.f32.partialorder %v4306, 0.0
  %v4327 = vand.u32 %v4306, 2147483648
  %v4328 = vsel %vm4326, %v4327, %v4325
  %v4329 = vrsqrt.pop %v4307
  %v4330 = vmul.f32 %v4307, %v4329
  %vm4331 = vcmp.eq.f32.partialorder %v4307, inf
  %v4332 = vsel %vm4331, %v4307, %v4330
  %vm4333 = vcmp.eq.f32.partialorder %v4307, 0.0
  %v4334 = vand.u32 %v4307, 2147483648
  %v4335 = vsel %vm4333, %v4334, %v4332
  %v4336 = vrcp.pop %v4314
  %v4337 = vmul.f32 %v4280, %v4336
  %v4338 = vrcp.pop %v4321
  %v4339 = vmul.f32 %v4281, %v4338
  %v4340 = vrcp.pop %v4328
  %v4341 = vmul.f32 %v4282, %v4340
  %v4342 = vrcp.pop %v4335
  %v4343 = vmul.f32 %v4283, %v4342
  %v4344 = vlaneseq
  %v4345 = vshrl.u32 %v4344, 7
  %v4346 = vsub.s32 2, %v4345
  %v4347 = vrot.slane %v2528, %v4346
  %v4348 = vmul.f32 %v4337, %v4347
  %v4349 = vmul.f32 %v4339, %v4347
  %v4350 = vmul.f32 %v4341, %v4347
  %v4351 = vmul.f32 %v4343, %v4347
  %v4352 = vlaneseq
  %v4353 = vshrl.u32 %v4352, 7
  %v4354 = vsub.s32 3, %v4353
  %v4355 = vrot.slane %v2528, %v4354
  %v4356 = vadd.f32 %v4348, %v4355
  %v4357 = vadd.f32 %v4349, %v4355
  %v4358 = vadd.f32 %v4350, %v4355
  %v4359 = vadd.f32 %v4351, %v4355
  %v4360 = vlaneseq
  %v4361 = vshrl.u32 %v4360, 7
  %v4362 = vsub.s32 6, %v4361
  %v4363 = vrot.slane %v2528, %v4362
  %v4365 = vsel %vm67, %v4356, 0
  %v4368 = vsel %vm67, %v4357, 0
  %v4371 = vsel %vm67, %v4358, 0
  %v4374 = vsel %vm67, %v4359, 0
  %4376 = vmatprep.subr.mxu0 0.0
  %4377 = vmatpush1.msra.mxu0 0.0
  %4378 = vmatprep.subr.mxu0 0.0
  %4379 = vmatpush1.msra.mxu0 0.0
  %4380 = vmatprep.subr.mxu0 0.0
  %4381 = vmatpush1.msra.mxu0 0.0
  %4382 = vmatprep.subr.mxu0 0.0
  %4383 = vmatpush1.msra.mxu0 0.0
  %4384 = vmatprep.subr.mxu0 0.0
  %4385 = vmatpush1.msra.mxu0 0.0
  %4386 = vmatprep.subr.mxu0 0.0
  %4387 = vmatpush1.msra.mxu0 0.0
  %4388 = vmatprep.subr.mxu0 0.0
  %4389 = vmatpush1.msra.mxu0 0.0
  %4390 = vmatprep.subr.mxu0 0.0
  %4391 = vmatpush1.msra.mxu0 0.0
  %4392 = vmatprep.subr.mxu0 0.0
  %4393 = vmatpush1.msra.mxu0 0.0
  %4394 = vmatprep.subr.mxu0 0.0
  %4395 = vmatpush1.msra.mxu0 0.0
  %4396 = vmatprep.subr.mxu0 0.0
  %4397 = vmatpush1.msra.mxu0 0.0
  %4398 = vmatprep.subr.mxu0 0.0
  %4399 = vmatpush1.msra.mxu0 0.0
  %4400 = vmatprep.subr.mxu0 0.0
  %4401 = vmatpush1.msra.mxu0 %v2540
  %4402 = vmatprep.subr.mxu0 0.0
  %4403 = vmatpush1.msra.mxu0 %v2537
  %4404 = vmatprep.subr.mxu0 0.0
  %4405 = vmatpush1.msra.mxu0 %v2534
  %4406 = vmatprep.subr.mxu0 0.0
  %4407 = vmatpush1.msra.mxu0 %v2531
  %4408 = vmatprep.subr.mxu0 0.0
  %4409 = vmatpush2.msra.mxu0 0.0
  %4410 = vmatprep.subr.mxu0 0.0
  %4411 = vmatpush2.msra.mxu0 0.0
  %4412 = vmatprep.subr.mxu0 0.0
  %4413 = vmatpush2.msra.mxu0 0.0
  %4414 = vmatprep.subr.mxu0 0.0
  %4415 = vmatpush2.msra.mxu0 0.0
  %4416 = vmatprep.subr.mxu0 0.0
  %4417 = vmatpush2.msra.mxu0 0.0
  %4418 = vmatprep.subr.mxu0 0.0
  %4419 = vmatpush2.msra.mxu0 0.0
  %4420 = vmatprep.subr.mxu0 0.0
  %4421 = vmatpush2.msra.mxu0 0.0
  %4422 = vmatprep.subr.mxu0 0.0
  %4423 = vmatpush2.msra.mxu0 0.0
  %4424 = vmatprep.subr.mxu0 0.0
  %4425 = vmatpush2.msra.mxu0 0.0
  %4426 = vmatprep.subr.mxu0 0.0
  %4427 = vmatpush2.msra.mxu0 0.0
  %4428 = vmatprep.subr.mxu0 0.0
  %4429 = vmatpush2.msra.mxu0 0.0
  %4430 = vmatprep.subr.mxu0 0.0
  %4431 = vmatpush2.msra.mxu0 0.0
  %4432 = vmatprep.subr.mxu0 0.0
  %4433 = vmatpush2.msra.mxu0 0.0
  %4434 = vmatprep.subr.mxu0 0.0
  %4435 = vmatpush2.msra.mxu0 0.0
  %4436 = vmatprep.subr.mxu0 0.0
  %4437 = vmatpush2.msra.mxu0 0.0
  %4438 = vmatprep.subr.mxu0 0.0
  %4439 = vmatpush2.msra.mxu0 0.0
  %4440 = vmatprep.mubr.f32.mxu0 0.0
  %4441 = vmatmul.mubr.f32.gmra.mxu0 %v4365
  %v4442 = vpop.f32.mrf.mxu0
  %v4443 = vadd.f32 %v4363, %v4442
  %v4444 = vpop.f32.mrf.mxu0
  %4445 = vmatprep.mubr.f32.mxu0 0.0
  %4446 = vmatmul.mubr.f32.gmra.mxu0 %v4368
  %v4447 = vpop.f32.mrf.mxu0
  %v4448 = vadd.f32 %v4363, %v4447
  %v4449 = vpop.f32.mrf.mxu0
  %4450 = vmatprep.mubr.f32.mxu0 0.0
  %4451 = vmatmul.mubr.f32.gmra.mxu0 %v4371
  %v4452 = vpop.f32.mrf.mxu0
  %v4453 = vadd.f32 %v4363, %v4452
  %v4454 = vpop.f32.mrf.mxu0
  %4455 = vmatprep.mubr.f32.mxu0 0.0
  %4456 = vmatmul.mubr.f32.gmra.mxu0 %v4374
  %v4457 = vpop.f32.mrf.mxu0
  %v4458 = vadd.f32 %v4363, %v4457
  %v4459 = vpop.f32.mrf.mxu0
  %4460 = vdwg.mxu0
  %v4461 = vmul.f32 %v4443, 0.5
  %v4462 = vmul.f32 %v4448, 0.5
  %v4463 = vmul.f32 %v4453, 0.5
  %v4464 = vmul.f32 %v4458, 0.5
  %v4465 = vmul.f32 %v4443, 0.70710677
  %v4466 = vmul.f32 %v4448, 0.70710677
  %v4467 = vmul.f32 %v4453, 0.70710677
  %v4468 = vmul.f32 %v4458, 0.70710677
  %vm4469 = vcmp.lt.f32.partialorder %v4465, 0.0
  %vm4470 = vcmp.lt.f32.partialorder %v4466, 0.0
  %vm4471 = vcmp.lt.f32.partialorder %v4467, 0.0
  %vm4472 = vcmp.lt.f32.partialorder %v4468, 0.0
  %v4473 = vsel %vm4469, -1.0, 1.0
  %v4474 = vsel %vm4470, -1.0, 1.0
  %v4475 = vsel %vm4471, -1.0, 1.0
  %v4476 = vsel %vm4472, -1.0, 1.0
  %v4477 = vand.u32 2147483647, %v4465
  %v4478 = vand.u32 2147483647, %v4466
  %v4479 = vand.u32 2147483647, %v4467
  %v4480 = vand.u32 2147483647, %v4468
  %v4481 = vmul.f32 %v4477, 0.3275911
  %v4482 = vmul.f32 %v4478, 0.3275911
  %v4483 = vmul.f32 %v4479, 0.3275911
  %v4484 = vmul.f32 %v4480, 0.3275911
  %v4485 = vadd.f32 %v4481, 1.0
  %v4486 = vadd.f32 %v4482, 1.0
  %v4487 = vadd.f32 %v4483, 1.0
  %v4488 = vadd.f32 %v4484, 1.0
  %v4489 = vrcp.pop %v4485
  %v4490 = vmul.f32 1.0, %v4489
  %v4491 = vrcp.pop %v4486
  %v4492 = vmul.f32 1.0, %v4491
  %v4493 = vrcp.pop %v4487
  %v4494 = vmul.f32 1.0, %v4493
  %v4495 = vrcp.pop %v4488
  %v4496 = vmul.f32 1.0, %v4495
  %v4497 = vmul.f32 %v4490, 1.0614054
  %v4498 = vmul.f32 %v4492, 1.0614054
  %v4499 = vmul.f32 %v4494, 1.0614054
  %v4500 = vmul.f32 %v4496, 1.0614054
  %v4501 = vadd.f32 %v4497, -1.4531521
  %v4502 = vadd.f32 %v4498, -1.4531521
  %v4503 = vadd.f32 %v4499, -1.4531521
  %v4504 = vadd.f32 %v4500, -1.4531521
  %v4505 = vmul.f32 %v4501, %v4490
  %v4506 = vmul.f32 %v4502, %v4492
  %v4507 = vmul.f32 %v4503, %v4494
  %v4508 = vmul.f32 %v4504, %v4496
  %v4509 = vadd.f32 %v4505, 1.4214138
  %v4510 = vadd.f32 %v4506, 1.4214138
  %v4511 = vadd.f32 %v4507, 1.4214138
  %v4512 = vadd.f32 %v4508, 1.4214138
  %v4513 = vmul.f32 %v4509, %v4490
  %v4514 = vmul.f32 %v4510, %v4492
  %v4515 = vmul.f32 %v4511, %v4494
  %v4516 = vmul.f32 %v4512, %v4496
  %v4517 = vadd.f32 %v4513, -0.28449672
  %v4518 = vadd.f32 %v4514, -0.28449672
  %v4519 = vadd.f32 %v4515, -0.28449672
  %v4520 = vadd.f32 %v4516, -0.28449672
  %v4521 = vmul.f32 %v4517, %v4490
  %v4522 = vmul.f32 %v4518, %v4492
  %v4523 = vmul.f32 %v4519, %v4494
  %v4524 = vmul.f32 %v4520, %v4496
  %v4525 = vadd.f32 %v4521, 0.2548296
  %v4526 = vadd.f32 %v4522, 0.2548296
  %v4527 = vadd.f32 %v4523, 0.2548296
  %v4528 = vadd.f32 %v4524, 0.2548296
  %v4529 = vmul.f32 %v4525, %v4490
  %v4530 = vmul.f32 %v4526, %v4492
  %v4531 = vmul.f32 %v4527, %v4494
  %v4532 = vmul.f32 %v4528, %v4496
  %v4533 = vsub.f32 0.0, %v4477
  %v4534 = vsub.f32 0.0, %v4478
  %v4535 = vsub.f32 0.0, %v4479
  %v4536 = vsub.f32 0.0, %v4480
  %v4537 = vmul.f32 %v4533, %v4477
  %v4538 = vmul.f32 %v4534, %v4478
  %v4539 = vmul.f32 %v4535, %v4479
  %v4540 = vmul.f32 %v4536, %v4480
  %v4541 = vmul.f32 %v4537, 1.442695
  %v4542 = vpow.pop %v4541
  %v4543 = vmul.f32 %v4538, 1.442695
  %v4544 = vpow.pop %v4543
  %v4545 = vmul.f32 %v4539, 1.442695
  %v4546 = vpow.pop %v4545
  %v4547 = vmul.f32 %v4540, 1.442695
  %v4548 = vpow.pop %v4547
  %v4549 = vmul.f32 %v4529, %v4542
  %v4550 = vmul.f32 %v4530, %v4544
  %v4551 = vmul.f32 %v4531, %v4546
  %v4552 = vmul.f32 %v4532, %v4548
  %v4553 = vsub.f32 1.0, %v4549
  %v4554 = vsub.f32 1.0, %v4550
  %v4555 = vsub.f32 1.0, %v4551
  %v4556 = vsub.f32 1.0, %v4552
  %v4557 = vmul.f32 %v4473, %v4553
  %v4558 = vmul.f32 %v4474, %v4554
  %v4559 = vmul.f32 %v4475, %v4555
  %v4560 = vmul.f32 %v4476, %v4556
  %v4561 = vadd.f32 %v4557, 1.0
  %v4562 = vadd.f32 %v4558, 1.0
  %v4563 = vadd.f32 %v4559, 1.0
  %v4564 = vadd.f32 %v4560, 1.0
  %v4565 = vmul.f32 %v4461, %v4561
  %v4566 = vmul.f32 %v4462, %v4562
  %v4567 = vmul.f32 %v4463, %v4563
  %v4568 = vmul.f32 %v4464, %v4564
  %4569 = vmatprep.subr.mxu0 0.0
  %4570 = vmatpush1.msra.mxu0 %v2558
  %4571 = vmatprep.subr.mxu0 0.0
  %4572 = vmatpush1.msra.mxu0 %v2557
  %4573 = vmatprep.subr.mxu0 0.0
  %4574 = vmatpush1.msra.mxu0 %v2556
  %4575 = vmatprep.subr.mxu0 0.0
  %4576 = vmatpush1.msra.mxu0 %v2555
  %4577 = vmatprep.subr.mxu0 0.0
  %4578 = vmatpush1.msra.mxu0 %v2554
  %4579 = vmatprep.subr.mxu0 0.0
  %4580 = vmatpush1.msra.mxu0 %v2553
  %4581 = vmatprep.subr.mxu0 0.0
  %4582 = vmatpush1.msra.mxu0 %v2552
  %4583 = vmatprep.subr.mxu0 0.0
  %4584 = vmatpush1.msra.mxu0 %v2551
  %4585 = vmatprep.subr.mxu0 0.0
  %4586 = vmatpush1.msra.mxu0 %v2550
  %4587 = vmatprep.subr.mxu0 0.0
  %4588 = vmatpush1.msra.mxu0 %v2549
  %4589 = vmatprep.subr.mxu0 0.0
  %4590 = vmatpush1.msra.mxu0 %v2548
  %4591 = vmatprep.subr.mxu0 0.0
  %4592 = vmatpush1.msra.mxu0 %v2547
  %4593 = vmatprep.subr.mxu0 0.0
  %4594 = vmatpush1.msra.mxu0 %v2546
  %4595 = vmatprep.subr.mxu0 0.0
  %4596 = vmatpush1.msra.mxu0 %v2545
  %4597 = vmatprep.subr.mxu0 0.0
  %4598 = vmatpush1.msra.mxu0 %v2544
  %4599 = vmatprep.subr.mxu0 0.0
  %4600 = vmatpush1.msra.mxu0 %v2543
  %4601 = vmatprep.subr.mxu0 0.0
  %4602 = vmatpush2.msra.mxu0 0.0
  %4603 = vmatprep.subr.mxu0 0.0
  %4604 = vmatpush2.msra.mxu0 0.0
  %4605 = vmatprep.subr.mxu0 0.0
  %4606 = vmatpush2.msra.mxu0 0.0
  %4607 = vmatprep.subr.mxu0 0.0
  %4608 = vmatpush2.msra.mxu0 0.0
  %4609 = vmatprep.subr.mxu0 0.0
  %4610 = vmatpush2.msra.mxu0 0.0
  %4611 = vmatprep.subr.mxu0 0.0
  %4612 = vmatpush2.msra.mxu0 0.0
  %4613 = vmatprep.subr.mxu0 0.0
  %4614 = vmatpush2.msra.mxu0 0.0
  %4615 = vmatprep.subr.mxu0 0.0
  %4616 = vmatpush2.msra.mxu0 0.0
  %4617 = vmatprep.subr.mxu0 0.0
  %4618 = vmatpush2.msra.mxu0 0.0
  %4619 = vmatprep.subr.mxu0 0.0
  %4620 = vmatpush2.msra.mxu0 0.0
  %4621 = vmatprep.subr.mxu0 0.0
  %4622 = vmatpush2.msra.mxu0 0.0
  %4623 = vmatprep.subr.mxu0 0.0
  %4624 = vmatpush2.msra.mxu0 0.0
  %4625 = vmatprep.subr.mxu0 0.0
  %4626 = vmatpush2.msra.mxu0 0.0
  %4627 = vmatprep.subr.mxu0 0.0
  %4628 = vmatpush2.msra.mxu0 0.0
  %4629 = vmatprep.subr.mxu0 0.0
  %4630 = vmatpush2.msra.mxu0 0.0
  %4631 = vmatprep.subr.mxu0 0.0
  %4632 = vmatpush2.msra.mxu0 0.0
  %4633 = vmatprep.mubr.f32.mxu0 0.0
  %4634 = vmatmul.mubr.f32.gmra.mxu0 %v4565
  %v4635 = vpop.f32.mrf.mxu0
  %v4636 = vadd.f32 0.0, %v4635
  %v4637 = vpop.f32.mrf.mxu0
  %4638 = vmatprep.mubr.f32.mxu0 0.0
  %4639 = vmatmul.mubr.f32.gmra.mxu0 %v4566
  %v4640 = vpop.f32.mrf.mxu0
  %v4641 = vadd.f32 0.0, %v4640
  %v4642 = vpop.f32.mrf.mxu0
  %4643 = vmatprep.mubr.f32.mxu0 0.0
  %4644 = vmatmul.mubr.f32.gmra.mxu0 %v4567
  %v4645 = vpop.f32.mrf.mxu0
  %v4646 = vadd.f32 0.0, %v4645
  %v4647 = vpop.f32.mrf.mxu0
  %4648 = vmatprep.mubr.f32.mxu0 0.0
  %4649 = vmatmul.mubr.f32.gmra.mxu0 %v4568
  %v4650 = vpop.f32.mrf.mxu0
  %v4651 = vadd.f32 0.0, %v4650
  %v4652 = vpop.f32.mrf.mxu0
  %4653 = vdwg.mxu0
  %v4654 = vadd.f32 %v4260, %v4636
  %v4655 = vadd.f32 %v4261, %v4641
  %v4656 = vadd.f32 %v4262, %v4646
  %v4657 = vadd.f32 %v4263, %v4651
  %v4658 = vlaneseq
  %v4659 = vshrl.u32 %v4658, 7
  %v4660 = vsub.s32 7, %v4659
  %v4661 = vrot.slane %v2528, %v4660
  %v4662 = vadd.f32 %v4654, %v4661
  %v4663 = vadd.f32 %v4655, %v4661
  %v4664 = vadd.f32 %v4656, %v4661
  %v4665 = vadd.f32 %v4657, %v4661
  %4666 = vst.msk [vmem:[%s6] sm:$0xff] %vm67, %v4662
  %4667 = vst.msk [vmem:[%s6 + $0x8] sm:$0xff] %vm67, %v4663
  %4668 = vst.msk [vmem:[%s6 + $0x10] sm:$0xff] %vm67, %v4664
  %4669 = vst.msk [vmem:[%s6 + $0x18] sm:$0xff] %vm67, %v4665
  // Predicated region
  $region26: #{cross_cond_trans_base_forward.1} parent=0 // pred_check
    _
  $region27: #{cross_cond_trans_base_forward.1} parent=0 // pred_check_branch
    %4671 = sbr.rel (0) target = $region29
  $region28: #{cross_cond_trans_base_forward.1} parent=0 // pred_region
    _
  $region29: #{cross_cond_trans_base_forward.1} parent=0 // pred_fallthru
    _
  // Predicated region
  $region30: #{cross_cond_trans_base_forward.1} parent=0 // pred_check
    _
  $region31: #{cross_cond_trans_base_forward.1} parent=0 // pred_check_branch
    %4673 = sbr.rel (0) target = $region33
  $region32: #{cross_cond_trans_base_forward.1} parent=0 // pred_region
    _
  $region33: #{cross_cond_trans_base_forward.1} parent=0 // pred_fallthru
    _

</llo_original>
